<compile_context>
chip_gen: v6e
topology: v6e:2x2x1
jax: 0.10.0
libtpu: 0.0.40
codegen_flags: <defaults>
</compile_context>

<pallas_src>
import functools

import jax
import jax.numpy as jnp
from jax import lax
from jax.experimental import pallas as pl
from jax.experimental.pallas import tpu as pltpu


def _conv3x3(tap_fn, w, out_h, out_w):
    """3x3 stride-1 conv as ONE im2col contraction (K = 9*Cin) on the MXU.

    tap_fn(dy, dx) -> (out_h, out_w, Cin) value already in the MXU dtype.
    w : (9*Cin, Cout) value in the MXU dtype, tap order (dy, dx, cin).
    Returns (out_h, out_w, Cout) float32 (f32 accumulation).
    """
    taps = [tap_fn(dy, dx) for dy in range(3) for dx in range(3)]
    patch = jnp.concatenate(taps, axis=-1)          # (out_h, out_w, 9*Cin)
    return lax.dot_general(
        patch, w,
        (((2,), (0,)), ((), ())),
        preferred_element_type=jnp.float32)


def basic_block_kernel(x_ref, w1_ref, b1_ref, w2_ref, b2_ref, out_ref,
                       *, tile_h, H, W, mxu_dtype):
    """One grid step: one batch element, `tile_h` output rows.

    x_ref  : (H + 4, W + 4, C)   input padded by 2 on each spatial side
    w*_ref : (9*C, Cout)         im2col weights, BN scale folded in, mxu_dtype
    b*_ref : (1, Cout)           folded BN biases, float32
    out_ref: (tile_h, W, Cout)
    """
    t = pl.program_id(1)
    row0 = pl.multiple_of(t * tile_h, tile_h)       # first output row of tile

    # ---- conv1 over the (tile_h + 2, W + 2) halo window ---------------------
    # Taps are sliced straight from the ref (no staged copy) and cast to the
    # MXU dtype before the concat.
    def tap1(dy, dx):
        return x_ref[pl.ds(row0 + dy, tile_h + 2),
                     pl.ds(dx, W + 2), :].astype(mxu_dtype)

    out1 = _conv3x3(tap1, w1_ref[...], tile_h + 2, W + 2)
    out1 = jnp.maximum(out1 + b1_ref[...], 0.0)     # bn1 (scale folded) + relu

    # Zero the halo ring: positions outside the image are exactly conv2's zero
    # padding.  2-D mask, broadcast over channels.
    rows = lax.broadcasted_iota(jnp.int32, (tile_h + 2, W + 2, 1), 0) + (row0 - 1)
    cols = lax.broadcasted_iota(jnp.int32, (tile_h + 2, W + 2, 1), 1) - 1
    valid = (rows >= 0) & (rows < H) & (cols >= 0) & (cols < W)
    out1 = jnp.where(valid, out1, 0.0)

    # ---- conv2 + bn2 ---------------------------------------------------------
    out1_m = out1.astype(mxu_dtype)                 # cast once, before the taps

    def tap2(dy, dx):
        return out1_m[dy:dy + tile_h, dx:dx + W, :]

    out2 = _conv3x3(tap2, w2_ref[...], tile_h, W) + b2_ref[...]

    # ---- residual add (identity from the already-resident padded input) -----
    ident = x_ref[pl.ds(row0 + 2, tile_h), pl.ds(2, W), :].astype(jnp.float32)
    out_ref[...] = jnp.maximum(out2 + ident, 0.0).astype(out_ref.dtype)


def _vmem_limit_bytes():
    """Generation-aware scoped-VMEM limit (3/4 of physical, fallback 64 MiB)."""
    try:
        cap = getattr(pltpu.get_tpu_info(), "vmem_capacity_bytes", None)
        if cap:
            return max(32 << 20, min(int(cap) * 3 // 4, 112 << 20))
    except Exception:
        pass
    return 64 << 20


def _pick_tile_h(H, W, C, cout, mxu_dtype, vmem_limit):
    """Largest row tile dividing H whose per-step working set fits the budget."""
    mb = jnp.dtype(mxu_dtype).itemsize
    fixed = 2 * (H + 4) * (W + 4) * C * 4           # padded image, double-buffered
    fixed += 2 * 2 * 9 * C * cout * mb              # both im2col weights, 2x buffered

    def step_bytes(th):
        patch1 = (th + 2) * (W + 2) * 9 * C * mb    # conv1 im2col patch
        o1 = (th + 2) * (W + 2) * cout * 4          # out1 (f32) [+ mxu copy]
        o1 += (th + 2) * (W + 2) * cout * mb
        patch2 = th * W * 9 * cout * mb             # conv2 im2col patch
        outblk = 2 * th * W * cout * 4              # output tile, double-buffered
        return patch1 + o1 + patch2 + outblk

    budget = int(vmem_limit * 0.6)
    for cand in (H, 112, 64, 56, 32, 28, 16, 14, 8, 7, 4, 2, 1):
        if cand <= H and H % cand == 0 and fixed + step_bytes(cand) <= budget:
            return cand
    return 1


def basic_block_forward(x_nchw, params, *, tile_h=None, mxu_dtype=jnp.float32):
    """Pallas BasicBlock forward (eval-mode BN, stride=1, inplanes == planes).

    Pass mxu_dtype=jnp.bfloat16 on v6e/v7x to feed the MXU bf16 operands
    (accumulation and the BN/ReLU/residual epilogue stay f32).
    """
    w1, g1, beta1, m1, v1, w2, g2, beta2, m2, v2 = params
    eps = 1e-5
    s1 = g1 / jnp.sqrt(v1 + eps)
    b1 = beta1 - m1 * s1
    s2 = g2 / jnp.sqrt(v2 + eps)
    b2 = beta2 - m2 * s2

    x = jnp.transpose(x_nchw, (0, 2, 3, 1))         # NCHW -> NHWC (boundary only)
    N, H, W, C = x.shape
    cin1, cout1 = w1.shape[2], w1.shape[3]
    cin2, cout2 = w2.shape[2], w2.shape[3]
    assert cin1 == C and cin2 == cout1 and cout1 == cout2 == C, (
        "this kernel covers the stride=1, no-downsample BasicBlock "
        "(inplanes == planes)")
    cout = cout1

    # im2col weights (9*Cin, Cout), tap order (dy, dx, cin); BN scale folded
    # into the output-channel columns; cast to the MXU dtype ONCE here.
    w1c = (w1 * s1[None, None, None, :]).reshape(9 * C, cout).astype(mxu_dtype)
    w2c = (w2 * s2[None, None, None, :]).reshape(9 * cout, cout).astype(mxu_dtype)
    b1r = b1.reshape(1, cout).astype(jnp.float32)
    b2r = b2.reshape(1, cout).astype(jnp.float32)

    vmem_limit = _vmem_limit_bytes()
    if tile_h is None:
        tile_h = _pick_tile_h(H, W, C, cout, mxu_dtype, vmem_limit)
    assert H % tile_h == 0, "H must be divisible by tile_h"

    # Pad by 2 so every row tile plus its conv1+conv2 halo is an in-bounds
    # window of one buffer; the residual identity reads the same buffer, so the
    # input reaches VMEM exactly once per image.
    xpad = jnp.pad(x, ((0, 0), (2, 2), (2, 2), (0, 0)))

    kernel = functools.partial(basic_block_kernel, tile_h=tile_h, H=H, W=W,
                               mxu_dtype=mxu_dtype)

    const = lambda n, t: (0, 0)
    out_nhwc = pl.pallas_call(
        kernel,
        out_shape=jax.ShapeDtypeStruct((N, H, W, cout), x.dtype),
        grid=(N, H // tile_h),
        in_specs=[
            # Full padded image per batch element; constant over the row axis
            # so it is DMA'd once per image and reused by all row tiles.
            pl.BlockSpec((None, H + 4, W + 4, C), lambda n, t: (n, 0, 0, 0)),
            pl.BlockSpec((9 * C, cout), const),     # w1 (im2col, scale folded)
            pl.BlockSpec((1, cout), const),         # b1
            pl.BlockSpec((9 * cout, cout), const),  # w2 (im2col, scale folded)
            pl.BlockSpec((1, cout), const),         # b2
        ],
        out_specs=pl.BlockSpec((None, tile_h, W, cout), lambda n, t: (n, t, 0, 0)),
        compiler_params=pltpu.CompilerParams(
            # Both grid axes are independent -> megacore split.
            dimension_semantics=("parallel", "parallel"),
            vmem_limit_bytes=vmem_limit,
        ),
    )(xpad, w1c, b1r, w2c, b2r)

    return jnp.transpose(out_nhwc, (0, 3, 1, 2))    # NHWC -> NCHW


def basic_block_reference(x_nchw, params):
    """Pure-JAX reference (lax.conv) for correctness checking."""
    w1, g1, beta1, m1, v1, w2, g2, beta2, m2, v2 = params
    eps = 1e-5
    s1 = g1 / jnp.sqrt(v1 + eps)
    b1 = beta1 - m1 * s1
    s2 = g2 / jnp.sqrt(v2 + eps)
    b2 = beta2 - m2 * s2

    x = jnp.transpose(x_nchw, (0, 2, 3, 1))
    dn = ('NHWC', 'HWIO', 'NHWC')
    y = lax.conv_general_dilated(x, w1, (1, 1), 'SAME', dimension_numbers=dn)
    y = jnp.maximum(y * s1 + b1, 0.0)
    y = lax.conv_general_dilated(y, w2, (1, 1), 'SAME', dimension_numbers=dn)
    y = y * s2 + b2
    y = jnp.maximum(y + x, 0.0)
    return jnp.transpose(y, (0, 3, 1, 2))


if __name__ == "__main__":
    key = jax.random.PRNGKey(0)
    N, C, H, W = 2, 4, 16, 16          # inplanes == planes == 4, stride=1
    ks = jax.random.split(key, 11)

    x = jax.random.normal(ks[0], (N, C, H, W), jnp.float32)

    # conv weights in HWIO; BN params (gamma, beta, running_mean, running_var)
    w1 = 0.1 * jax.random.normal(ks[1], (3, 3, C, C), jnp.float32)
    g1 = 1.0 + 0.1 * jax.random.normal(ks[2], (C,), jnp.float32)
    beta1 = 0.1 * jax.random.normal(ks[3], (C,), jnp.float32)
    m1 = 0.1 * jax.random.normal(ks[4], (C,), jnp.float32)
    v1 = 1.0 + 0.1 * jnp.abs(jax.random.normal(ks[5], (C,), jnp.float32))

    w2 = 0.1 * jax.random.normal(ks[6], (3, 3, C, C), jnp.float32)
    g2 = 1.0 + 0.1 * jax.random.normal(ks[7], (C,), jnp.float32)
    beta2 = 0.1 * jax.random.normal(ks[8], (C,), jnp.float32)
    m2 = 0.1 * jax.random.normal(ks[9], (C,), jnp.float32)
    v2 = 1.0 + 0.1 * jnp.abs(jax.random.normal(ks[10], (C,), jnp.float32))

    params = (w1, g1, beta1, m1, v1, w2, g2, beta2, m2, v2)

    ref = jax.block_until_ready(basic_block_reference(x, params))

    # f32 MXU path, explicit row tiling (exercises boundary + interior tiles).
    out = jax.block_until_ready(basic_block_forward(x, params, tile_h=8))
    assert out.shape == (N, C, H, W)
    assert jnp.allclose(out, ref, atol=1e-3, rtol=1e-3), "f32 mismatch vs reference"

    # bf16-operand MXU path (f32 accumulation/epilogue), auto tile picker.
    out_bf = jax.block_until_ready(
        basic_block_forward(x, params, mxu_dtype=jnp.bfloat16))
    assert jnp.allclose(out_bf, ref, atol=5e-2, rtol=5e-2), "bf16 mismatch vs reference"

    print("KERNEL_OK")
</pallas_src>

<mosaic_0001>
module attributes {stable_mosaic.version = 11 : i64} {
  func.func @basic_block_kernel(%arg0: i32, %arg1: i32, %arg2: memref<1x20x20x4xf32, #tpu.memory_space<vmem>>, %arg3: memref<36x4xf32, #tpu.memory_space<vmem>>, %arg4: memref<1x4xf32, #tpu.memory_space<vmem>>, %arg5: memref<36x4xf32, #tpu.memory_space<vmem>>, %arg6: memref<1x4xf32, #tpu.memory_space<vmem>>, %arg7: memref<1x8x16x4xf32, #tpu.memory_space<vmem>>) attributes {dimension_semantics = [#tpu.dimension_semantics<parallel>, #tpu.dimension_semantics<parallel>], iteration_bounds = array<i64: 2, 2>, scalar_prefetch = 0 : i64, scratch_operands = 0 : i64, tpu.core_type = #tpu.core_type<tc>, window_params = [{transform_indices = @transform_0, window_bounds = array<i64: 1, 20, 20, 4>}, {pipeline_mode = #tpu.pipeline_mode<synchronous>, transform_indices = @transform_1, window_bounds = array<i64: 36, 4>}, {pipeline_mode = #tpu.pipeline_mode<synchronous>, transform_indices = @transform_2, window_bounds = array<i64: 1, 4>}, {pipeline_mode = #tpu.pipeline_mode<synchronous>, transform_indices = @transform_3, window_bounds = array<i64: 36, 4>}, {pipeline_mode = #tpu.pipeline_mode<synchronous>, transform_indices = @transform_4, window_bounds = array<i64: 1, 4>}, {transform_indices = @transform_5, window_bounds = array<i64: 1, 8, 16, 4>}]} {
    %c8_i32 = arith.constant 8 : i32
    %0 = arith.muli %arg1, %c8_i32 : i32
    %1 = tpu.assume_multiple %0, 8 : i32
    %c0 = arith.constant 0 : index
    %c0_0 = arith.constant 0 : index
    %2 = vector.load %arg3[%c0, %c0_0] : memref<36x4xf32, #tpu.memory_space<vmem>>, vector<36x4xf32>
    %c0_i32 = arith.constant 0 : i32
    %3 = arith.addi %1, %c0_i32 : i32
    %c0_1 = arith.constant 0 : index
    %4 = arith.index_cast %3 : i32 to index
    %c0_2 = arith.constant 0 : index
    %c0_3 = arith.constant 0 : index
    %5 = vector.load %arg2[%c0_1, %4, %c0_2, %c0_3] : memref<1x20x20x4xf32, #tpu.memory_space<vmem>>, vector<1x10x18x4xf32>
    %6 = vector.shape_cast %5 : vector<1x10x18x4xf32> to vector<10x18x4xf32>
    %c0_i32_4 = arith.constant 0 : i32
    %7 = arith.addi %1, %c0_i32_4 : i32
    %c0_5 = arith.constant 0 : index
    %8 = arith.index_cast %7 : i32 to index
    %c1 = arith.constant 1 : index
    %c0_6 = arith.constant 0 : index
    %9 = vector.load %arg2[%c0_5, %8, %c1, %c0_6] : memref<1x20x20x4xf32, #tpu.memory_space<vmem>>, vector<1x10x18x4xf32>
    %10 = vector.shape_cast %9 : vector<1x10x18x4xf32> to vector<10x18x4xf32>
    %c0_i32_7 = arith.constant 0 : i32
    %11 = arith.addi %1, %c0_i32_7 : i32
    %c0_8 = arith.constant 0 : index
    %12 = arith.index_cast %11 : i32 to index
    %c2 = arith.constant 2 : index
    %c0_9 = arith.constant 0 : index
    %13 = vector.load %arg2[%c0_8, %12, %c2, %c0_9] : memref<1x20x20x4xf32, #tpu.memory_space<vmem>>, vector<1x10x18x4xf32>
    %14 = vector.shape_cast %13 : vector<1x10x18x4xf32> to vector<10x18x4xf32>
    %c1_i32 = arith.constant 1 : i32
    %15 = arith.addi %1, %c1_i32 : i32
    %c0_10 = arith.constant 0 : index
    %16 = arith.index_cast %15 : i32 to index
    %c0_11 = arith.constant 0 : index
    %c0_12 = arith.constant 0 : index
    %17 = vector.load %arg2[%c0_10, %16, %c0_11, %c0_12] : memref<1x20x20x4xf32, #tpu.memory_space<vmem>>, vector<1x10x18x4xf32>
    %18 = vector.shape_cast %17 : vector<1x10x18x4xf32> to vector<10x18x4xf32>
    %c1_i32_13 = arith.constant 1 : i32
    %19 = arith.addi %1, %c1_i32_13 : i32
    %c0_14 = arith.constant 0 : index
    %20 = arith.index_cast %19 : i32 to index
    %c1_15 = arith.constant 1 : index
    %c0_16 = arith.constant 0 : index
    %21 = vector.load %arg2[%c0_14, %20, %c1_15, %c0_16] : memref<1x20x20x4xf32, #tpu.memory_space<vmem>>, vector<1x10x18x4xf32>
    %22 = vector.shape_cast %21 : vector<1x10x18x4xf32> to vector<10x18x4xf32>
    %c1_i32_17 = arith.constant 1 : i32
    %23 = arith.addi %1, %c1_i32_17 : i32
    %c0_18 = arith.constant 0 : index
    %24 = arith.index_cast %23 : i32 to index
    %c2_19 = arith.constant 2 : index
    %c0_20 = arith.constant 0 : index
    %25 = vector.load %arg2[%c0_18, %24, %c2_19, %c0_20] : memref<1x20x20x4xf32, #tpu.memory_space<vmem>>, vector<1x10x18x4xf32>
    %26 = vector.shape_cast %25 : vector<1x10x18x4xf32> to vector<10x18x4xf32>
    %c2_i32 = arith.constant 2 : i32
    %27 = arith.addi %1, %c2_i32 : i32
    %c0_21 = arith.constant 0 : index
    %28 = arith.index_cast %27 : i32 to index
    %c0_22 = arith.constant 0 : index
    %c0_23 = arith.constant 0 : index
    %29 = vector.load %arg2[%c0_21, %28, %c0_22, %c0_23] : memref<1x20x20x4xf32, #tpu.memory_space<vmem>>, vector<1x10x18x4xf32>
    %30 = vector.shape_cast %29 : vector<1x10x18x4xf32> to vector<10x18x4xf32>
    %c2_i32_24 = arith.constant 2 : i32
    %31 = arith.addi %1, %c2_i32_24 : i32
    %c0_25 = arith.constant 0 : index
    %32 = arith.index_cast %31 : i32 to index
    %c1_26 = arith.constant 1 : index
    %c0_27 = arith.constant 0 : index
    %33 = vector.load %arg2[%c0_25, %32, %c1_26, %c0_27] : memref<1x20x20x4xf32, #tpu.memory_space<vmem>>, vector<1x10x18x4xf32>
    %34 = vector.shape_cast %33 : vector<1x10x18x4xf32> to vector<10x18x4xf32>
    %c2_i32_28 = arith.constant 2 : i32
    %35 = arith.addi %1, %c2_i32_28 : i32
    %c0_29 = arith.constant 0 : index
    %36 = arith.index_cast %35 : i32 to index
    %c2_30 = arith.constant 2 : index
    %c0_31 = arith.constant 0 : index
    %37 = vector.load %arg2[%c0_29, %36, %c2_30, %c0_31] : memref<1x20x20x4xf32, #tpu.memory_space<vmem>>, vector<1x10x18x4xf32>
    %38 = vector.shape_cast %37 : vector<1x10x18x4xf32> to vector<10x18x4xf32>
    %39 = tpu.concatenate %6, %10, %14, %18, %22, %26, %30, %34, %38 in 2 : vector<10x18x4xf32>, vector<10x18x4xf32>, vector<10x18x4xf32>, vector<10x18x4xf32>, vector<10x18x4xf32>, vector<10x18x4xf32>, vector<10x18x4xf32>, vector<10x18x4xf32>, vector<10x18x4xf32> -> vector<10x18x36xf32>
    %cst = arith.constant dense<0.000000e+00> : vector<10x18x4xf32>
    %40 = tpu.matmul %39, %2, %cst {dimension_numbers = #tpu.dot_dimension_numbers<[2], [0], [0, 1], [1], [0, 0, 0, 1, 1, 1], [], []>} : vector<10x18x36xf32>, vector<36x4xf32>, vector<10x18x4xf32> -> vector<10x18x4xf32>
    %c0_32 = arith.constant 0 : index
    %c0_33 = arith.constant 0 : index
    %41 = vector.load %arg4[%c0_32, %c0_33] : memref<1x4xf32, #tpu.memory_space<vmem>>, vector<1x4xf32>
    %42 = vector.shape_cast %41 : vector<1x4xf32> to vector<1x1x4xf32>
    %43 = vector.broadcast %42 : vector<1x1x4xf32> to vector<10x18x4xf32>
    %44 = arith.addf %40, %43 : vector<10x18x4xf32>
    %cst_34 = arith.constant 0.000000e+00 : f32
    %45 = vector.broadcast %cst_34 : f32 to vector<10x18x4xf32>
    %46 = arith.maximumf %44, %45 : vector<10x18x4xf32>
    %47 = tpu.iota {dimensions = array<i32: 0>} : vector<10x18x1xi32>
    %c1_i32_35 = arith.constant 1 : i32
    %48 = arith.subi %1, %c1_i32_35 : i32
    %49 = vector.broadcast %48 : i32 to vector<10x18x1xi32>
    %50 = arith.addi %47, %49 : vector<10x18x1xi32>
    %51 = tpu.iota {dimensions = array<i32: 1>} : vector<10x18x1xi32>
    %c1_i32_36 = arith.constant 1 : i32
    %52 = vector.broadcast %c1_i32_36 : i32 to vector<10x18x1xi32>
    %53 = arith.subi %51, %52 : vector<10x18x1xi32>
    %c0_i32_37 = arith.constant 0 : i32
    %54 = vector.broadcast %c0_i32_37 : i32 to vector<10x18x1xi32>
    %55 = arith.cmpi sge, %50, %54 : vector<10x18x1xi32>
    %c16_i32 = arith.constant 16 : i32
    %56 = vector.broadcast %c16_i32 : i32 to vector<10x18x1xi32>
    %57 = arith.cmpi slt, %50, %56 : vector<10x18x1xi32>
    %58 = arith.andi %55, %57 : vector<10x18x1xi1>
    %c0_i32_38 = arith.constant 0 : i32
    %59 = vector.broadcast %c0_i32_38 : i32 to vector<10x18x1xi32>
    %60 = arith.cmpi sge, %53, %59 : vector<10x18x1xi32>
    %61 = arith.andi %58, %60 : vector<10x18x1xi1>
    %c16_i32_39 = arith.constant 16 : i32
    %62 = vector.broadcast %c16_i32_39 : i32 to vector<10x18x1xi32>
    %63 = arith.cmpi slt, %53, %62 : vector<10x18x1xi32>
    %64 = arith.andi %61, %63 : vector<10x18x1xi1>
    %cst_40 = arith.constant 0.000000e+00 : f32
    %65 = vector.shape_cast %64 : vector<10x18x1xi1> to vector<10x18x1xi1>
    %66 = vector.broadcast %65 : vector<10x18x1xi1> to vector<10x18x4xi1>
    %67 = vector.broadcast %cst_40 : f32 to vector<10x18x4xf32>
    %68 = arith.select %66, %46, %67 : vector<10x18x4xi1>, vector<10x18x4xf32>
    %c0_41 = arith.constant 0 : index
    %c0_42 = arith.constant 0 : index
    %69 = vector.load %arg5[%c0_41, %c0_42] : memref<36x4xf32, #tpu.memory_space<vmem>>, vector<36x4xf32>
    %70 = vector.extract_strided_slice %68 {offsets = [0, 0, 0], sizes = [8, 16, 4], strides = [1, 1, 1]} : vector<10x18x4xf32> to vector<8x16x4xf32>
    %71 = vector.extract_strided_slice %68 {offsets = [0, 1, 0], sizes = [8, 16, 4], strides = [1, 1, 1]} : vector<10x18x4xf32> to vector<8x16x4xf32>
    %72 = vector.extract_strided_slice %68 {offsets = [0, 2, 0], sizes = [8, 16, 4], strides = [1, 1, 1]} : vector<10x18x4xf32> to vector<8x16x4xf32>
    %73 = vector.extract_strided_slice %68 {offsets = [1, 0, 0], sizes = [8, 16, 4], strides = [1, 1, 1]} : vector<10x18x4xf32> to vector<8x16x4xf32>
    %74 = vector.extract_strided_slice %68 {offsets = [1, 1, 0], sizes = [8, 16, 4], strides = [1, 1, 1]} : vector<10x18x4xf32> to vector<8x16x4xf32>
    %75 = vector.extract_strided_slice %68 {offsets = [1, 2, 0], sizes = [8, 16, 4], strides = [1, 1, 1]} : vector<10x18x4xf32> to vector<8x16x4xf32>
    %76 = vector.extract_strided_slice %68 {offsets = [2, 0, 0], sizes = [8, 16, 4], strides = [1, 1, 1]} : vector<10x18x4xf32> to vector<8x16x4xf32>
    %77 = vector.extract_strided_slice %68 {offsets = [2, 1, 0], sizes = [8, 16, 4], strides = [1, 1, 1]} : vector<10x18x4xf32> to vector<8x16x4xf32>
    %78 = vector.extract_strided_slice %68 {offsets = [2, 2, 0], sizes = [8, 16, 4], strides = [1, 1, 1]} : vector<10x18x4xf32> to vector<8x16x4xf32>
    %79 = tpu.concatenate %70, %71, %72, %73, %74, %75, %76, %77, %78 in 2 : vector<8x16x4xf32>, vector<8x16x4xf32>, vector<8x16x4xf32>, vector<8x16x4xf32>, vector<8x16x4xf32>, vector<8x16x4xf32>, vector<8x16x4xf32>, vector<8x16x4xf32>, vector<8x16x4xf32> -> vector<8x16x36xf32>
    %cst_43 = arith.constant dense<0.000000e+00> : vector<8x16x4xf32>
    %80 = tpu.matmul %79, %69, %cst_43 {dimension_numbers = #tpu.dot_dimension_numbers<[2], [0], [0, 1], [1], [0, 0, 0, 1, 1, 1], [], []>} : vector<8x16x36xf32>, vector<36x4xf32>, vector<8x16x4xf32> -> vector<8x16x4xf32>
    %c0_44 = arith.constant 0 : index
    %c0_45 = arith.constant 0 : index
    %81 = vector.load %arg6[%c0_44, %c0_45] : memref<1x4xf32, #tpu.memory_space<vmem>>, vector<1x4xf32>
    %82 = vector.shape_cast %81 : vector<1x4xf32> to vector<1x1x4xf32>
    %83 = vector.broadcast %82 : vector<1x1x4xf32> to vector<8x16x4xf32>
    %84 = arith.addf %80, %83 : vector<8x16x4xf32>
    %c2_i32_46 = arith.constant 2 : i32
    %85 = arith.addi %1, %c2_i32_46 : i32
    %c0_47 = arith.constant 0 : index
    %86 = arith.index_cast %85 : i32 to index
    %c2_48 = arith.constant 2 : index
    %c0_49 = arith.constant 0 : index
    %87 = vector.load %arg2[%c0_47, %86, %c2_48, %c0_49] : memref<1x20x20x4xf32, #tpu.memory_space<vmem>>, vector<1x8x16x4xf32>
    %88 = vector.shape_cast %87 : vector<1x8x16x4xf32> to vector<8x16x4xf32>
    %89 = arith.addf %84, %88 : vector<8x16x4xf32>
    %cst_50 = arith.constant 0.000000e+00 : f32
    %90 = vector.broadcast %cst_50 : f32 to vector<8x16x4xf32>
    %91 = arith.maximumf %89, %90 : vector<8x16x4xf32>
    %c0_51 = arith.constant 0 : index
    %c0_52 = arith.constant 0 : index
    %c0_53 = arith.constant 0 : index
    %c0_54 = arith.constant 0 : index
    %92 = vector.load %arg7[%c0_51, %c0_52, %c0_53, %c0_54] : memref<1x8x16x4xf32, #tpu.memory_space<vmem>>, vector<1x8x16x4xf32>
    %93 = vector.shape_cast %92 : vector<1x8x16x4xf32> to vector<8x16x4xf32>
    %94 = vector.shape_cast %91 : vector<8x16x4xf32> to vector<1x8x16x4xf32>
    tpu.vector_store %arg7[%c0_51, %c0_52, %c0_53, %c0_54], %94 {strides = array<i32>} : memref<1x8x16x4xf32, #tpu.memory_space<vmem>>, vector<1x8x16x4xf32>,
    return
  }
  func.func @transform_0(%arg0: i32, %arg1: i32) -> (i32, i32, i32, i32) {
    %c0_i32 = arith.constant 0 : i32
    %c0_i32_0 = arith.constant 0 : i32
    %c0_i32_1 = arith.constant 0 : i32
    %c0_i32_2 = arith.constant 0 : i32
    return %arg0, %c0_i32, %c0_i32_0, %c0_i32_1 : i32, i32, i32, i32
  }
  func.func @transform_1(%arg0: i32, %arg1: i32) -> (i32, i32) {
    %c0_i32 = arith.constant 0 : i32
    %c0_i32_0 = arith.constant 0 : i32
    %c0_i32_1 = arith.constant 0 : i32
    return %c0_i32, %c0_i32_0 : i32, i32
  }
  func.func @transform_2(%arg0: i32, %arg1: i32) -> (i32, i32) {
    %c0_i32 = arith.constant 0 : i32
    %c0_i32_0 = arith.constant 0 : i32
    %c0_i32_1 = arith.constant 0 : i32
    return %c0_i32, %c0_i32_0 : i32, i32
  }
  func.func @transform_3(%arg0: i32, %arg1: i32) -> (i32, i32) {
    %c0_i32 = arith.constant 0 : i32
    %c0_i32_0 = arith.constant 0 : i32
    %c0_i32_1 = arith.constant 0 : i32
    return %c0_i32, %c0_i32_0 : i32, i32
  }
  func.func @transform_4(%arg0: i32, %arg1: i32) -> (i32, i32) {
    %c0_i32 = arith.constant 0 : i32
    %c0_i32_0 = arith.constant 0 : i32
    %c0_i32_1 = arith.constant 0 : i32
    return %c0_i32, %c0_i32_0 : i32, i32
  }
  func.func @transform_5(%arg0: i32, %arg1: i32) -> (i32, i32, i32, i32) {
    %c0_i32 = arith.constant 0 : i32
    %c0_i32_0 = arith.constant 0 : i32
    %c0_i32_1 = arith.constant 0 : i32
    return %arg0, %arg1, %c0_i32, %c0_i32_0 : i32, i32, i32, i32
  }
}

</mosaic_0001>

<llo_original>
// kernel: tpu_custom_call.1
$region0: #{tpu_custom_call.1}
  #allocation0 [shape = 'u32[]', space=smem, size = 0x4, offset = 0x4, fixed_abs, tag = 'smem constant byte address 0x4 - core index']
  #allocation1 [shape = 'u32[144,128]{1,0:T(1,128)}', space=vmem, size = 0x12000, scoped, tag = 'internal scratch']
  %s0 = inlined_call_operand.vmem [shape: f32[2,20,20,4], index: 0, kind: input, shape index: {}]
  %s1 = inlined_call_operand.vmem [shape: f32[36,4], index: 1, kind: input, shape index: {}]
  %s2 = inlined_call_operand.vmem [shape: f32[1,4], index: 2, kind: input, shape index: {}]
  %s3 = inlined_call_operand.vmem [shape: f32[36,4], index: 3, kind: input, shape index: {}]
  %s4 = inlined_call_operand.vmem [shape: f32[1,4], index: 4, kind: input, shape index: {}]
  %s5 = inlined_call_operand.vmem [shape: f32[2,16,16,4], index: 5, kind: output, shape index: {}]
  %s6 = sld [smem:[#allocation0]]
  $region53: #{tpu_custom_call.1} parent=0
    _
  %s8 = ssub.s32 1, %s6
  %s9 = scalar_select 0, %s8, %s6
  loop: start=0, step=1, limit=6
  $region2: #{tpu_custom_call.1} parent=0 // loop_pre_header
    _
  $region3: #{tpu_custom_call.1} parent=0 // loop_header
    %s11 = sphi 0, %s15
    %p12 = scmp.ge.s32.totalorder %s11, 6
    %s18 = sphi 0, %s30
    %s19 = sphi 0, %s26
    %s20 = sphi 0, %s18
    %s21 = sphi 0, %s19
    %s22 = sphi 0, %s20
    %s23 = sphi 0, %s21
    %s33 = sphi 0, %s35
    %s36 = sphi 0, %s33
    %s37 = sphi 0, %s36
    %s53 = sphi 0, %s37
    %s57 = sphi 0, %s57
    %s59 = sphi 0, %s57
    %s60 = sphi 0, %s59
    %s74 = sphi 0, %s60
    %s78 = sphi 0, %s78
    %s80 = sphi 0, %s78
    %s81 = sphi 0, %s80
    %s95 = sphi 0, %s81
    %s99 = sphi 0, %s99
    %s101 = sphi 0, %s99
    %s102 = sphi 0, %s101
    %s116 = sphi 0, %s102
    %s120 = sphi 0, %s120
    %s122 = sphi 0, %s120
    %s123 = sphi 0, %s122
    %s137 = sphi 0, %s123
    %s145 = sphi 0, %s147
    %s148 = sphi 0, %s145
    %s149 = sphi 0, %s148
    %s165 = sphi 0, %s149
  $region4: #{tpu_custom_call.1} parent=0 // loop_header_branch
    %14 = sbr.rel (%p12) target = $region8
  $region5: #{tpu_custom_call.1} parent=0 // loop_body
    %s16 = ssub.s32 %s11, 1
    %s17 = ssub.s32 %s11, 2
    %s24 = sadd.s32 1, %s19
    %p25 = scmp.ge.s32.totalorder %s24, 2
    %s26 = scalar_select %p25, 0, %s24
    %s27 = sadd.s32 1, %s18
    %s28 = scalar_select %p25, %s27, %s18
    %p29 = scmp.ge.s32.totalorder %s28, 2
    %s30 = scalar_select %p29, 0, %s28
    %s31 = ssub.s32 %s18, %s30
    %p32 = scmp.eq.s32.totalorder %s31, 0
    %s34 = sadd.s32 %s33, 1
    %s35 = scalar_select %p32, %s33, %s34
    %p38 = pneg %p32
    %p39 = scmp.eq.s32.totalorder %s11, 3
    %p40 = por %p38, %p39
    %p41 = scmp.ne.s32.totalorder %s33, %s36
    %p42 = scmp.eq.s32.totalorder %s11, 0
    %p43 = por %p41, %p42
    %p44 = scmp.ne.s32.totalorder %s33, %s36
    %p45 = scmp.eq.s32.totalorder %s16, 3
    %p46 = por %p44, %p45
    %p47 = scmp.ne.s32.totalorder %s36, %s37
    %p48 = scmp.eq.s32.totalorder %s16, 0
    %p49 = por %p47, %p48
    %p50 = scmp.ne.s32.totalorder %s36, %s37
    %p51 = scmp.eq.s32.totalorder %s17, 3
    %p52 = por %p50, %p51
    %p54 = scmp.ne.s32.totalorder %s37, %s53
    %p55 = scmp.eq.s32.totalorder %s17, 0
    %p56 = por %p54, %p55
    %s58 = sadd.s32 %s57, 1
    %p61 = scmp.eq.s32.totalorder %s11, 3
    %p62 = scmp.ne.s32.totalorder %s57, %s59
    %p63 = scmp.eq.s32.totalorder %s11, 0
    %p64 = por %p62, %p63
    %p65 = scmp.ne.s32.totalorder %s57, %s59
    %p66 = scmp.eq.s32.totalorder %s16, 3
    %p67 = por %p65, %p66
    %p68 = scmp.ne.s32.totalorder %s59, %s60
    %p69 = scmp.eq.s32.totalorder %s16, 0
    %p70 = por %p68, %p69
    %p71 = scmp.ne.s32.totalorder %s59, %s60
    %p72 = scmp.eq.s32.totalorder %s17, 3
    %p73 = por %p71, %p72
    %p75 = scmp.ne.s32.totalorder %s60, %s74
    %p76 = scmp.eq.s32.totalorder %s17, 0
    %p77 = por %p75, %p76
    %s79 = sadd.s32 %s78, 1
    %p82 = scmp.eq.s32.totalorder %s11, 3
    %p83 = scmp.ne.s32.totalorder %s78, %s80
    %p84 = scmp.eq.s32.totalorder %s11, 0
    %p85 = por %p83, %p84
    %p86 = scmp.ne.s32.totalorder %s78, %s80
    %p87 = scmp.eq.s32.totalorder %s16, 3
    %p88 = por %p86, %p87
    %p89 = scmp.ne.s32.totalorder %s80, %s81
    %p90 = scmp.eq.s32.totalorder %s16, 0
    %p91 = por %p89, %p90
    %p92 = scmp.ne.s32.totalorder %s80, %s81
    %p93 = scmp.eq.s32.totalorder %s17, 3
    %p94 = por %p92, %p93
    %p96 = scmp.ne.s32.totalorder %s81, %s95
    %p97 = scmp.eq.s32.totalorder %s17, 0
    %p98 = por %p96, %p97
    %s100 = sadd.s32 %s99, 1
    %p103 = scmp.eq.s32.totalorder %s11, 3
    %p104 = scmp.ne.s32.totalorder %s99, %s101
    %p105 = scmp.eq.s32.totalorder %s11, 0
    %p106 = por %p104, %p105
    %p107 = scmp.ne.s32.totalorder %s99, %s101
    %p108 = scmp.eq.s32.totalorder %s16, 3
    %p109 = por %p107, %p108
    %p110 = scmp.ne.s32.totalorder %s101, %s102
    %p111 = scmp.eq.s32.totalorder %s16, 0
    %p112 = por %p110, %p111
    %p113 = scmp.ne.s32.totalorder %s101, %s102
    %p114 = scmp.eq.s32.totalorder %s17, 3
    %p115 = por %p113, %p114
    %p117 = scmp.ne.s32.totalorder %s102, %s116
    %p118 = scmp.eq.s32.totalorder %s17, 0
    %p119 = por %p117, %p118
    %s121 = sadd.s32 %s120, 1
    %p124 = scmp.eq.s32.totalorder %s11, 3
    %p125 = scmp.ne.s32.totalorder %s120, %s122
    %p126 = scmp.eq.s32.totalorder %s11, 0
    %p127 = por %p125, %p126
    %p128 = scmp.ne.s32.totalorder %s120, %s122
    %p129 = scmp.eq.s32.totalorder %s16, 3
    %p130 = por %p128, %p129
    %p131 = scmp.ne.s32.totalorder %s122, %s123
    %p132 = scmp.eq.s32.totalorder %s16, 0
    %p133 = por %p131, %p132
    %p134 = scmp.ne.s32.totalorder %s122, %s123
    %p135 = scmp.eq.s32.totalorder %s17, 3
    %p136 = por %p134, %p135
    %p138 = scmp.ne.s32.totalorder %s123, %s137
    %p139 = scmp.eq.s32.totalorder %s17, 0
    %p140 = por %p138, %p139
    %s141 = ssub.s32 %s18, %s30
    %s142 = ssub.s32 %s19, %s26
    %s143 = sor.u32 %s141, %s142
    %p144 = scmp.eq.s32.totalorder %s143, 0
    %s146 = sadd.s32 %s145, 1
    %s147 = scalar_select %p144, %s145, %s146
    %p150 = pneg %p144
    %p151 = scmp.eq.s32.totalorder %s11, 3
    %p152 = por %p150, %p151
    %p153 = scmp.ne.s32.totalorder %s145, %s148
    %p154 = scmp.eq.s32.totalorder %s11, 0
    %p155 = por %p153, %p154
    %p156 = scmp.ne.s32.totalorder %s145, %s148
    %p157 = scmp.eq.s32.totalorder %s16, 3
    %p158 = por %p156, %p157
    %p159 = scmp.ne.s32.totalorder %s148, %s149
    %p160 = scmp.eq.s32.totalorder %s16, 0
    %p161 = por %p159, %p160
    %p162 = scmp.ne.s32.totalorder %s148, %s149
    %p163 = scmp.eq.s32.totalorder %s17, 3
    %p164 = por %p162, %p163
    %p166 = scmp.ne.s32.totalorder %s149, %s165
    %p167 = scmp.eq.s32.totalorder %s17, 0
    %p168 = por %p166, %p167
    %p169 = scmp.le.s32.totalorder 1, %s11
    %p170 = scmp.lt.s32.totalorder %s11, 5
    %p171 = pnand %p169, %p170
    %p172 = pneg %p171
    // Predicated region
    $region9: #{tpu_custom_call.1} parent=5 // pred_check
      _
    $region10: #{tpu_custom_call.1} parent=5 // pred_check_branch
      %174 = sbr.rel (%p171) target = $region12
    $region11: #{tpu_custom_call.1} parent=5 // pred_region
      %s175 = ssub.s32 %s11, 1
      // Predicated region
      $region13: #{tpu_custom_call.1} parent=11 // pred_check
        %p176 = pneg %p70
      $region14: #{tpu_custom_call.1} parent=11 // pred_check_branch
        %178 = sbr.rel (%p176) target = $region16
      $region15: #{tpu_custom_call.1} parent=11 // pred_region
        _
      $region16: #{tpu_custom_call.1} parent=11 // pred_fallthru
        _
      // Predicated region
      $region17: #{tpu_custom_call.1} parent=11 // pred_check
        %p179 = pneg %p91
      $region18: #{tpu_custom_call.1} parent=11 // pred_check_branch
        %181 = sbr.rel (%p179) target = $region20
      $region19: #{tpu_custom_call.1} parent=11 // pred_region
        _
      $region20: #{tpu_custom_call.1} parent=11 // pred_fallthru
        _
      // Predicated region
      $region21: #{tpu_custom_call.1} parent=11 // pred_check
        %p182 = pneg %p112
      $region22: #{tpu_custom_call.1} parent=11 // pred_check_branch
        %184 = sbr.rel (%p182) target = $region24
      $region23: #{tpu_custom_call.1} parent=11 // pred_region
        _
      $region24: #{tpu_custom_call.1} parent=11 // pred_fallthru
        _
      // Predicated region
      $region25: #{tpu_custom_call.1} parent=11 // pred_check
        %p185 = pneg %p133
      $region26: #{tpu_custom_call.1} parent=11 // pred_check_branch
        %187 = sbr.rel (%p185) target = $region28
      $region27: #{tpu_custom_call.1} parent=11 // pred_region
        _
      $region28: #{tpu_custom_call.1} parent=11 // pred_fallthru
        _
    $region12: #{tpu_custom_call.1} parent=5 // pred_fallthru
      _
    %p188 = scmp.lt.s32.totalorder %s11, 4
    // Predicated region
    $region29: #{tpu_custom_call.1} parent=5 // pred_check
      %p189 = pneg %p188
    $region30: #{tpu_custom_call.1} parent=5 // pred_check_branch
      %191 = sbr.rel (%p189) target = $region32
    $region31: #{tpu_custom_call.1} parent=5 // pred_region
      // Predicated region
      $region33: #{tpu_custom_call.1} parent=31 // pred_check
        %p192 = pneg %p43
      $region34: #{tpu_custom_call.1} parent=31 // pred_check_branch
        %194 = sbr.rel (%p192) target = $region36
      $region35: #{tpu_custom_call.1} parent=31 // pred_region
        %p195 = scmp.lt.s32.totalorder %s18, 1
        %s196 = scalar_select %p195, %s18, 1
        %s197 = smul.addr %s196, 60
        %s198 = smul.addr %s197, 8
        %s199 = scalar_lea.vmem %s0, %s198
      $region36: #{tpu_custom_call.1} parent=31 // pred_fallthru
        _
    $region32: #{tpu_custom_call.1} parent=5 // pred_fallthru
      _
    %p200 = scmp.le.s32.totalorder 1, %s11
    %p201 = scmp.lt.s32.totalorder %s11, 5
    %p202 = pnand %p200, %p201
    %p203 = pneg %p202
    // Predicated region
    $region37: #{tpu_custom_call.1} parent=5 // pred_check
      _
    $region38: #{tpu_custom_call.1} parent=5 // pred_check_branch
      %205 = sbr.rel (%p202) target = $region40
    $region39: #{tpu_custom_call.1} parent=5 // pred_region
      %s206 = ssub.s32 %s11, 1
      %p207 = scmp.lt.s32.totalorder %s20, 1
      %s208 = scalar_select %p207, %s20, 1
      %s209 = smul.addr %s208, 60
      %s210 = smul.addr %s209, 8
      %s211 = scalar_lea.vmem %s0, %s210
      %p212 = pneg %p49
      %p213 = pneg %p46
      %p214 = pneg %p70
      %p215 = pneg %p67
      %p216 = pneg %p91
      %p217 = pneg %p88
      %p218 = pneg %p112
      %p219 = pneg %p109
      %p220 = pneg %p133
      %p221 = pneg %p130
      %p222 = pneg %p161
      %p223 = pneg %p158
      %s224 = smul.u32 8, %s21
      %p225 = scmp.lt.s32.totalorder %s20, 1
      %s226 = scalar_select %p225, %s20, 1
      %p227 = scmp.lt.s32.totalorder %s224, 15
      %s228 = scalar_select %p227, %s224, 15
      %s229 = smul.addr %s228, 2
      %s230 = smul.addr %s226, 32
      %s231 = sadd.s32 %s229, %s230
      %s232 = smul.addr %s231, 8
      %s233 = scalar_lea.vmem %s5, %s232
      %p234 = scmp.lt.s32.totalorder %s20, 1
      %s235 = scalar_select %p234, %s20, 1
      %s236 = smul.addr %s235, 60
      %s237 = smul.addr %s236, 8
      %s238 = scalar_lea.vmem %s0, %s237
      %s239 = smul.u32 8, %s21
      %p240 = scmp.lt.s32.totalorder %s20, 1
      %s241 = scalar_select %p240, %s20, 1
      %p242 = scmp.lt.s32.totalorder %s239, 15
      %s243 = scalar_select %p242, %s239, 15
      %s244 = smul.addr %s243, 2
      %s245 = smul.addr %s241, 32
      %s246 = sadd.s32 %s244, %s245
      %s247 = smul.addr %s246, 8
      %s248 = scalar_lea.vmem %s5, %s247
      %s249 = smul.u32 8, %s21
      %s250 = smul.u32 %s21, 8
      %v251 = vld [vmem:[%s1] sm:$0xff]
      %v252 = vld [vmem:[%s1 + $0x8] sm:$0xff]
      %v253 = vld [vmem:[%s1 + $0x10] sm:$0xff]
      %v254 = vld [vmem:[%s1 + $0x18] sm:$0xff]
      %v255 = vld [vmem:[%s1 + $0x20] sm:$0xf]
      %s256 = smul.u32 %s250, 24
      %s257 = scalar_lea.vmem %s238, %s256
      %v258 = vld [vmem:[%s257] sm:$0xff]
      %v259 = vld [vmem:[%s257 + $0x8] sm:$0xff]
      %v260 = vld [vmem:[%s257 + $0x10] sm:$0x3]
      %v261 = vld [vmem:[%s257 + $0x18] sm:$0xff]
      %v262 = vld [vmem:[%s257 + $0x20] sm:$0xff]
      %v263 = vld [vmem:[%s257 + $0x28] sm:$0x3]
      %v264 = vld [vmem:[%s257 + $0x30] sm:$0xff]
      %v265 = vld [vmem:[%s257 + $0x38] sm:$0xff]
      %v266 = vld [vmem:[%s257 + $0x40] sm:$0x3]
      %v267 = vld [vmem:[%s257 + $0x48] sm:$0xff]
      %v268 = vld [vmem:[%s257 + $0x50] sm:$0xff]
      %v269 = vld [vmem:[%s257 + $0x58] sm:$0x3]
      %v270 = vld [vmem:[%s257 + $0x60] sm:$0xff]
      %v271 = vld [vmem:[%s257 + $0x68] sm:$0xff]
      %v272 = vld [vmem:[%s257 + $0x70] sm:$0x3]
      %v273 = vld [vmem:[%s257 + $0x78] sm:$0xff]
      %v274 = vld [vmem:[%s257 + $0x80] sm:$0xff]
      %v275 = vld [vmem:[%s257 + $0x88] sm:$0x3]
      %v276 = vld [vmem:[%s257 + $0x90] sm:$0xff]
      %v277 = vld [vmem:[%s257 + $0x98] sm:$0xff]
      %v278 = vld [vmem:[%s257 + $0xa0] sm:$0x3]
      %v279 = vld [vmem:[%s257 + $0xa8] sm:$0xff]
      %v280 = vld [vmem:[%s257 + $0xb0] sm:$0xff]
      %v281 = vld [vmem:[%s257 + $0xb8] sm:$0x3]
      %v282 = vld [vmem:[%s257 + $0xc0] sm:$0xff]
      %v283 = vld [vmem:[%s257 + $0xc8] sm:$0xff]
      %v284 = vld [vmem:[%s257 + $0xd0] sm:$0x3]
      %v285 = vld [vmem:[%s257 + $0xd8] sm:$0xff]
      %v286 = vld [vmem:[%s257 + $0xe0] sm:$0xff]
      %v287 = vld [vmem:[%s257 + $0xe8] sm:$0x3]
      %v288 = vld [vmem:[%s257 + $0x1] sm:$0xff]
      %v289 = vld [vmem:[%s257 + $0x9] sm:$0xff]
      %v290 = vld [vmem:[%s257 + $0x11] sm:$0x3]
      %v291 = vld [vmem:[%s257 + $0x19] sm:$0xff]
      %v292 = vld [vmem:[%s257 + $0x21] sm:$0xff]
      %v293 = vld [vmem:[%s257 + $0x29] sm:$0x3]
      %v294 = vld [vmem:[%s257 + $0x31] sm:$0xff]
      %v295 = vld [vmem:[%s257 + $0x39] sm:$0xff]
      %v296 = vld [vmem:[%s257 + $0x41] sm:$0x3]
      %v297 = vld [vmem:[%s257 + $0x49] sm:$0xff]
      %v298 = vld [vmem:[%s257 + $0x51] sm:$0xff]
      %v299 = vld [vmem:[%s257 + $0x59] sm:$0x3]
      %v300 = vld [vmem:[%s257 + $0x61] sm:$0xff]
      %v301 = vld [vmem:[%s257 + $0x69] sm:$0xff]
      %v302 = vld [vmem:[%s257 + $0x71] sm:$0x3]
      %v303 = vld [vmem:[%s257 + $0x79] sm:$0xff]
      %v304 = vld [vmem:[%s257 + $0x81] sm:$0xff]
      %v305 = vld [vmem:[%s257 + $0x89] sm:$0x3]
      %v306 = vld [vmem:[%s257 + $0x91] sm:$0xff]
      %v307 = vld [vmem:[%s257 + $0x99] sm:$0xff]
      %v308 = vld [vmem:[%s257 + $0xa1] sm:$0x3]
      %v309 = vld [vmem:[%s257 + $0xa9] sm:$0xff]
      %v310 = vld [vmem:[%s257 + $0xb1] sm:$0xff]
      %v311 = vld [vmem:[%s257 + $0xb9] sm:$0x3]
      %v312 = vld [vmem:[%s257 + $0xc1] sm:$0xff]
      %v313 = vld [vmem:[%s257 + $0xc9] sm:$0xff]
      %v314 = vld [vmem:[%s257 + $0xd1] sm:$0x3]
      %v315 = vld [vmem:[%s257 + $0xd9] sm:$0xff]
      %v316 = vld [vmem:[%s257 + $0xe1] sm:$0xff]
      %v317 = vld [vmem:[%s257 + $0xe9] sm:$0x3]
      %v318 = vld [vmem:[%s257 + $0x2] sm:$0xff]
      %v319 = vld [vmem:[%s257 + $0xa] sm:$0xff]
      %v320 = vld [vmem:[%s257 + $0x12] sm:$0x3]
      %v321 = vld [vmem:[%s257 + $0x1a] sm:$0xff]
      %v322 = vld [vmem:[%s257 + $0x22] sm:$0xff]
      %v323 = vld [vmem:[%s257 + $0x2a] sm:$0x3]
      %v324 = vld [vmem:[%s257 + $0x32] sm:$0xff]
      %v325 = vld [vmem:[%s257 + $0x3a] sm:$0xff]
      %v326 = vld [vmem:[%s257 + $0x42] sm:$0x3]
      %v327 = vld [vmem:[%s257 + $0x4a] sm:$0xff]
      %v328 = vld [vmem:[%s257 + $0x52] sm:$0xff]
      %v329 = vld [vmem:[%s257 + $0x5a] sm:$0x3]
      %v330 = vld [vmem:[%s257 + $0x62] sm:$0xff]
      %v331 = vld [vmem:[%s257 + $0x6a] sm:$0xff]
      %v332 = vld [vmem:[%s257 + $0x72] sm:$0x3]
      %v333 = vld [vmem:[%s257 + $0x7a] sm:$0xff]
      %v334 = vld [vmem:[%s257 + $0x82] sm:$0xff]
      %v335 = vld [vmem:[%s257 + $0x8a] sm:$0x3]
      %v336 = vld [vmem:[%s257 + $0x92] sm:$0xff]
      %v337 = vld [vmem:[%s257 + $0x9a] sm:$0xff]
      %v338 = vld [vmem:[%s257 + $0xa2] sm:$0x3]
      %v339 = vld [vmem:[%s257 + $0xaa] sm:$0xff]
      %v340 = vld [vmem:[%s257 + $0xb2] sm:$0xff]
      %v341 = vld [vmem:[%s257 + $0xba] sm:$0x3]
      %v342 = vld [vmem:[%s257 + $0xc2] sm:$0xff]
      %v343 = vld [vmem:[%s257 + $0xca] sm:$0xff]
      %v344 = vld [vmem:[%s257 + $0xd2] sm:$0x3]
      %v345 = vld [vmem:[%s257 + $0xda] sm:$0xff]
      %v346 = vld [vmem:[%s257 + $0xe2] sm:$0xff]
      %v347 = vld [vmem:[%s257 + $0xea] sm:$0x3]
      %s348 = sadd.s32 %s250, 1
      %s349 = smul.u32 %s348, 24
      %s350 = scalar_lea.vmem %s238, %s349
      %v351 = vld [vmem:[%s350] sm:$0xff]
      %v352 = vld [vmem:[%s350 + $0x8] sm:$0xff]
      %v353 = vld [vmem:[%s350 + $0x10] sm:$0x3]
      %v354 = vld [vmem:[%s350 + $0x18] sm:$0xff]
      %v355 = vld [vmem:[%s350 + $0x20] sm:$0xff]
      %v356 = vld [vmem:[%s350 + $0x28] sm:$0x3]
      %v357 = vld [vmem:[%s350 + $0x30] sm:$0xff]
      %v358 = vld [vmem:[%s350 + $0x38] sm:$0xff]
      %v359 = vld [vmem:[%s350 + $0x40] sm:$0x3]
      %v360 = vld [vmem:[%s350 + $0x48] sm:$0xff]
      %v361 = vld [vmem:[%s350 + $0x50] sm:$0xff]
      %v362 = vld [vmem:[%s350 + $0x58] sm:$0x3]
      %v363 = vld [vmem:[%s350 + $0x60] sm:$0xff]
      %v364 = vld [vmem:[%s350 + $0x68] sm:$0xff]
      %v365 = vld [vmem:[%s350 + $0x70] sm:$0x3]
      %v366 = vld [vmem:[%s350 + $0x78] sm:$0xff]
      %v367 = vld [vmem:[%s350 + $0x80] sm:$0xff]
      %v368 = vld [vmem:[%s350 + $0x88] sm:$0x3]
      %v369 = vld [vmem:[%s350 + $0x90] sm:$0xff]
      %v370 = vld [vmem:[%s350 + $0x98] sm:$0xff]
      %v371 = vld [vmem:[%s350 + $0xa0] sm:$0x3]
      %v372 = vld [vmem:[%s350 + $0xa8] sm:$0xff]
      %v373 = vld [vmem:[%s350 + $0xb0] sm:$0xff]
      %v374 = vld [vmem:[%s350 + $0xb8] sm:$0x3]
      %v375 = vld [vmem:[%s350 + $0xc0] sm:$0xff]
      %v376 = vld [vmem:[%s350 + $0xc8] sm:$0xff]
      %v377 = vld [vmem:[%s350 + $0xd0] sm:$0x3]
      %v378 = vld [vmem:[%s350 + $0xd8] sm:$0xff]
      %v379 = vld [vmem:[%s350 + $0xe0] sm:$0xff]
      %v380 = vld [vmem:[%s350 + $0xe8] sm:$0x3]
      %v381 = vld [vmem:[%s350 + $0x1] sm:$0xff]
      %v382 = vld [vmem:[%s350 + $0x9] sm:$0xff]
      %v383 = vld [vmem:[%s350 + $0x11] sm:$0x3]
      %v384 = vld [vmem:[%s350 + $0x19] sm:$0xff]
      %v385 = vld [vmem:[%s350 + $0x21] sm:$0xff]
      %v386 = vld [vmem:[%s350 + $0x29] sm:$0x3]
      %v387 = vld [vmem:[%s350 + $0x31] sm:$0xff]
      %v388 = vld [vmem:[%s350 + $0x39] sm:$0xff]
      %v389 = vld [vmem:[%s350 + $0x41] sm:$0x3]
      %v390 = vld [vmem:[%s350 + $0x49] sm:$0xff]
      %v391 = vld [vmem:[%s350 + $0x51] sm:$0xff]
      %v392 = vld [vmem:[%s350 + $0x59] sm:$0x3]
      %v393 = vld [vmem:[%s350 + $0x61] sm:$0xff]
      %v394 = vld [vmem:[%s350 + $0x69] sm:$0xff]
      %v395 = vld [vmem:[%s350 + $0x71] sm:$0x3]
      %v396 = vld [vmem:[%s350 + $0x79] sm:$0xff]
      %v397 = vld [vmem:[%s350 + $0x81] sm:$0xff]
      %v398 = vld [vmem:[%s350 + $0x89] sm:$0x3]
      %v399 = vld [vmem:[%s350 + $0x91] sm:$0xff]
      %v400 = vld [vmem:[%s350 + $0x99] sm:$0xff]
      %v401 = vld [vmem:[%s350 + $0xa1] sm:$0x3]
      %v402 = vld [vmem:[%s350 + $0xa9] sm:$0xff]
      %v403 = vld [vmem:[%s350 + $0xb1] sm:$0xff]
      %v404 = vld [vmem:[%s350 + $0xb9] sm:$0x3]
      %v405 = vld [vmem:[%s350 + $0xc1] sm:$0xff]
      %v406 = vld [vmem:[%s350 + $0xc9] sm:$0xff]
      %v407 = vld [vmem:[%s350 + $0xd1] sm:$0x3]
      %v408 = vld [vmem:[%s350 + $0xd9] sm:$0xff]
      %v409 = vld [vmem:[%s350 + $0xe1] sm:$0xff]
      %v410 = vld [vmem:[%s350 + $0xe9] sm:$0x3]
      %v411 = vld [vmem:[%s350 + $0x2] sm:$0xff]
      %v412 = vld [vmem:[%s350 + $0xa] sm:$0xff]
      %v413 = vld [vmem:[%s350 + $0x12] sm:$0x3]
      %v414 = vld [vmem:[%s350 + $0x1a] sm:$0xff]
      %v415 = vld [vmem:[%s350 + $0x22] sm:$0xff]
      %v416 = vld [vmem:[%s350 + $0x2a] sm:$0x3]
      %v417 = vld [vmem:[%s350 + $0x32] sm:$0xff]
      %v418 = vld [vmem:[%s350 + $0x3a] sm:$0xff]
      %v419 = vld [vmem:[%s350 + $0x42] sm:$0x3]
      %v420 = vld [vmem:[%s350 + $0x4a] sm:$0xff]
      %v421 = vld [vmem:[%s350 + $0x52] sm:$0xff]
      %v422 = vld [vmem:[%s350 + $0x5a] sm:$0x3]
      %v423 = vld [vmem:[%s350 + $0x62] sm:$0xff]
      %v424 = vld [vmem:[%s350 + $0x6a] sm:$0xff]
      %v425 = vld [vmem:[%s350 + $0x72] sm:$0x3]
      %v426 = vld [vmem:[%s350 + $0x7a] sm:$0xff]
      %v427 = vld [vmem:[%s350 + $0x82] sm:$0xff]
      %v428 = vld [vmem:[%s350 + $0x8a] sm:$0x3]
      %v429 = vld [vmem:[%s350 + $0x92] sm:$0xff]
      %v430 = vld [vmem:[%s350 + $0x9a] sm:$0xff]
      %v431 = vld [vmem:[%s350 + $0xa2] sm:$0x3]
      %v432 = vld [vmem:[%s350 + $0xaa] sm:$0xff]
      %v433 = vld [vmem:[%s350 + $0xb2] sm:$0xff]
      %v434 = vld [vmem:[%s350 + $0xba] sm:$0x3]
      %v435 = vld [vmem:[%s350 + $0xc2] sm:$0xff]
      %v436 = vld [vmem:[%s350 + $0xca] sm:$0xff]
      %v437 = vld [vmem:[%s350 + $0xd2] sm:$0x3]
      %v438 = vld [vmem:[%s350 + $0xda] sm:$0xff]
      %v439 = vld [vmem:[%s350 + $0xe2] sm:$0xff]
      %v440 = vld [vmem:[%s350 + $0xea] sm:$0x3]
      %s441 = sadd.s32 %s250, 2
      %s442 = smul.u32 %s441, 24
      %s443 = scalar_lea.vmem %s238, %s442
      %v444 = vld [vmem:[%s443] sm:$0xff]
      %v445 = vld [vmem:[%s443 + $0x8] sm:$0xff]
      %v446 = vld [vmem:[%s443 + $0x10] sm:$0x3]
      %v447 = vld [vmem:[%s443 + $0x18] sm:$0xff]
      %v448 = vld [vmem:[%s443 + $0x20] sm:$0xff]
      %v449 = vld [vmem:[%s443 + $0x28] sm:$0x3]
      %v450 = vld [vmem:[%s443 + $0x30] sm:$0xff]
      %v451 = vld [vmem:[%s443 + $0x38] sm:$0xff]
      %v452 = vld [vmem:[%s443 + $0x40] sm:$0x3]
      %v453 = vld [vmem:[%s443 + $0x48] sm:$0xff]
      %v454 = vld [vmem:[%s443 + $0x50] sm:$0xff]
      %v455 = vld [vmem:[%s443 + $0x58] sm:$0x3]
      %v456 = vld [vmem:[%s443 + $0x60] sm:$0xff]
      %v457 = vld [vmem:[%s443 + $0x68] sm:$0xff]
      %v458 = vld [vmem:[%s443 + $0x70] sm:$0x3]
      %v459 = vld [vmem:[%s443 + $0x78] sm:$0xff]
      %v460 = vld [vmem:[%s443 + $0x80] sm:$0xff]
      %v461 = vld [vmem:[%s443 + $0x88] sm:$0x3]
      %v462 = vld [vmem:[%s443 + $0x90] sm:$0xff]
      %v463 = vld [vmem:[%s443 + $0x98] sm:$0xff]
      %v464 = vld [vmem:[%s443 + $0xa0] sm:$0x3]
      %v465 = vld [vmem:[%s443 + $0xa8] sm:$0xff]
      %v466 = vld [vmem:[%s443 + $0xb0] sm:$0xff]
      %v467 = vld [vmem:[%s443 + $0xb8] sm:$0x3]
      %v468 = vld [vmem:[%s443 + $0xc0] sm:$0xff]
      %v469 = vld [vmem:[%s443 + $0xc8] sm:$0xff]
      %v470 = vld [vmem:[%s443 + $0xd0] sm:$0x3]
      %v471 = vld [vmem:[%s443 + $0xd8] sm:$0xff]
      %v472 = vld [vmem:[%s443 + $0xe0] sm:$0xff]
      %v473 = vld [vmem:[%s443 + $0xe8] sm:$0x3]
      %v474 = vld [vmem:[%s443 + $0x1] sm:$0xff]
      %v475 = vld [vmem:[%s443 + $0x9] sm:$0xff]
      %v476 = vld [vmem:[%s443 + $0x11] sm:$0x3]
      %v477 = vld [vmem:[%s443 + $0x19] sm:$0xff]
      %v478 = vld [vmem:[%s443 + $0x21] sm:$0xff]
      %v479 = vld [vmem:[%s443 + $0x29] sm:$0x3]
      %v480 = vld [vmem:[%s443 + $0x31] sm:$0xff]
      %v481 = vld [vmem:[%s443 + $0x39] sm:$0xff]
      %v482 = vld [vmem:[%s443 + $0x41] sm:$0x3]
      %v483 = vld [vmem:[%s443 + $0x49] sm:$0xff]
      %v484 = vld [vmem:[%s443 + $0x51] sm:$0xff]
      %v485 = vld [vmem:[%s443 + $0x59] sm:$0x3]
      %v486 = vld [vmem:[%s443 + $0x61] sm:$0xff]
      %v487 = vld [vmem:[%s443 + $0x69] sm:$0xff]
      %v488 = vld [vmem:[%s443 + $0x71] sm:$0x3]
      %v489 = vld [vmem:[%s443 + $0x79] sm:$0xff]
      %v490 = vld [vmem:[%s443 + $0x81] sm:$0xff]
      %v491 = vld [vmem:[%s443 + $0x89] sm:$0x3]
      %v492 = vld [vmem:[%s443 + $0x91] sm:$0xff]
      %v493 = vld [vmem:[%s443 + $0x99] sm:$0xff]
      %v494 = vld [vmem:[%s443 + $0xa1] sm:$0x3]
      %v495 = vld [vmem:[%s443 + $0xa9] sm:$0xff]
      %v496 = vld [vmem:[%s443 + $0xb1] sm:$0xff]
      %v497 = vld [vmem:[%s443 + $0xb9] sm:$0x3]
      %v498 = vld [vmem:[%s443 + $0xc1] sm:$0xff]
      %v499 = vld [vmem:[%s443 + $0xc9] sm:$0xff]
      %v500 = vld [vmem:[%s443 + $0xd1] sm:$0x3]
      %v501 = vld [vmem:[%s443 + $0xd9] sm:$0xff]
      %v502 = vld [vmem:[%s443 + $0xe1] sm:$0xff]
      %v503 = vld [vmem:[%s443 + $0xe9] sm:$0x3]
      %v504 = vld [vmem:[%s443 + $0x2] sm:$0xff]
      %v505 = vld [vmem:[%s443 + $0xa] sm:$0xff]
      %v506 = vld [vmem:[%s443 + $0x12] sm:$0x3]
      %v507 = vld [vmem:[%s443 + $0x1a] sm:$0xff]
      %v508 = vld [vmem:[%s443 + $0x22] sm:$0xff]
      %v509 = vld [vmem:[%s443 + $0x2a] sm:$0x3]
      %v510 = vld [vmem:[%s443 + $0x32] sm:$0xff]
      %v511 = vld [vmem:[%s443 + $0x3a] sm:$0xff]
      %v512 = vld [vmem:[%s443 + $0x42] sm:$0x3]
      %v513 = vld [vmem:[%s443 + $0x4a] sm:$0xff]
      %v514 = vld [vmem:[%s443 + $0x52] sm:$0xff]
      %v515 = vld [vmem:[%s443 + $0x5a] sm:$0x3]
      %v516 = vld [vmem:[%s443 + $0x62] sm:$0xff]
      %v517 = vld [vmem:[%s443 + $0x6a] sm:$0xff]
      %v518 = vld [vmem:[%s443 + $0x72] sm:$0x3]
      %v519 = vld [vmem:[%s443 + $0x7a] sm:$0xff]
      %v520 = vld [vmem:[%s443 + $0x82] sm:$0xff]
      %v521 = vld [vmem:[%s443 + $0x8a] sm:$0x3]
      %v522 = vld [vmem:[%s443 + $0x92] sm:$0xff]
      %v523 = vld [vmem:[%s443 + $0x9a] sm:$0xff]
      %v524 = vld [vmem:[%s443 + $0xa2] sm:$0x3]
      %v525 = vld [vmem:[%s443 + $0xaa] sm:$0xff]
      %v526 = vld [vmem:[%s443 + $0xb2] sm:$0xff]
      %v527 = vld [vmem:[%s443 + $0xba] sm:$0x3]
      %v528 = vld [vmem:[%s443 + $0xc2] sm:$0xff]
      %v529 = vld [vmem:[%s443 + $0xca] sm:$0xff]
      %v530 = vld [vmem:[%s443 + $0xd2] sm:$0x3]
      %v531 = vld [vmem:[%s443 + $0xda] sm:$0xff]
      %v532 = vld [vmem:[%s443 + $0xe2] sm:$0xff]
      %v533 = vld [vmem:[%s443 + $0xea] sm:$0x3]
      %564 = vrot.lane.b32.xlu0 %v288, 4
      %v565 = vpop.permute.xlu0 %564
      %566 = vrot.lane.b32.xlu0 %v289, 4
      %v567 = vpop.permute.xlu0 %566
      %568 = vrot.lane.b32.xlu0 %v290, 4
      %v569 = vpop.permute.xlu0 %568
      %570 = vrot.lane.b32.xlu0 %v291, 4
      %v571 = vpop.permute.xlu0 %570
      %572 = vrot.lane.b32.xlu0 %v292, 4
      %v573 = vpop.permute.xlu0 %572
      %574 = vrot.lane.b32.xlu0 %v293, 4
      %v575 = vpop.permute.xlu0 %574
      %576 = vrot.lane.b32.xlu0 %v294, 4
      %v577 = vpop.permute.xlu0 %576
      %578 = vrot.lane.b32.xlu0 %v295, 4
      %v579 = vpop.permute.xlu0 %578
      %580 = vrot.lane.b32.xlu0 %v296, 4
      %v581 = vpop.permute.xlu0 %580
      %582 = vrot.lane.b32.xlu0 %v297, 4
      %v583 = vpop.permute.xlu0 %582
      %584 = vrot.lane.b32.xlu0 %v298, 4
      %v585 = vpop.permute.xlu0 %584
      %586 = vrot.lane.b32.xlu0 %v299, 4
      %v587 = vpop.permute.xlu0 %586
      %588 = vrot.lane.b32.xlu0 %v300, 4
      %v589 = vpop.permute.xlu0 %588
      %590 = vrot.lane.b32.xlu0 %v301, 4
      %v591 = vpop.permute.xlu0 %590
      %592 = vrot.lane.b32.xlu0 %v302, 4
      %v593 = vpop.permute.xlu0 %592
      %594 = vrot.lane.b32.xlu0 %v303, 4
      %v595 = vpop.permute.xlu0 %594
      %596 = vrot.lane.b32.xlu0 %v304, 4
      %v597 = vpop.permute.xlu0 %596
      %598 = vrot.lane.b32.xlu0 %v305, 4
      %v599 = vpop.permute.xlu0 %598
      %600 = vrot.lane.b32.xlu0 %v306, 4
      %v601 = vpop.permute.xlu0 %600
      %602 = vrot.lane.b32.xlu0 %v307, 4
      %v603 = vpop.permute.xlu0 %602
      %604 = vrot.lane.b32.xlu0 %v308, 4
      %v605 = vpop.permute.xlu0 %604
      %606 = vrot.lane.b32.xlu0 %v309, 4
      %v607 = vpop.permute.xlu0 %606
      %608 = vrot.lane.b32.xlu0 %v310, 4
      %v609 = vpop.permute.xlu0 %608
      %610 = vrot.lane.b32.xlu0 %v311, 4
      %v611 = vpop.permute.xlu0 %610
      %612 = vrot.lane.b32.xlu0 %v312, 4
      %v613 = vpop.permute.xlu0 %612
      %614 = vrot.lane.b32.xlu0 %v313, 4
      %v615 = vpop.permute.xlu0 %614
      %616 = vrot.lane.b32.xlu0 %v314, 4
      %v617 = vpop.permute.xlu0 %616
      %618 = vrot.lane.b32.xlu0 %v315, 4
      %v619 = vpop.permute.xlu0 %618
      %620 = vrot.lane.b32.xlu0 %v316, 4
      %v621 = vpop.permute.xlu0 %620
      %622 = vrot.lane.b32.xlu0 %v317, 4
      %v623 = vpop.permute.xlu0 %622
      %684 = vrot.lane.b32.xlu0 %v318, 8
      %v685 = vpop.permute.xlu0 %684
      %686 = vrot.lane.b32.xlu0 %v319, 8
      %v687 = vpop.permute.xlu0 %686
      %688 = vrot.lane.b32.xlu0 %v320, 8
      %v689 = vpop.permute.xlu0 %688
      %690 = vrot.lane.b32.xlu0 %v321, 8
      %v691 = vpop.permute.xlu0 %690
      %692 = vrot.lane.b32.xlu0 %v322, 8
      %v693 = vpop.permute.xlu0 %692
      %694 = vrot.lane.b32.xlu0 %v323, 8
      %v695 = vpop.permute.xlu0 %694
      %696 = vrot.lane.b32.xlu0 %v324, 8
      %v697 = vpop.permute.xlu0 %696
      %698 = vrot.lane.b32.xlu0 %v325, 8
      %v699 = vpop.permute.xlu0 %698
      %700 = vrot.lane.b32.xlu0 %v326, 8
      %v701 = vpop.permute.xlu0 %700
      %702 = vrot.lane.b32.xlu0 %v327, 8
      %v703 = vpop.permute.xlu0 %702
      %704 = vrot.lane.b32.xlu0 %v328, 8
      %v705 = vpop.permute.xlu0 %704
      %706 = vrot.lane.b32.xlu0 %v329, 8
      %v707 = vpop.permute.xlu0 %706
      %708 = vrot.lane.b32.xlu0 %v330, 8
      %v709 = vpop.permute.xlu0 %708
      %710 = vrot.lane.b32.xlu0 %v331, 8
      %v711 = vpop.permute.xlu0 %710
      %712 = vrot.lane.b32.xlu0 %v332, 8
      %v713 = vpop.permute.xlu0 %712
      %714 = vrot.lane.b32.xlu0 %v333, 8
      %v715 = vpop.permute.xlu0 %714
      %716 = vrot.lane.b32.xlu0 %v334, 8
      %v717 = vpop.permute.xlu0 %716
      %718 = vrot.lane.b32.xlu0 %v335, 8
      %v719 = vpop.permute.xlu0 %718
      %720 = vrot.lane.b32.xlu0 %v336, 8
      %v721 = vpop.permute.xlu0 %720
      %722 = vrot.lane.b32.xlu0 %v337, 8
      %v723 = vpop.permute.xlu0 %722
      %724 = vrot.lane.b32.xlu0 %v338, 8
      %v725 = vpop.permute.xlu0 %724
      %726 = vrot.lane.b32.xlu0 %v339, 8
      %v727 = vpop.permute.xlu0 %726
      %728 = vrot.lane.b32.xlu0 %v340, 8
      %v729 = vpop.permute.xlu0 %728
      %730 = vrot.lane.b32.xlu0 %v341, 8
      %v731 = vpop.permute.xlu0 %730
      %732 = vrot.lane.b32.xlu0 %v342, 8
      %v733 = vpop.permute.xlu0 %732
      %734 = vrot.lane.b32.xlu0 %v343, 8
      %v735 = vpop.permute.xlu0 %734
      %736 = vrot.lane.b32.xlu0 %v344, 8
      %v737 = vpop.permute.xlu0 %736
      %738 = vrot.lane.b32.xlu0 %v345, 8
      %v739 = vpop.permute.xlu0 %738
      %740 = vrot.lane.b32.xlu0 %v346, 8
      %v741 = vpop.permute.xlu0 %740
      %742 = vrot.lane.b32.xlu0 %v347, 8
      %v743 = vpop.permute.xlu0 %742
      %804 = vrot.lane.b32.xlu0 %v351, 12
      %v805 = vpop.permute.xlu0 %804
      %806 = vrot.lane.b32.xlu0 %v352, 12
      %v807 = vpop.permute.xlu0 %806
      %808 = vrot.lane.b32.xlu0 %v353, 12
      %v809 = vpop.permute.xlu0 %808
      %810 = vrot.lane.b32.xlu0 %v354, 12
      %v811 = vpop.permute.xlu0 %810
      %812 = vrot.lane.b32.xlu0 %v355, 12
      %v813 = vpop.permute.xlu0 %812
      %814 = vrot.lane.b32.xlu0 %v356, 12
      %v815 = vpop.permute.xlu0 %814
      %816 = vrot.lane.b32.xlu0 %v357, 12
      %v817 = vpop.permute.xlu0 %816
      %818 = vrot.lane.b32.xlu0 %v358, 12
      %v819 = vpop.permute.xlu0 %818
      %820 = vrot.lane.b32.xlu0 %v359, 12
      %v821 = vpop.permute.xlu0 %820
      %822 = vrot.lane.b32.xlu0 %v360, 12
      %v823 = vpop.permute.xlu0 %822
      %824 = vrot.lane.b32.xlu0 %v361, 12
      %v825 = vpop.permute.xlu0 %824
      %826 = vrot.lane.b32.xlu0 %v362, 12
      %v827 = vpop.permute.xlu0 %826
      %828 = vrot.lane.b32.xlu0 %v363, 12
      %v829 = vpop.permute.xlu0 %828
      %830 = vrot.lane.b32.xlu0 %v364, 12
      %v831 = vpop.permute.xlu0 %830
      %832 = vrot.lane.b32.xlu0 %v365, 12
      %v833 = vpop.permute.xlu0 %832
      %834 = vrot.lane.b32.xlu0 %v366, 12
      %v835 = vpop.permute.xlu0 %834
      %836 = vrot.lane.b32.xlu0 %v367, 12
      %v837 = vpop.permute.xlu0 %836
      %838 = vrot.lane.b32.xlu0 %v368, 12
      %v839 = vpop.permute.xlu0 %838
      %840 = vrot.lane.b32.xlu0 %v369, 12
      %v841 = vpop.permute.xlu0 %840
      %842 = vrot.lane.b32.xlu0 %v370, 12
      %v843 = vpop.permute.xlu0 %842
      %844 = vrot.lane.b32.xlu0 %v371, 12
      %v845 = vpop.permute.xlu0 %844
      %846 = vrot.lane.b32.xlu0 %v372, 12
      %v847 = vpop.permute.xlu0 %846
      %848 = vrot.lane.b32.xlu0 %v373, 12
      %v849 = vpop.permute.xlu0 %848
      %850 = vrot.lane.b32.xlu0 %v374, 12
      %v851 = vpop.permute.xlu0 %850
      %852 = vrot.lane.b32.xlu0 %v375, 12
      %v853 = vpop.permute.xlu0 %852
      %854 = vrot.lane.b32.xlu0 %v376, 12
      %v855 = vpop.permute.xlu0 %854
      %856 = vrot.lane.b32.xlu0 %v377, 12
      %v857 = vpop.permute.xlu0 %856
      %858 = vrot.lane.b32.xlu0 %v378, 12
      %v859 = vpop.permute.xlu0 %858
      %860 = vrot.lane.b32.xlu0 %v379, 12
      %v861 = vpop.permute.xlu0 %860
      %862 = vrot.lane.b32.xlu0 %v380, 12
      %v863 = vpop.permute.xlu0 %862
      %924 = vrot.lane.b32.xlu0 %v381, 16
      %v925 = vpop.permute.xlu0 %924
      %926 = vrot.lane.b32.xlu0 %v382, 16
      %v927 = vpop.permute.xlu0 %926
      %928 = vrot.lane.b32.xlu0 %v383, 16
      %v929 = vpop.permute.xlu0 %928
      %930 = vrot.lane.b32.xlu0 %v384, 16
      %v931 = vpop.permute.xlu0 %930
      %932 = vrot.lane.b32.xlu0 %v385, 16
      %v933 = vpop.permute.xlu0 %932
      %934 = vrot.lane.b32.xlu0 %v386, 16
      %v935 = vpop.permute.xlu0 %934
      %936 = vrot.lane.b32.xlu0 %v387, 16
      %v937 = vpop.permute.xlu0 %936
      %938 = vrot.lane.b32.xlu0 %v388, 16
      %v939 = vpop.permute.xlu0 %938
      %940 = vrot.lane.b32.xlu0 %v389, 16
      %v941 = vpop.permute.xlu0 %940
      %942 = vrot.lane.b32.xlu0 %v390, 16
      %v943 = vpop.permute.xlu0 %942
      %944 = vrot.lane.b32.xlu0 %v391, 16
      %v945 = vpop.permute.xlu0 %944
      %946 = vrot.lane.b32.xlu0 %v392, 16
      %v947 = vpop.permute.xlu0 %946
      %948 = vrot.lane.b32.xlu0 %v393, 16
      %v949 = vpop.permute.xlu0 %948
      %950 = vrot.lane.b32.xlu0 %v394, 16
      %v951 = vpop.permute.xlu0 %950
      %952 = vrot.lane.b32.xlu0 %v395, 16
      %v953 = vpop.permute.xlu0 %952
      %954 = vrot.lane.b32.xlu0 %v396, 16
      %v955 = vpop.permute.xlu0 %954
      %956 = vrot.lane.b32.xlu0 %v397, 16
      %v957 = vpop.permute.xlu0 %956
      %958 = vrot.lane.b32.xlu0 %v398, 16
      %v959 = vpop.permute.xlu0 %958
      %960 = vrot.lane.b32.xlu0 %v399, 16
      %v961 = vpop.permute.xlu0 %960
      %962 = vrot.lane.b32.xlu0 %v400, 16
      %v963 = vpop.permute.xlu0 %962
      %964 = vrot.lane.b32.xlu0 %v401, 16
      %v965 = vpop.permute.xlu0 %964
      %966 = vrot.lane.b32.xlu0 %v402, 16
      %v967 = vpop.permute.xlu0 %966
      %968 = vrot.lane.b32.xlu0 %v403, 16
      %v969 = vpop.permute.xlu0 %968
      %970 = vrot.lane.b32.xlu0 %v404, 16
      %v971 = vpop.permute.xlu0 %970
      %972 = vrot.lane.b32.xlu0 %v405, 16
      %v973 = vpop.permute.xlu0 %972
      %974 = vrot.lane.b32.xlu0 %v406, 16
      %v975 = vpop.permute.xlu0 %974
      %976 = vrot.lane.b32.xlu0 %v407, 16
      %v977 = vpop.permute.xlu0 %976
      %978 = vrot.lane.b32.xlu0 %v408, 16
      %v979 = vpop.permute.xlu0 %978
      %980 = vrot.lane.b32.xlu0 %v409, 16
      %v981 = vpop.permute.xlu0 %980
      %982 = vrot.lane.b32.xlu0 %v410, 16
      %v983 = vpop.permute.xlu0 %982
      %1044 = vrot.lane.b32.xlu0 %v411, 20
      %v1045 = vpop.permute.xlu0 %1044
      %1046 = vrot.lane.b32.xlu0 %v412, 20
      %v1047 = vpop.permute.xlu0 %1046
      %1048 = vrot.lane.b32.xlu0 %v413, 20
      %v1049 = vpop.permute.xlu0 %1048
      %1050 = vrot.lane.b32.xlu0 %v414, 20
      %v1051 = vpop.permute.xlu0 %1050
      %1052 = vrot.lane.b32.xlu0 %v415, 20
      %v1053 = vpop.permute.xlu0 %1052
      %1054 = vrot.lane.b32.xlu0 %v416, 20
      %v1055 = vpop.permute.xlu0 %1054
      %1056 = vrot.lane.b32.xlu0 %v417, 20
      %v1057 = vpop.permute.xlu0 %1056
      %1058 = vrot.lane.b32.xlu0 %v418, 20
      %v1059 = vpop.permute.xlu0 %1058
      %1060 = vrot.lane.b32.xlu0 %v419, 20
      %v1061 = vpop.permute.xlu0 %1060
      %1062 = vrot.lane.b32.xlu0 %v420, 20
      %v1063 = vpop.permute.xlu0 %1062
      %1064 = vrot.lane.b32.xlu0 %v421, 20
      %v1065 = vpop.permute.xlu0 %1064
      %1066 = vrot.lane.b32.xlu0 %v422, 20
      %v1067 = vpop.permute.xlu0 %1066
      %1068 = vrot.lane.b32.xlu0 %v423, 20
      %v1069 = vpop.permute.xlu0 %1068
      %1070 = vrot.lane.b32.xlu0 %v424, 20
      %v1071 = vpop.permute.xlu0 %1070
      %1072 = vrot.lane.b32.xlu0 %v425, 20
      %v1073 = vpop.permute.xlu0 %1072
      %1074 = vrot.lane.b32.xlu0 %v426, 20
      %v1075 = vpop.permute.xlu0 %1074
      %1076 = vrot.lane.b32.xlu0 %v427, 20
      %v1077 = vpop.permute.xlu0 %1076
      %1078 = vrot.lane.b32.xlu0 %v428, 20
      %v1079 = vpop.permute.xlu0 %1078
      %1080 = vrot.lane.b32.xlu0 %v429, 20
      %v1081 = vpop.permute.xlu0 %1080
      %1082 = vrot.lane.b32.xlu0 %v430, 20
      %v1083 = vpop.permute.xlu0 %1082
      %1084 = vrot.lane.b32.xlu0 %v431, 20
      %v1085 = vpop.permute.xlu0 %1084
      %1086 = vrot.lane.b32.xlu0 %v432, 20
      %v1087 = vpop.permute.xlu0 %1086
      %1088 = vrot.lane.b32.xlu0 %v433, 20
      %v1089 = vpop.permute.xlu0 %1088
      %1090 = vrot.lane.b32.xlu0 %v434, 20
      %v1091 = vpop.permute.xlu0 %1090
      %1092 = vrot.lane.b32.xlu0 %v435, 20
      %v1093 = vpop.permute.xlu0 %1092
      %1094 = vrot.lane.b32.xlu0 %v436, 20
      %v1095 = vpop.permute.xlu0 %1094
      %1096 = vrot.lane.b32.xlu0 %v437, 20
      %v1097 = vpop.permute.xlu0 %1096
      %1098 = vrot.lane.b32.xlu0 %v438, 20
      %v1099 = vpop.permute.xlu0 %1098
      %1100 = vrot.lane.b32.xlu0 %v439, 20
      %v1101 = vpop.permute.xlu0 %1100
      %1102 = vrot.lane.b32.xlu0 %v440, 20
      %v1103 = vpop.permute.xlu0 %1102
      %1164 = vrot.lane.b32.xlu0 %v444, 24
      %v1165 = vpop.permute.xlu0 %1164
      %1166 = vrot.lane.b32.xlu0 %v445, 24
      %v1167 = vpop.permute.xlu0 %1166
      %1168 = vrot.lane.b32.xlu0 %v446, 24
      %v1169 = vpop.permute.xlu0 %1168
      %1170 = vrot.lane.b32.xlu0 %v447, 24
      %v1171 = vpop.permute.xlu0 %1170
      %1172 = vrot.lane.b32.xlu0 %v448, 24
      %v1173 = vpop.permute.xlu0 %1172
      %1174 = vrot.lane.b32.xlu0 %v449, 24
      %v1175 = vpop.permute.xlu0 %1174
      %1176 = vrot.lane.b32.xlu0 %v450, 24
      %v1177 = vpop.permute.xlu0 %1176
      %1178 = vrot.lane.b32.xlu0 %v451, 24
      %v1179 = vpop.permute.xlu0 %1178
      %1180 = vrot.lane.b32.xlu0 %v452, 24
      %v1181 = vpop.permute.xlu0 %1180
      %1182 = vrot.lane.b32.xlu0 %v453, 24
      %v1183 = vpop.permute.xlu0 %1182
      %1184 = vrot.lane.b32.xlu0 %v454, 24
      %v1185 = vpop.permute.xlu0 %1184
      %1186 = vrot.lane.b32.xlu0 %v455, 24
      %v1187 = vpop.permute.xlu0 %1186
      %1188 = vrot.lane.b32.xlu0 %v456, 24
      %v1189 = vpop.permute.xlu0 %1188
      %1190 = vrot.lane.b32.xlu0 %v457, 24
      %v1191 = vpop.permute.xlu0 %1190
      %1192 = vrot.lane.b32.xlu0 %v458, 24
      %v1193 = vpop.permute.xlu0 %1192
      %1194 = vrot.lane.b32.xlu0 %v459, 24
      %v1195 = vpop.permute.xlu0 %1194
      %1196 = vrot.lane.b32.xlu0 %v460, 24
      %v1197 = vpop.permute.xlu0 %1196
      %1198 = vrot.lane.b32.xlu0 %v461, 24
      %v1199 = vpop.permute.xlu0 %1198
      %1200 = vrot.lane.b32.xlu0 %v462, 24
      %v1201 = vpop.permute.xlu0 %1200
      %1202 = vrot.lane.b32.xlu0 %v463, 24
      %v1203 = vpop.permute.xlu0 %1202
      %1204 = vrot.lane.b32.xlu0 %v464, 24
      %v1205 = vpop.permute.xlu0 %1204
      %1206 = vrot.lane.b32.xlu0 %v465, 24
      %v1207 = vpop.permute.xlu0 %1206
      %1208 = vrot.lane.b32.xlu0 %v466, 24
      %v1209 = vpop.permute.xlu0 %1208
      %1210 = vrot.lane.b32.xlu0 %v467, 24
      %v1211 = vpop.permute.xlu0 %1210
      %1212 = vrot.lane.b32.xlu0 %v468, 24
      %v1213 = vpop.permute.xlu0 %1212
      %1214 = vrot.lane.b32.xlu0 %v469, 24
      %v1215 = vpop.permute.xlu0 %1214
      %1216 = vrot.lane.b32.xlu0 %v470, 24
      %v1217 = vpop.permute.xlu0 %1216
      %1218 = vrot.lane.b32.xlu0 %v471, 24
      %v1219 = vpop.permute.xlu0 %1218
      %1220 = vrot.lane.b32.xlu0 %v472, 24
      %v1221 = vpop.permute.xlu0 %1220
      %1222 = vrot.lane.b32.xlu0 %v473, 24
      %v1223 = vpop.permute.xlu0 %1222
      %1284 = vrot.lane.b32.xlu0 %v474, 28
      %v1285 = vpop.permute.xlu0 %1284
      %1286 = vrot.lane.b32.xlu0 %v475, 28
      %v1287 = vpop.permute.xlu0 %1286
      %1288 = vrot.lane.b32.xlu0 %v476, 28
      %v1289 = vpop.permute.xlu0 %1288
      %1290 = vrot.lane.b32.xlu0 %v477, 28
      %v1291 = vpop.permute.xlu0 %1290
      %1292 = vrot.lane.b32.xlu0 %v478, 28
      %v1293 = vpop.permute.xlu0 %1292
      %1294 = vrot.lane.b32.xlu0 %v479, 28
      %v1295 = vpop.permute.xlu0 %1294
      %1296 = vrot.lane.b32.xlu0 %v480, 28
      %v1297 = vpop.permute.xlu0 %1296
      %1298 = vrot.lane.b32.xlu0 %v481, 28
      %v1299 = vpop.permute.xlu0 %1298
      %1300 = vrot.lane.b32.xlu0 %v482, 28
      %v1301 = vpop.permute.xlu0 %1300
      %1302 = vrot.lane.b32.xlu0 %v483, 28
      %v1303 = vpop.permute.xlu0 %1302
      %1304 = vrot.lane.b32.xlu0 %v484, 28
      %v1305 = vpop.permute.xlu0 %1304
      %1306 = vrot.lane.b32.xlu0 %v485, 28
      %v1307 = vpop.permute.xlu0 %1306
      %1308 = vrot.lane.b32.xlu0 %v486, 28
      %v1309 = vpop.permute.xlu0 %1308
      %1310 = vrot.lane.b32.xlu0 %v487, 28
      %v1311 = vpop.permute.xlu0 %1310
      %1312 = vrot.lane.b32.xlu0 %v488, 28
      %v1313 = vpop.permute.xlu0 %1312
      %1314 = vrot.lane.b32.xlu0 %v489, 28
      %v1315 = vpop.permute.xlu0 %1314
      %1316 = vrot.lane.b32.xlu0 %v490, 28
      %v1317 = vpop.permute.xlu0 %1316
      %1318 = vrot.lane.b32.xlu0 %v491, 28
      %v1319 = vpop.permute.xlu0 %1318
      %1320 = vrot.lane.b32.xlu0 %v492, 28
      %v1321 = vpop.permute.xlu0 %1320
      %1322 = vrot.lane.b32.xlu0 %v493, 28
      %v1323 = vpop.permute.xlu0 %1322
      %1324 = vrot.lane.b32.xlu0 %v494, 28
      %v1325 = vpop.permute.xlu0 %1324
      %1326 = vrot.lane.b32.xlu0 %v495, 28
      %v1327 = vpop.permute.xlu0 %1326
      %1328 = vrot.lane.b32.xlu0 %v496, 28
      %v1329 = vpop.permute.xlu0 %1328
      %1330 = vrot.lane.b32.xlu0 %v497, 28
      %v1331 = vpop.permute.xlu0 %1330
      %1332 = vrot.lane.b32.xlu0 %v498, 28
      %v1333 = vpop.permute.xlu0 %1332
      %1334 = vrot.lane.b32.xlu0 %v499, 28
      %v1335 = vpop.permute.xlu0 %1334
      %1336 = vrot.lane.b32.xlu0 %v500, 28
      %v1337 = vpop.permute.xlu0 %1336
      %1338 = vrot.lane.b32.xlu0 %v501, 28
      %v1339 = vpop.permute.xlu0 %1338
      %1340 = vrot.lane.b32.xlu0 %v502, 28
      %v1341 = vpop.permute.xlu0 %1340
      %1342 = vrot.lane.b32.xlu0 %v503, 28
      %v1343 = vpop.permute.xlu0 %1342
      %1404 = vrot.lane.b32.xlu0 %v504, 32
      %v1405 = vpop.permute.xlu0 %1404
      %1406 = vrot.lane.b32.xlu0 %v505, 32
      %v1407 = vpop.permute.xlu0 %1406
      %1408 = vrot.lane.b32.xlu0 %v506, 32
      %v1409 = vpop.permute.xlu0 %1408
      %1410 = vrot.lane.b32.xlu0 %v507, 32
      %v1411 = vpop.permute.xlu0 %1410
      %1412 = vrot.lane.b32.xlu0 %v508, 32
      %v1413 = vpop.permute.xlu0 %1412
      %1414 = vrot.lane.b32.xlu0 %v509, 32
      %v1415 = vpop.permute.xlu0 %1414
      %1416 = vrot.lane.b32.xlu0 %v510, 32
      %v1417 = vpop.permute.xlu0 %1416
      %1418 = vrot.lane.b32.xlu0 %v511, 32
      %v1419 = vpop.permute.xlu0 %1418
      %1420 = vrot.lane.b32.xlu0 %v512, 32
      %v1421 = vpop.permute.xlu0 %1420
      %1422 = vrot.lane.b32.xlu0 %v513, 32
      %v1423 = vpop.permute.xlu0 %1422
      %1424 = vrot.lane.b32.xlu0 %v514, 32
      %v1425 = vpop.permute.xlu0 %1424
      %1426 = vrot.lane.b32.xlu0 %v515, 32
      %v1427 = vpop.permute.xlu0 %1426
      %1428 = vrot.lane.b32.xlu0 %v516, 32
      %v1429 = vpop.permute.xlu0 %1428
      %1430 = vrot.lane.b32.xlu0 %v517, 32
      %v1431 = vpop.permute.xlu0 %1430
      %1432 = vrot.lane.b32.xlu0 %v518, 32
      %v1433 = vpop.permute.xlu0 %1432
      %1434 = vrot.lane.b32.xlu0 %v519, 32
      %v1435 = vpop.permute.xlu0 %1434
      %1436 = vrot.lane.b32.xlu0 %v520, 32
      %v1437 = vpop.permute.xlu0 %1436
      %1438 = vrot.lane.b32.xlu0 %v521, 32
      %v1439 = vpop.permute.xlu0 %1438
      %1440 = vrot.lane.b32.xlu0 %v522, 32
      %v1441 = vpop.permute.xlu0 %1440
      %1442 = vrot.lane.b32.xlu0 %v523, 32
      %v1443 = vpop.permute.xlu0 %1442
      %1444 = vrot.lane.b32.xlu0 %v524, 32
      %v1445 = vpop.permute.xlu0 %1444
      %1446 = vrot.lane.b32.xlu0 %v525, 32
      %v1447 = vpop.permute.xlu0 %1446
      %1448 = vrot.lane.b32.xlu0 %v526, 32
      %v1449 = vpop.permute.xlu0 %1448
      %1450 = vrot.lane.b32.xlu0 %v527, 32
      %v1451 = vpop.permute.xlu0 %1450
      %1452 = vrot.lane.b32.xlu0 %v528, 32
      %v1453 = vpop.permute.xlu0 %1452
      %1454 = vrot.lane.b32.xlu0 %v529, 32
      %v1455 = vpop.permute.xlu0 %1454
      %1456 = vrot.lane.b32.xlu0 %v530, 32
      %v1457 = vpop.permute.xlu0 %1456
      %1458 = vrot.lane.b32.xlu0 %v531, 32
      %v1459 = vpop.permute.xlu0 %1458
      %1460 = vrot.lane.b32.xlu0 %v532, 32
      %v1461 = vpop.permute.xlu0 %1460
      %1462 = vrot.lane.b32.xlu0 %v533, 32
      %v1463 = vpop.permute.xlu0 %1462
      %vm1494 = vcmask 31744
      %v1495 = vsel %vm1494, %v258, %v565
      %v1496 = vsel %vm1494, %v259, %v567
      %v1497 = vsel %vm1494, %v260, %v569
      %v1498 = vsel %vm1494, %v261, %v571
      %v1499 = vsel %vm1494, %v262, %v573
      %v1500 = vsel %vm1494, %v263, %v575
      %v1501 = vsel %vm1494, %v264, %v577
      %v1502 = vsel %vm1494, %v265, %v579
      %v1503 = vsel %vm1494, %v266, %v581
      %v1504 = vsel %vm1494, %v267, %v583
      %v1505 = vsel %vm1494, %v268, %v585
      %v1506 = vsel %vm1494, %v269, %v587
      %v1507 = vsel %vm1494, %v270, %v589
      %v1508 = vsel %vm1494, %v271, %v591
      %v1509 = vsel %vm1494, %v272, %v593
      %v1510 = vsel %vm1494, %v273, %v595
      %v1511 = vsel %vm1494, %v274, %v597
      %v1512 = vsel %vm1494, %v275, %v599
      %v1513 = vsel %vm1494, %v276, %v601
      %v1514 = vsel %vm1494, %v277, %v603
      %v1515 = vsel %vm1494, %v278, %v605
      %v1516 = vsel %vm1494, %v279, %v607
      %v1517 = vsel %vm1494, %v280, %v609
      %v1518 = vsel %vm1494, %v281, %v611
      %v1519 = vsel %vm1494, %v282, %v613
      %v1520 = vsel %vm1494, %v283, %v615
      %v1521 = vsel %vm1494, %v284, %v617
      %v1522 = vsel %vm1494, %v285, %v619
      %v1523 = vsel %vm1494, %v286, %v621
      %v1524 = vsel %vm1494, %v287, %v623
      %vm1525 = vcmask 64512
      %v1526 = vsel %vm1525, %v1495, %v685
      %v1527 = vsel %vm1525, %v1496, %v687
      %v1528 = vsel %vm1525, %v1497, %v689
      %v1529 = vsel %vm1525, %v1498, %v691
      %v1530 = vsel %vm1525, %v1499, %v693
      %v1531 = vsel %vm1525, %v1500, %v695
      %v1532 = vsel %vm1525, %v1501, %v697
      %v1533 = vsel %vm1525, %v1502, %v699
      %v1534 = vsel %vm1525, %v1503, %v701
      %v1535 = vsel %vm1525, %v1504, %v703
      %v1536 = vsel %vm1525, %v1505, %v705
      %v1537 = vsel %vm1525, %v1506, %v707
      %v1538 = vsel %vm1525, %v1507, %v709
      %v1539 = vsel %vm1525, %v1508, %v711
      %v1540 = vsel %vm1525, %v1509, %v713
      %v1541 = vsel %vm1525, %v1510, %v715
      %v1542 = vsel %vm1525, %v1511, %v717
      %v1543 = vsel %vm1525, %v1512, %v719
      %v1544 = vsel %vm1525, %v1513, %v721
      %v1545 = vsel %vm1525, %v1514, %v723
      %v1546 = vsel %vm1525, %v1515, %v725
      %v1547 = vsel %vm1525, %v1516, %v727
      %v1548 = vsel %vm1525, %v1517, %v729
      %v1549 = vsel %vm1525, %v1518, %v731
      %v1550 = vsel %vm1525, %v1519, %v733
      %v1551 = vsel %vm1525, %v1520, %v735
      %v1552 = vsel %vm1525, %v1521, %v737
      %v1553 = vsel %vm1525, %v1522, %v739
      %v1554 = vsel %vm1525, %v1523, %v741
      %v1555 = vsel %vm1525, %v1524, %v743
      %vm1556 = vcmask 97280
      %v1557 = vsel %vm1556, %v1526, %v805
      %v1558 = vsel %vm1556, %v1527, %v807
      %v1559 = vsel %vm1556, %v1528, %v809
      %v1560 = vsel %vm1556, %v1529, %v811
      %v1561 = vsel %vm1556, %v1530, %v813
      %v1562 = vsel %vm1556, %v1531, %v815
      %v1563 = vsel %vm1556, %v1532, %v817
      %v1564 = vsel %vm1556, %v1533, %v819
      %v1565 = vsel %vm1556, %v1534, %v821
      %v1566 = vsel %vm1556, %v1535, %v823
      %v1567 = vsel %vm1556, %v1536, %v825
      %v1568 = vsel %vm1556, %v1537, %v827
      %v1569 = vsel %vm1556, %v1538, %v829
      %v1570 = vsel %vm1556, %v1539, %v831
      %v1571 = vsel %vm1556, %v1540, %v833
      %v1572 = vsel %vm1556, %v1541, %v835
      %v1573 = vsel %vm1556, %v1542, %v837
      %v1574 = vsel %vm1556, %v1543, %v839
      %v1575 = vsel %vm1556, %v1544, %v841
      %v1576 = vsel %vm1556, %v1545, %v843
      %v1577 = vsel %vm1556, %v1546, %v845
      %v1578 = vsel %vm1556, %v1547, %v847
      %v1579 = vsel %vm1556, %v1548, %v849
      %v1580 = vsel %vm1556, %v1549, %v851
      %v1581 = vsel %vm1556, %v1550, %v853
      %v1582 = vsel %vm1556, %v1551, %v855
      %v1583 = vsel %vm1556, %v1552, %v857
      %v1584 = vsel %vm1556, %v1553, %v859
      %v1585 = vsel %vm1556, %v1554, %v861
      %v1586 = vsel %vm1556, %v1555, %v863
      %vm1587 = vcmask 130048
      %v1588 = vsel %vm1587, %v1557, %v925
      %v1589 = vsel %vm1587, %v1558, %v927
      %v1590 = vsel %vm1587, %v1559, %v929
      %v1591 = vsel %vm1587, %v1560, %v931
      %v1592 = vsel %vm1587, %v1561, %v933
      %v1593 = vsel %vm1587, %v1562, %v935
      %v1594 = vsel %vm1587, %v1563, %v937
      %v1595 = vsel %vm1587, %v1564, %v939
      %v1596 = vsel %vm1587, %v1565, %v941
      %v1597 = vsel %vm1587, %v1566, %v943
      %v1598 = vsel %vm1587, %v1567, %v945
      %v1599 = vsel %vm1587, %v1568, %v947
      %v1600 = vsel %vm1587, %v1569, %v949
      %v1601 = vsel %vm1587, %v1570, %v951
      %v1602 = vsel %vm1587, %v1571, %v953
      %v1603 = vsel %vm1587, %v1572, %v955
      %v1604 = vsel %vm1587, %v1573, %v957
      %v1605 = vsel %vm1587, %v1574, %v959
      %v1606 = vsel %vm1587, %v1575, %v961
      %v1607 = vsel %vm1587, %v1576, %v963
      %v1608 = vsel %vm1587, %v1577, %v965
      %v1609 = vsel %vm1587, %v1578, %v967
      %v1610 = vsel %vm1587, %v1579, %v969
      %v1611 = vsel %vm1587, %v1580, %v971
      %v1612 = vsel %vm1587, %v1581, %v973
      %v1613 = vsel %vm1587, %v1582, %v975
      %v1614 = vsel %vm1587, %v1583, %v977
      %v1615 = vsel %vm1587, %v1584, %v979
      %v1616 = vsel %vm1587, %v1585, %v981
      %v1617 = vsel %vm1587, %v1586, %v983
      %vm1618 = vcmask 162816
      %v1619 = vsel %vm1618, %v1588, %v1045
      %v1620 = vsel %vm1618, %v1589, %v1047
      %v1621 = vsel %vm1618, %v1590, %v1049
      %v1622 = vsel %vm1618, %v1591, %v1051
      %v1623 = vsel %vm1618, %v1592, %v1053
      %v1624 = vsel %vm1618, %v1593, %v1055
      %v1625 = vsel %vm1618, %v1594, %v1057
      %v1626 = vsel %vm1618, %v1595, %v1059
      %v1627 = vsel %vm1618, %v1596, %v1061
      %v1628 = vsel %vm1618, %v1597, %v1063
      %v1629 = vsel %vm1618, %v1598, %v1065
      %v1630 = vsel %vm1618, %v1599, %v1067
      %v1631 = vsel %vm1618, %v1600, %v1069
      %v1632 = vsel %vm1618, %v1601, %v1071
      %v1633 = vsel %vm1618, %v1602, %v1073
      %v1634 = vsel %vm1618, %v1603, %v1075
      %v1635 = vsel %vm1618, %v1604, %v1077
      %v1636 = vsel %vm1618, %v1605, %v1079
      %v1637 = vsel %vm1618, %v1606, %v1081
      %v1638 = vsel %vm1618, %v1607, %v1083
      %v1639 = vsel %vm1618, %v1608, %v1085
      %v1640 = vsel %vm1618, %v1609, %v1087
      %v1641 = vsel %vm1618, %v1610, %v1089
      %v1642 = vsel %vm1618, %v1611, %v1091
      %v1643 = vsel %vm1618, %v1612, %v1093
      %v1644 = vsel %vm1618, %v1613, %v1095
      %v1645 = vsel %vm1618, %v1614, %v1097
      %v1646 = vsel %vm1618, %v1615, %v1099
      %v1647 = vsel %vm1618, %v1616, %v1101
      %v1648 = vsel %vm1618, %v1617, %v1103
      %vm1649 = vcmask 195584
      %v1650 = vsel %vm1649, %v1619, %v1165
      %v1651 = vsel %vm1649, %v1620, %v1167
      %v1652 = vsel %vm1649, %v1621, %v1169
      %v1653 = vsel %vm1649, %v1622, %v1171
      %v1654 = vsel %vm1649, %v1623, %v1173
      %v1655 = vsel %vm1649, %v1624, %v1175
      %v1656 = vsel %vm1649, %v1625, %v1177
      %v1657 = vsel %vm1649, %v1626, %v1179
      %v1658 = vsel %vm1649, %v1627, %v1181
      %v1659 = vsel %vm1649, %v1628, %v1183
      %v1660 = vsel %vm1649, %v1629, %v1185
      %v1661 = vsel %vm1649, %v1630, %v1187
      %v1662 = vsel %vm1649, %v1631, %v1189
      %v1663 = vsel %vm1649, %v1632, %v1191
      %v1664 = vsel %vm1649, %v1633, %v1193
      %v1665 = vsel %vm1649, %v1634, %v1195
      %v1666 = vsel %vm1649, %v1635, %v1197
      %v1667 = vsel %vm1649, %v1636, %v1199
      %v1668 = vsel %vm1649, %v1637, %v1201
      %v1669 = vsel %vm1649, %v1638, %v1203
      %v1670 = vsel %vm1649, %v1639, %v1205
      %v1671 = vsel %vm1649, %v1640, %v1207
      %v1672 = vsel %vm1649, %v1641, %v1209
      %v1673 = vsel %vm1649, %v1642, %v1211
      %v1674 = vsel %vm1649, %v1643, %v1213
      %v1675 = vsel %vm1649, %v1644, %v1215
      %v1676 = vsel %vm1649, %v1645, %v1217
      %v1677 = vsel %vm1649, %v1646, %v1219
      %v1678 = vsel %vm1649, %v1647, %v1221
      %v1679 = vsel %vm1649, %v1648, %v1223
      %vm1680 = vcmask 228352
      %v1681 = vsel %vm1680, %v1650, %v1285
      %v1682 = vsel %vm1680, %v1651, %v1287
      %v1683 = vsel %vm1680, %v1652, %v1289
      %v1684 = vsel %vm1680, %v1653, %v1291
      %v1685 = vsel %vm1680, %v1654, %v1293
      %v1686 = vsel %vm1680, %v1655, %v1295
      %v1687 = vsel %vm1680, %v1656, %v1297
      %v1688 = vsel %vm1680, %v1657, %v1299
      %v1689 = vsel %vm1680, %v1658, %v1301
      %v1690 = vsel %vm1680, %v1659, %v1303
      %v1691 = vsel %vm1680, %v1660, %v1305
      %v1692 = vsel %vm1680, %v1661, %v1307
      %v1693 = vsel %vm1680, %v1662, %v1309
      %v1694 = vsel %vm1680, %v1663, %v1311
      %v1695 = vsel %vm1680, %v1664, %v1313
      %v1696 = vsel %vm1680, %v1665, %v1315
      %v1697 = vsel %vm1680, %v1666, %v1317
      %v1698 = vsel %vm1680, %v1667, %v1319
      %v1699 = vsel %vm1680, %v1668, %v1321
      %v1700 = vsel %vm1680, %v1669, %v1323
      %v1701 = vsel %vm1680, %v1670, %v1325
      %v1702 = vsel %vm1680, %v1671, %v1327
      %v1703 = vsel %vm1680, %v1672, %v1329
      %v1704 = vsel %vm1680, %v1673, %v1331
      %v1705 = vsel %vm1680, %v1674, %v1333
      %v1706 = vsel %vm1680, %v1675, %v1335
      %v1707 = vsel %vm1680, %v1676, %v1337
      %v1708 = vsel %vm1680, %v1677, %v1339
      %v1709 = vsel %vm1680, %v1678, %v1341
      %v1710 = vsel %vm1680, %v1679, %v1343
      %vm1711 = vcmask 261120
      %v1712 = vsel %vm1711, %v1681, %v1405
      %v1713 = vsel %vm1711, %v1682, %v1407
      %v1714 = vsel %vm1711, %v1683, %v1409
      %v1715 = vsel %vm1711, %v1684, %v1411
      %v1716 = vsel %vm1711, %v1685, %v1413
      %v1717 = vsel %vm1711, %v1686, %v1415
      %v1718 = vsel %vm1711, %v1687, %v1417
      %v1719 = vsel %vm1711, %v1688, %v1419
      %v1720 = vsel %vm1711, %v1689, %v1421
      %v1721 = vsel %vm1711, %v1690, %v1423
      %v1722 = vsel %vm1711, %v1691, %v1425
      %v1723 = vsel %vm1711, %v1692, %v1427
      %v1724 = vsel %vm1711, %v1693, %v1429
      %v1725 = vsel %vm1711, %v1694, %v1431
      %v1726 = vsel %vm1711, %v1695, %v1433
      %v1727 = vsel %vm1711, %v1696, %v1435
      %v1728 = vsel %vm1711, %v1697, %v1437
      %v1729 = vsel %vm1711, %v1698, %v1439
      %v1730 = vsel %vm1711, %v1699, %v1441
      %v1731 = vsel %vm1711, %v1700, %v1443
      %v1732 = vsel %vm1711, %v1701, %v1445
      %v1733 = vsel %vm1711, %v1702, %v1447
      %v1734 = vsel %vm1711, %v1703, %v1449
      %v1735 = vsel %vm1711, %v1704, %v1451
      %v1736 = vsel %vm1711, %v1705, %v1453
      %v1737 = vsel %vm1711, %v1706, %v1455
      %v1738 = vsel %vm1711, %v1707, %v1457
      %v1739 = vsel %vm1711, %v1708, %v1459
      %v1740 = vsel %vm1711, %v1709, %v1461
      %v1741 = vsel %vm1711, %v1710, %v1463
      %v1742 = vld [vmem:[%s2] sm:$0x1]
      %v1744 = vlaneseq
      %v1745 = vshrl.u32 %v1744, 7
      %v1746 = vsub.s32 0, %v1745
      %v1747 = vrot.slane %v1742, %v1746
      %v1778 = vcombine.high %v1712, %v1712
      %v1780 = vunpack.c.l.s4 1983009808
      %v1781 = vunpack.c.0.s8 %v1780
      %v1782 = vlaneseq
      %v1783 = vshrl.u32 %v1782, 7
      %v1784 = vsub.s32 %v1781, %v1783
      %v1785 = vrot.slane %v1712, %v1784
      %v1787 = vunpack.c.l.s4 1983009808
      %v1788 = vunpack.c.0.s8 %v1787
      %v1789 = vlaneseq
      %v1790 = vshrl.u32 %v1789, 7
      %v1791 = vsub.s32 %v1788, %v1790
      %v1792 = vrot.slane %v1778, %v1791
      %v1793 = vcombine.high %v1785, %v1785
      %v1794 = vcombine.high %v1792, %v1792
      %v1795 = vcombine.high %v1713, %v1713
      %v1797 = vunpack.c.l.s4 1983009808
      %v1798 = vunpack.c.0.s8 %v1797
      %v1799 = vlaneseq
      %v1800 = vshrl.u32 %v1799, 7
      %v1801 = vsub.s32 %v1798, %v1800
      %v1802 = vrot.slane %v1713, %v1801
      %v1804 = vunpack.c.l.s4 1983009808
      %v1805 = vunpack.c.0.s8 %v1804
      %v1806 = vlaneseq
      %v1807 = vshrl.u32 %v1806, 7
      %v1808 = vsub.s32 %v1805, %v1807
      %v1809 = vrot.slane %v1795, %v1808
      %v1810 = vcombine.high %v1802, %v1802
      %v1811 = vcombine.high %v1809, %v1809
      %v1813 = vunpack.c.l.s4 1983009808
      %v1814 = vunpack.c.0.s8 %v1813
      %v1815 = vlaneseq
      %v1816 = vshrl.u32 %v1815, 7
      %v1817 = vsub.s32 %v1814, %v1816
      %v1818 = vrot.slane %v1714, %v1817
      %v1819 = vcombine.high %v1715, %v1715
      %v1821 = vunpack.c.l.s4 1983009808
      %v1822 = vunpack.c.0.s8 %v1821
      %v1823 = vlaneseq
      %v1824 = vshrl.u32 %v1823, 7
      %v1825 = vsub.s32 %v1822, %v1824
      %v1826 = vrot.slane %v1715, %v1825
      %v1828 = vunpack.c.l.s4 1983009808
      %v1829 = vunpack.c.0.s8 %v1828
      %v1830 = vlaneseq
      %v1831 = vshrl.u32 %v1830, 7
      %v1832 = vsub.s32 %v1829, %v1831
      %v1833 = vrot.slane %v1819, %v1832
      %v1834 = vcombine.high %v1826, %v1826
      %v1835 = vcombine.high %v1833, %v1833
      %v1836 = vcombine.high %v1716, %v1716
      %v1838 = vunpack.c.l.s4 1983009808
      %v1839 = vunpack.c.0.s8 %v1838
      %v1840 = vlaneseq
      %v1841 = vshrl.u32 %v1840, 7
      %v1842 = vsub.s32 %v1839, %v1841
      %v1843 = vrot.slane %v1716, %v1842
      %v1845 = vunpack.c.l.s4 1983009808
      %v1846 = vunpack.c.0.s8 %v1845
      %v1847 = vlaneseq
      %v1848 = vshrl.u32 %v1847, 7
      %v1849 = vsub.s32 %v1846, %v1848
      %v1850 = vrot.slane %v1836, %v1849
      %v1851 = vcombine.high %v1843, %v1843
      %v1852 = vcombine.high %v1850, %v1850
      %v1854 = vunpack.c.l.s4 1983009808
      %v1855 = vunpack.c.0.s8 %v1854
      %v1856 = vlaneseq
      %v1857 = vshrl.u32 %v1856, 7
      %v1858 = vsub.s32 %v1855, %v1857
      %v1859 = vrot.slane %v1717, %v1858
      %v1860 = vcombine.high %v1718, %v1718
      %v1862 = vunpack.c.l.s4 1983009808
      %v1863 = vunpack.c.0.s8 %v1862
      %v1864 = vlaneseq
      %v1865 = vshrl.u32 %v1864, 7
      %v1866 = vsub.s32 %v1863, %v1865
      %v1867 = vrot.slane %v1718, %v1866
      %v1869 = vunpack.c.l.s4 1983009808
      %v1870 = vunpack.c.0.s8 %v1869
      %v1871 = vlaneseq
      %v1872 = vshrl.u32 %v1871, 7
      %v1873 = vsub.s32 %v1870, %v1872
      %v1874 = vrot.slane %v1860, %v1873
      %v1875 = vcombine.high %v1867, %v1867
      %v1876 = vcombine.high %v1874, %v1874
      %v1877 = vcombine.high %v1719, %v1719
      %v1879 = vunpack.c.l.s4 1983009808
      %v1880 = vunpack.c.0.s8 %v1879
      %v1881 = vlaneseq
      %v1882 = vshrl.u32 %v1881, 7
      %v1883 = vsub.s32 %v1880, %v1882
      %v1884 = vrot.slane %v1719, %v1883
      %v1886 = vunpack.c.l.s4 1983009808
      %v1887 = vunpack.c.0.s8 %v1886
      %v1888 = vlaneseq
      %v1889 = vshrl.u32 %v1888, 7
      %v1890 = vsub.s32 %v1887, %v1889
      %v1891 = vrot.slane %v1877, %v1890
      %v1892 = vcombine.high %v1884, %v1884
      %v1893 = vcombine.high %v1891, %v1891
      %v1895 = vunpack.c.l.s4 1983009808
      %v1896 = vunpack.c.0.s8 %v1895
      %v1897 = vlaneseq
      %v1898 = vshrl.u32 %v1897, 7
      %v1899 = vsub.s32 %v1896, %v1898
      %v1900 = vrot.slane %v1720, %v1899
      %v1901 = vcombine.high %v1721, %v1721
      %v1903 = vunpack.c.l.s4 1983009808
      %v1904 = vunpack.c.0.s8 %v1903
      %v1905 = vlaneseq
      %v1906 = vshrl.u32 %v1905, 7
      %v1907 = vsub.s32 %v1904, %v1906
      %v1908 = vrot.slane %v1721, %v1907
      %v1910 = vunpack.c.l.s4 1983009808
      %v1911 = vunpack.c.0.s8 %v1910
      %v1912 = vlaneseq
      %v1913 = vshrl.u32 %v1912, 7
      %v1914 = vsub.s32 %v1911, %v1913
      %v1915 = vrot.slane %v1901, %v1914
      %v1916 = vcombine.high %v1908, %v1908
      %v1917 = vcombine.high %v1915, %v1915
      %v1918 = vcombine.high %v1722, %v1722
      %v1920 = vunpack.c.l.s4 1983009808
      %v1921 = vunpack.c.0.s8 %v1920
      %v1922 = vlaneseq
      %v1923 = vshrl.u32 %v1922, 7
      %v1924 = vsub.s32 %v1921, %v1923
      %v1925 = vrot.slane %v1722, %v1924
      %v1927 = vunpack.c.l.s4 1983009808
      %v1928 = vunpack.c.0.s8 %v1927
      %v1929 = vlaneseq
      %v1930 = vshrl.u32 %v1929, 7
      %v1931 = vsub.s32 %v1928, %v1930
      %v1932 = vrot.slane %v1918, %v1931
      %v1933 = vcombine.high %v1925, %v1925
      %v1934 = vcombine.high %v1932, %v1932
      %v1936 = vunpack.c.l.s4 1983009808
      %v1937 = vunpack.c.0.s8 %v1936
      %v1938 = vlaneseq
      %v1939 = vshrl.u32 %v1938, 7
      %v1940 = vsub.s32 %v1937, %v1939
      %v1941 = vrot.slane %v1723, %v1940
      %v1942 = vcombine.high %v1724, %v1724
      %v1944 = vunpack.c.l.s4 1983009808
      %v1945 = vunpack.c.0.s8 %v1944
      %v1946 = vlaneseq
      %v1947 = vshrl.u32 %v1946, 7
      %v1948 = vsub.s32 %v1945, %v1947
      %v1949 = vrot.slane %v1724, %v1948
      %v1951 = vunpack.c.l.s4 1983009808
      %v1952 = vunpack.c.0.s8 %v1951
      %v1953 = vlaneseq
      %v1954 = vshrl.u32 %v1953, 7
      %v1955 = vsub.s32 %v1952, %v1954
      %v1956 = vrot.slane %v1942, %v1955
      %v1957 = vcombine.high %v1949, %v1949
      %v1958 = vcombine.high %v1956, %v1956
      %v1959 = vcombine.high %v1725, %v1725
      %v1961 = vunpack.c.l.s4 1983009808
      %v1962 = vunpack.c.0.s8 %v1961
      %v1963 = vlaneseq
      %v1964 = vshrl.u32 %v1963, 7
      %v1965 = vsub.s32 %v1962, %v1964
      %v1966 = vrot.slane %v1725, %v1965
      %v1968 = vunpack.c.l.s4 1983009808
      %v1969 = vunpack.c.0.s8 %v1968
      %v1970 = vlaneseq
      %v1971 = vshrl.u32 %v1970, 7
      %v1972 = vsub.s32 %v1969, %v1971
      %v1973 = vrot.slane %v1959, %v1972
      %v1974 = vcombine.high %v1966, %v1966
      %v1975 = vcombine.high %v1973, %v1973
      %v1977 = vunpack.c.l.s4 1983009808
      %v1978 = vunpack.c.0.s8 %v1977
      %v1979 = vlaneseq
      %v1980 = vshrl.u32 %v1979, 7
      %v1981 = vsub.s32 %v1978, %v1980
      %v1982 = vrot.slane %v1726, %v1981
      %v1983 = vcombine.high %v1727, %v1727
      %v1985 = vunpack.c.l.s4 1983009808
      %v1986 = vunpack.c.0.s8 %v1985
      %v1987 = vlaneseq
      %v1988 = vshrl.u32 %v1987, 7
      %v1989 = vsub.s32 %v1986, %v1988
      %v1990 = vrot.slane %v1727, %v1989
      %v1992 = vunpack.c.l.s4 1983009808
      %v1993 = vunpack.c.0.s8 %v1992
      %v1994 = vlaneseq
      %v1995 = vshrl.u32 %v1994, 7
      %v1996 = vsub.s32 %v1993, %v1995
      %v1997 = vrot.slane %v1983, %v1996
      %v1998 = vcombine.high %v1990, %v1990
      %v1999 = vcombine.high %v1997, %v1997
      %v2000 = vcombine.high %v1728, %v1728
      %v2002 = vunpack.c.l.s4 1983009808
      %v2003 = vunpack.c.0.s8 %v2002
      %v2004 = vlaneseq
      %v2005 = vshrl.u32 %v2004, 7
      %v2006 = vsub.s32 %v2003, %v2005
      %v2007 = vrot.slane %v1728, %v2006
      %v2009 = vunpack.c.l.s4 1983009808
      %v2010 = vunpack.c.0.s8 %v2009
      %v2011 = vlaneseq
      %v2012 = vshrl.u32 %v2011, 7
      %v2013 = vsub.s32 %v2010, %v2012
      %v2014 = vrot.slane %v2000, %v2013
      %v2015 = vcombine.high %v2007, %v2007
      %v2016 = vcombine.high %v2014, %v2014
      %v2018 = vunpack.c.l.s4 1983009808
      %v2019 = vunpack.c.0.s8 %v2018
      %v2020 = vlaneseq
      %v2021 = vshrl.u32 %v2020, 7
      %v2022 = vsub.s32 %v2019, %v2021
      %v2023 = vrot.slane %v1729, %v2022
      %v2024 = vcombine.high %v1730, %v1730
      %v2026 = vunpack.c.l.s4 1983009808
      %v2027 = vunpack.c.0.s8 %v2026
      %v2028 = vlaneseq
      %v2029 = vshrl.u32 %v2028, 7
      %v2030 = vsub.s32 %v2027, %v2029
      %v2031 = vrot.slane %v1730, %v2030
      %v2033 = vunpack.c.l.s4 1983009808
      %v2034 = vunpack.c.0.s8 %v2033
      %v2035 = vlaneseq
      %v2036 = vshrl.u32 %v2035, 7
      %v2037 = vsub.s32 %v2034, %v2036
      %v2038 = vrot.slane %v2024, %v2037
      %v2039 = vcombine.high %v2031, %v2031
      %v2040 = vcombine.high %v2038, %v2038
      %v2041 = vcombine.high %v1731, %v1731
      %v2043 = vunpack.c.l.s4 1983009808
      %v2044 = vunpack.c.0.s8 %v2043
      %v2045 = vlaneseq
      %v2046 = vshrl.u32 %v2045, 7
      %v2047 = vsub.s32 %v2044, %v2046
      %v2048 = vrot.slane %v1731, %v2047
      %v2050 = vunpack.c.l.s4 1983009808
      %v2051 = vunpack.c.0.s8 %v2050
      %v2052 = vlaneseq
      %v2053 = vshrl.u32 %v2052, 7
      %v2054 = vsub.s32 %v2051, %v2053
      %v2055 = vrot.slane %v2041, %v2054
      %v2056 = vcombine.high %v2048, %v2048
      %v2057 = vcombine.high %v2055, %v2055
      %v2059 = vunpack.c.l.s4 1983009808
      %v2060 = vunpack.c.0.s8 %v2059
      %v2061 = vlaneseq
      %v2062 = vshrl.u32 %v2061, 7
      %v2063 = vsub.s32 %v2060, %v2062
      %v2064 = vrot.slane %v1732, %v2063
      %v2065 = vcombine.high %v1733, %v1733
      %v2067 = vunpack.c.l.s4 1983009808
      %v2068 = vunpack.c.0.s8 %v2067
      %v2069 = vlaneseq
      %v2070 = vshrl.u32 %v2069, 7
      %v2071 = vsub.s32 %v2068, %v2070
      %v2072 = vrot.slane %v1733, %v2071
      %v2074 = vunpack.c.l.s4 1983009808
      %v2075 = vunpack.c.0.s8 %v2074
      %v2076 = vlaneseq
      %v2077 = vshrl.u32 %v2076, 7
      %v2078 = vsub.s32 %v2075, %v2077
      %v2079 = vrot.slane %v2065, %v2078
      %v2080 = vcombine.high %v2072, %v2072
      %v2081 = vcombine.high %v2079, %v2079
      %v2082 = vcombine.high %v1734, %v1734
      %v2084 = vunpack.c.l.s4 1983009808
      %v2085 = vunpack.c.0.s8 %v2084
      %v2086 = vlaneseq
      %v2087 = vshrl.u32 %v2086, 7
      %v2088 = vsub.s32 %v2085, %v2087
      %v2089 = vrot.slane %v1734, %v2088
      %v2091 = vunpack.c.l.s4 1983009808
      %v2092 = vunpack.c.0.s8 %v2091
      %v2093 = vlaneseq
      %v2094 = vshrl.u32 %v2093, 7
      %v2095 = vsub.s32 %v2092, %v2094
      %v2096 = vrot.slane %v2082, %v2095
      %v2097 = vcombine.high %v2089, %v2089
      %v2098 = vcombine.high %v2096, %v2096
      %v2100 = vunpack.c.l.s4 1983009808
      %v2101 = vunpack.c.0.s8 %v2100
      %v2102 = vlaneseq
      %v2103 = vshrl.u32 %v2102, 7
      %v2104 = vsub.s32 %v2101, %v2103
      %v2105 = vrot.slane %v1735, %v2104
      %v2106 = vcombine.high %v1736, %v1736
      %v2108 = vunpack.c.l.s4 1983009808
      %v2109 = vunpack.c.0.s8 %v2108
      %v2110 = vlaneseq
      %v2111 = vshrl.u32 %v2110, 7
      %v2112 = vsub.s32 %v2109, %v2111
      %v2113 = vrot.slane %v1736, %v2112
      %v2115 = vunpack.c.l.s4 1983009808
      %v2116 = vunpack.c.0.s8 %v2115
      %v2117 = vlaneseq
      %v2118 = vshrl.u32 %v2117, 7
      %v2119 = vsub.s32 %v2116, %v2118
      %v2120 = vrot.slane %v2106, %v2119
      %v2121 = vcombine.high %v2113, %v2113
      %v2122 = vcombine.high %v2120, %v2120
      %v2123 = vcombine.high %v1737, %v1737
      %v2125 = vunpack.c.l.s4 1983009808
      %v2126 = vunpack.c.0.s8 %v2125
      %v2127 = vlaneseq
      %v2128 = vshrl.u32 %v2127, 7
      %v2129 = vsub.s32 %v2126, %v2128
      %v2130 = vrot.slane %v1737, %v2129
      %v2132 = vunpack.c.l.s4 1983009808
      %v2133 = vunpack.c.0.s8 %v2132
      %v2134 = vlaneseq
      %v2135 = vshrl.u32 %v2134, 7
      %v2136 = vsub.s32 %v2133, %v2135
      %v2137 = vrot.slane %v2123, %v2136
      %v2138 = vcombine.high %v2130, %v2130
      %v2139 = vcombine.high %v2137, %v2137
      %v2141 = vunpack.c.l.s4 1983009808
      %v2142 = vunpack.c.0.s8 %v2141
      %v2143 = vlaneseq
      %v2144 = vshrl.u32 %v2143, 7
      %v2145 = vsub.s32 %v2142, %v2144
      %v2146 = vrot.slane %v1738, %v2145
      %v2147 = vcombine.high %v1739, %v1739
      %v2149 = vunpack.c.l.s4 1983009808
      %v2150 = vunpack.c.0.s8 %v2149
      %v2151 = vlaneseq
      %v2152 = vshrl.u32 %v2151, 7
      %v2153 = vsub.s32 %v2150, %v2152
      %v2154 = vrot.slane %v1739, %v2153
      %v2156 = vunpack.c.l.s4 1983009808
      %v2157 = vunpack.c.0.s8 %v2156
      %v2158 = vlaneseq
      %v2159 = vshrl.u32 %v2158, 7
      %v2160 = vsub.s32 %v2157, %v2159
      %v2161 = vrot.slane %v2147, %v2160
      %v2162 = vcombine.high %v2154, %v2154
      %v2163 = vcombine.high %v2161, %v2161
      %v2164 = vcombine.high %v1740, %v1740
      %v2166 = vunpack.c.l.s4 1983009808
      %v2167 = vunpack.c.0.s8 %v2166
      %v2168 = vlaneseq
      %v2169 = vshrl.u32 %v2168, 7
      %v2170 = vsub.s32 %v2167, %v2169
      %v2171 = vrot.slane %v1740, %v2170
      %v2173 = vunpack.c.l.s4 1983009808
      %v2174 = vunpack.c.0.s8 %v2173
      %v2175 = vlaneseq
      %v2176 = vshrl.u32 %v2175, 7
      %v2177 = vsub.s32 %v2174, %v2176
      %v2178 = vrot.slane %v2164, %v2177
      %v2179 = vcombine.high %v2171, %v2171
      %v2180 = vcombine.high %v2178, %v2178
      %v2182 = vunpack.c.l.s4 1983009808
      %v2183 = vunpack.c.0.s8 %v2182
      %v2184 = vlaneseq
      %v2185 = vshrl.u32 %v2184, 7
      %v2186 = vsub.s32 %v2183, %v2185
      %v2187 = vrot.slane %v1741, %v2186
      %v2188 = vcombine.high %v1747, %v1747
      %v2190 = vunpack.c.l.s4 1983009808
      %v2191 = vunpack.c.0.s8 %v2190
      %v2192 = vlaneseq
      %v2193 = vshrl.u32 %v2192, 7
      %v2194 = vsub.s32 %v2191, %v2193
      %v2195 = vrot.slane %v1747, %v2194
      %v2197 = vunpack.c.l.s4 1983009808
      %v2198 = vunpack.c.0.s8 %v2197
      %v2199 = vlaneseq
      %v2200 = vshrl.u32 %v2199, 7
      %v2201 = vsub.s32 %v2198, %v2200
      %v2202 = vrot.slane %v2188, %v2201
      %v2203 = vcombine.high %v2195, %v2195
      %v2204 = vcombine.high %v2202, %v2202
      %v2205 = vcombine.low %v1785, %v1793
      %v2206 = vcombine.low %v1792, %v1794
      %v2208 = vunpack.c.l.s4 1983009808
      %v2209 = vunpack.c.0.s8 %v2208
      %v2210 = vlaneseq
      %v2211 = vshrl.u32 %v2210, 7
      %v2212 = vsub.s32 %v2209, %v2211
      %v2213 = vrot.slane %v2205, %v2212
      %v2215 = vunpack.c.l.s4 1983009808
      %v2216 = vunpack.c.0.s8 %v2215
      %v2217 = vlaneseq
      %v2218 = vshrl.u32 %v2217, 7
      %v2219 = vsub.s32 %v2216, %v2218
      %v2220 = vrot.slane %v2206, %v2219
      %v2221 = vcombine.low %v2213, %v2220
      %v2222 = vcombine.low %v1802, %v1810
      %v2223 = vcombine.low %v1809, %v1811
      %v2225 = vunpack.c.l.s4 1983009808
      %v2226 = vunpack.c.0.s8 %v2225
      %v2227 = vlaneseq
      %v2228 = vshrl.u32 %v2227, 7
      %v2229 = vsub.s32 %v2226, %v2228
      %v2230 = vrot.slane %v2222, %v2229
      %v2232 = vunpack.c.l.s4 1983009808
      %v2233 = vunpack.c.0.s8 %v2232
      %v2234 = vlaneseq
      %v2235 = vshrl.u32 %v2234, 7
      %v2236 = vsub.s32 %v2233, %v2235
      %v2237 = vrot.slane %v2223, %v2236
      %v2238 = vcombine.low %v2230, %v2237
      %v2239 = vcombine.low %v1818, %v1826
      %v2240 = vcombine.low %v1834, %v1833
      %v2242 = vunpack.c.l.s4 1983009808
      %v2243 = vunpack.c.0.s8 %v2242
      %v2244 = vlaneseq
      %v2245 = vshrl.u32 %v2244, 7
      %v2246 = vsub.s32 %v2243, %v2245
      %v2247 = vrot.slane %v2239, %v2246
      %v2249 = vunpack.c.l.s4 1983009808
      %v2250 = vunpack.c.0.s8 %v2249
      %v2251 = vlaneseq
      %v2252 = vshrl.u32 %v2251, 7
      %v2253 = vsub.s32 %v2250, %v2252
      %v2254 = vrot.slane %v2240, %v2253
      %v2255 = vcombine.low %v2247, %v2254
      %v2256 = vcombine.low %v1835, %v1843
      %v2257 = vcombine.low %v1851, %v1850
      %v2259 = vunpack.c.l.s4 1983009808
      %v2260 = vunpack.c.0.s8 %v2259
      %v2261 = vlaneseq
      %v2262 = vshrl.u32 %v2261, 7
      %v2263 = vsub.s32 %v2260, %v2262
      %v2264 = vrot.slane %v2256, %v2263
      %v2266 = vunpack.c.l.s4 1983009808
      %v2267 = vunpack.c.0.s8 %v2266
      %v2268 = vlaneseq
      %v2269 = vshrl.u32 %v2268, 7
      %v2270 = vsub.s32 %v2267, %v2269
      %v2271 = vrot.slane %v2257, %v2270
      %v2272 = vcombine.low %v2264, %v2271
      %v2273 = vcombine.low %v1852, %v1859
      %v2274 = vcombine.low %v1867, %v1875
      %v2276 = vunpack.c.l.s4 1983009808
      %v2277 = vunpack.c.0.s8 %v2276
      %v2278 = vlaneseq
      %v2279 = vshrl.u32 %v2278, 7
      %v2280 = vsub.s32 %v2277, %v2279
      %v2281 = vrot.slane %v2273, %v2280
      %v2283 = vunpack.c.l.s4 1983009808
      %v2284 = vunpack.c.0.s8 %v2283
      %v2285 = vlaneseq
      %v2286 = vshrl.u32 %v2285, 7
      %v2287 = vsub.s32 %v2284, %v2286
      %v2288 = vrot.slane %v2274, %v2287
      %v2289 = vcombine.low %v2281, %v2288
      %v2290 = vcombine.low %v1874, %v1876
      %v2291 = vcombine.low %v1884, %v1892
      %v2293 = vunpack.c.l.s4 1983009808
      %v2294 = vunpack.c.0.s8 %v2293
      %v2295 = vlaneseq
      %v2296 = vshrl.u32 %v2295, 7
      %v2297 = vsub.s32 %v2294, %v2296
      %v2298 = vrot.slane %v2290, %v2297
      %v2300 = vunpack.c.l.s4 1983009808
      %v2301 = vunpack.c.0.s8 %v2300
      %v2302 = vlaneseq
      %v2303 = vshrl.u32 %v2302, 7
      %v2304 = vsub.s32 %v2301, %v2303
      %v2305 = vrot.slane %v2291, %v2304
      %v2306 = vcombine.low %v2298, %v2305
      %v2307 = vcombine.low %v1891, %v1893
      %v2308 = vcombine.low %v1900, %v1908
      %v2310 = vunpack.c.l.s4 1983009808
      %v2311 = vunpack.c.0.s8 %v2310
      %v2312 = vlaneseq
      %v2313 = vshrl.u32 %v2312, 7
      %v2314 = vsub.s32 %v2311, %v2313
      %v2315 = vrot.slane %v2307, %v2314
      %v2317 = vunpack.c.l.s4 1983009808
      %v2318 = vunpack.c.0.s8 %v2317
      %v2319 = vlaneseq
      %v2320 = vshrl.u32 %v2319, 7
      %v2321 = vsub.s32 %v2318, %v2320
      %v2322 = vrot.slane %v2308, %v2321
      %v2323 = vcombine.low %v2315, %v2322
      %v2324 = vcombine.low %v1916, %v1915
      %v2325 = vcombine.low %v1917, %v1925
      %v2327 = vunpack.c.l.s4 1983009808
      %v2328 = vunpack.c.0.s8 %v2327
      %v2329 = vlaneseq
      %v2330 = vshrl.u32 %v2329, 7
      %v2331 = vsub.s32 %v2328, %v2330
      %v2332 = vrot.slane %v2324, %v2331
      %v2334 = vunpack.c.l.s4 1983009808
      %v2335 = vunpack.c.0.s8 %v2334
      %v2336 = vlaneseq
      %v2337 = vshrl.u32 %v2336, 7
      %v2338 = vsub.s32 %v2335, %v2337
      %v2339 = vrot.slane %v2325, %v2338
      %v2340 = vcombine.low %v2332, %v2339
      %v2341 = vcombine.low %v1933, %v1932
      %v2342 = vcombine.low %v1934, %v1941
      %v2344 = vunpack.c.l.s4 1983009808
      %v2345 = vunpack.c.0.s8 %v2344
      %v2346 = vlaneseq
      %v2347 = vshrl.u32 %v2346, 7
      %v2348 = vsub.s32 %v2345, %v2347
      %v2349 = vrot.slane %v2341, %v2348
      %v2351 = vunpack.c.l.s4 1983009808
      %v2352 = vunpack.c.0.s8 %v2351
      %v2353 = vlaneseq
      %v2354 = vshrl.u32 %v2353, 7
      %v2355 = vsub.s32 %v2352, %v2354
      %v2356 = vrot.slane %v2342, %v2355
      %v2357 = vcombine.low %v2349, %v2356
      %v2358 = vcombine.low %v1949, %v1957
      %v2359 = vcombine.low %v1956, %v1958
      %v2361 = vunpack.c.l.s4 1983009808
      %v2362 = vunpack.c.0.s8 %v2361
      %v2363 = vlaneseq
      %v2364 = vshrl.u32 %v2363, 7
      %v2365 = vsub.s32 %v2362, %v2364
      %v2366 = vrot.slane %v2358, %v2365
      %v2368 = vunpack.c.l.s4 1983009808
      %v2369 = vunpack.c.0.s8 %v2368
      %v2370 = vlaneseq
      %v2371 = vshrl.u32 %v2370, 7
      %v2372 = vsub.s32 %v2369, %v2371
      %v2373 = vrot.slane %v2359, %v2372
      %v2374 = vcombine.low %v2366, %v2373
      %v2375 = vcombine.low %v1966, %v1974
      %v2376 = vcombine.low %v1973, %v1975
      %v2378 = vunpack.c.l.s4 1983009808
      %v2379 = vunpack.c.0.s8 %v2378
      %v2380 = vlaneseq
      %v2381 = vshrl.u32 %v2380, 7
      %v2382 = vsub.s32 %v2379, %v2381
      %v2383 = vrot.slane %v2375, %v2382
      %v2385 = vunpack.c.l.s4 1983009808
      %v2386 = vunpack.c.0.s8 %v2385
      %v2387 = vlaneseq
      %v2388 = vshrl.u32 %v2387, 7
      %v2389 = vsub.s32 %v2386, %v2388
      %v2390 = vrot.slane %v2376, %v2389
      %v2391 = vcombine.low %v2383, %v2390
      %v2392 = vcombine.low %v1982, %v1990
      %v2393 = vcombine.low %v1998, %v1997
      %v2395 = vunpack.c.l.s4 1983009808
      %v2396 = vunpack.c.0.s8 %v2395
      %v2397 = vlaneseq
      %v2398 = vshrl.u32 %v2397, 7
      %v2399 = vsub.s32 %v2396, %v2398
      %v2400 = vrot.slane %v2392, %v2399
      %v2402 = vunpack.c.l.s4 1983009808
      %v2403 = vunpack.c.0.s8 %v2402
      %v2404 = vlaneseq
      %v2405 = vshrl.u32 %v2404, 7
      %v2406 = vsub.s32 %v2403, %v2405
      %v2407 = vrot.slane %v2393, %v2406
      %v2408 = vcombine.low %v2400, %v2407
      %v2409 = vcombine.low %v1999, %v2007
      %v2410 = vcombine.low %v2015, %v2014
      %v2412 = vunpack.c.l.s4 1983009808
      %v2413 = vunpack.c.0.s8 %v2412
      %v2414 = vlaneseq
      %v2415 = vshrl.u32 %v2414, 7
      %v2416 = vsub.s32 %v2413, %v2415
      %v2417 = vrot.slane %v2409, %v2416
      %v2419 = vunpack.c.l.s4 1983009808
      %v2420 = vunpack.c.0.s8 %v2419
      %v2421 = vlaneseq
      %v2422 = vshrl.u32 %v2421, 7
      %v2423 = vsub.s32 %v2420, %v2422
      %v2424 = vrot.slane %v2410, %v2423
      %v2425 = vcombine.low %v2417, %v2424
      %v2426 = vcombine.low %v2016, %v2023
      %v2427 = vcombine.low %v2031, %v2039
      %v2429 = vunpack.c.l.s4 1983009808
      %v2430 = vunpack.c.0.s8 %v2429
      %v2431 = vlaneseq
      %v2432 = vshrl.u32 %v2431, 7
      %v2433 = vsub.s32 %v2430, %v2432
      %v2434 = vrot.slane %v2426, %v2433
      %v2436 = vunpack.c.l.s4 1983009808
      %v2437 = vunpack.c.0.s8 %v2436
      %v2438 = vlaneseq
      %v2439 = vshrl.u32 %v2438, 7
      %v2440 = vsub.s32 %v2437, %v2439
      %v2441 = vrot.slane %v2427, %v2440
      %v2442 = vcombine.low %v2434, %v2441
      %v2443 = vcombine.low %v2038, %v2040
      %v2444 = vcombine.low %v2048, %v2056
      %v2446 = vunpack.c.l.s4 1983009808
      %v2447 = vunpack.c.0.s8 %v2446
      %v2448 = vlaneseq
      %v2449 = vshrl.u32 %v2448, 7
      %v2450 = vsub.s32 %v2447, %v2449
      %v2451 = vrot.slane %v2443, %v2450
      %v2453 = vunpack.c.l.s4 1983009808
      %v2454 = vunpack.c.0.s8 %v2453
      %v2455 = vlaneseq
      %v2456 = vshrl.u32 %v2455, 7
      %v2457 = vsub.s32 %v2454, %v2456
      %v2458 = vrot.slane %v2444, %v2457
      %v2459 = vcombine.low %v2451, %v2458
      %v2460 = vcombine.low %v2055, %v2057
      %v2461 = vcombine.low %v2064, %v2072
      %v2463 = vunpack.c.l.s4 1983009808
      %v2464 = vunpack.c.0.s8 %v2463
      %v2465 = vlaneseq
      %v2466 = vshrl.u32 %v2465, 7
      %v2467 = vsub.s32 %v2464, %v2466
      %v2468 = vrot.slane %v2460, %v2467
      %v2470 = vunpack.c.l.s4 1983009808
      %v2471 = vunpack.c.0.s8 %v2470
      %v2472 = vlaneseq
      %v2473 = vshrl.u32 %v2472, 7
      %v2474 = vsub.s32 %v2471, %v2473
      %v2475 = vrot.slane %v2461, %v2474
      %v2476 = vcombine.low %v2468, %v2475
      %v2477 = vcombine.low %v2080, %v2079
      %v2478 = vcombine.low %v2081, %v2089
      %v2480 = vunpack.c.l.s4 1983009808
      %v2481 = vunpack.c.0.s8 %v2480
      %v2482 = vlaneseq
      %v2483 = vshrl.u32 %v2482, 7
      %v2484 = vsub.s32 %v2481, %v2483
      %v2485 = vrot.slane %v2477, %v2484
      %v2487 = vunpack.c.l.s4 1983009808
      %v2488 = vunpack.c.0.s8 %v2487
      %v2489 = vlaneseq
      %v2490 = vshrl.u32 %v2489, 7
      %v2491 = vsub.s32 %v2488, %v2490
      %v2492 = vrot.slane %v2478, %v2491
      %v2493 = vcombine.low %v2485, %v2492
      %v2494 = vcombine.low %v2097, %v2096
      %v2495 = vcombine.low %v2098, %v2105
      %v2497 = vunpack.c.l.s4 1983009808
      %v2498 = vunpack.c.0.s8 %v2497
      %v2499 = vlaneseq
      %v2500 = vshrl.u32 %v2499, 7
      %v2501 = vsub.s32 %v2498, %v2500
      %v2502 = vrot.slane %v2494, %v2501
      %v2504 = vunpack.c.l.s4 1983009808
      %v2505 = vunpack.c.0.s8 %v2504
      %v2506 = vlaneseq
      %v2507 = vshrl.u32 %v2506, 7
      %v2508 = vsub.s32 %v2505, %v2507
      %v2509 = vrot.slane %v2495, %v2508
      %v2510 = vcombine.low %v2502, %v2509
      %v2511 = vcombine.low %v2113, %v2121
      %v2512 = vcombine.low %v2120, %v2122
      %v2514 = vunpack.c.l.s4 1983009808
      %v2515 = vunpack.c.0.s8 %v2514
      %v2516 = vlaneseq
      %v2517 = vshrl.u32 %v2516, 7
      %v2518 = vsub.s32 %v2515, %v2517
      %v2519 = vrot.slane %v2511, %v2518
      %v2521 = vunpack.c.l.s4 1983009808
      %v2522 = vunpack.c.0.s8 %v2521
      %v2523 = vlaneseq
      %v2524 = vshrl.u32 %v2523, 7
      %v2525 = vsub.s32 %v2522, %v2524
      %v2526 = vrot.slane %v2512, %v2525
      %v2527 = vcombine.low %v2519, %v2526
      %v2528 = vcombine.low %v2130, %v2138
      %v2529 = vcombine.low %v2137, %v2139
      %v2531 = vunpack.c.l.s4 1983009808
      %v2532 = vunpack.c.0.s8 %v2531
      %v2533 = vlaneseq
      %v2534 = vshrl.u32 %v2533, 7
      %v2535 = vsub.s32 %v2532, %v2534
      %v2536 = vrot.slane %v2528, %v2535
      %v2538 = vunpack.c.l.s4 1983009808
      %v2539 = vunpack.c.0.s8 %v2538
      %v2540 = vlaneseq
      %v2541 = vshrl.u32 %v2540, 7
      %v2542 = vsub.s32 %v2539, %v2541
      %v2543 = vrot.slane %v2529, %v2542
      %v2544 = vcombine.low %v2536, %v2543
      %v2545 = vcombine.low %v2146, %v2154
      %v2546 = vcombine.low %v2162, %v2161
      %v2548 = vunpack.c.l.s4 1983009808
      %v2549 = vunpack.c.0.s8 %v2548
      %v2550 = vlaneseq
      %v2551 = vshrl.u32 %v2550, 7
      %v2552 = vsub.s32 %v2549, %v2551
      %v2553 = vrot.slane %v2545, %v2552
      %v2555 = vunpack.c.l.s4 1983009808
      %v2556 = vunpack.c.0.s8 %v2555
      %v2557 = vlaneseq
      %v2558 = vshrl.u32 %v2557, 7
      %v2559 = vsub.s32 %v2556, %v2558
      %v2560 = vrot.slane %v2546, %v2559
      %v2561 = vcombine.low %v2553, %v2560
      %v2562 = vcombine.low %v2163, %v2171
      %v2563 = vcombine.low %v2179, %v2178
      %v2565 = vunpack.c.l.s4 1983009808
      %v2566 = vunpack.c.0.s8 %v2565
      %v2567 = vlaneseq
      %v2568 = vshrl.u32 %v2567, 7
      %v2569 = vsub.s32 %v2566, %v2568
      %v2570 = vrot.slane %v2562, %v2569
      %v2572 = vunpack.c.l.s4 1983009808
      %v2573 = vunpack.c.0.s8 %v2572
      %v2574 = vlaneseq
      %v2575 = vshrl.u32 %v2574, 7
      %v2576 = vsub.s32 %v2573, %v2575
      %v2577 = vrot.slane %v2563, %v2576
      %v2578 = vcombine.low %v2570, %v2577
      %v2579 = vcombine.low %v2180, %v2187
      %v2581 = vunpack.c.l.s4 1983009808
      %v2582 = vunpack.c.0.s8 %v2581
      %v2583 = vlaneseq
      %v2584 = vshrl.u32 %v2583, 7
      %v2585 = vsub.s32 %v2582, %v2584
      %v2586 = vrot.slane %v2579, %v2585
      %v2587 = vcombine.low %v2195, %v2203
      %v2588 = vcombine.low %v2202, %v2204
      %v2590 = vunpack.c.l.s4 1983009808
      %v2591 = vunpack.c.0.s8 %v2590
      %v2592 = vlaneseq
      %v2593 = vshrl.u32 %v2592, 7
      %v2594 = vsub.s32 %v2591, %v2593
      %v2595 = vrot.slane %v2587, %v2594
      %v2597 = vunpack.c.l.s4 1983009808
      %v2598 = vunpack.c.0.s8 %v2597
      %v2599 = vlaneseq
      %v2600 = vshrl.u32 %v2599, 7
      %v2601 = vsub.s32 %v2598, %v2600
      %v2602 = vrot.slane %v2588, %v2601
      %v2603 = vcombine.low %v2595, %v2602
      %v2604 = vcombine.low %v2195, %v2195
      %v2605 = vcombine.low %v2203, %v2202
      %v2607 = vunpack.c.l.s4 1983009808
      %v2608 = vunpack.c.0.s8 %v2607
      %v2609 = vlaneseq
      %v2610 = vshrl.u32 %v2609, 7
      %v2611 = vsub.s32 %v2608, %v2610
      %v2612 = vrot.slane %v2604, %v2611
      %v2614 = vunpack.c.l.s4 1983009808
      %v2615 = vunpack.c.0.s8 %v2614
      %v2616 = vlaneseq
      %v2617 = vshrl.u32 %v2616, 7
      %v2618 = vsub.s32 %v2615, %v2617
      %v2619 = vrot.slane %v2605, %v2618
      %v2620 = vcombine.low %v2612, %v2619
      %v2621 = vcombine.low %v2204, %v2195
      %v2623 = vunpack.c.l.s4 1983009808
      %v2624 = vunpack.c.0.s8 %v2623
      %v2625 = vlaneseq
      %v2626 = vshrl.u32 %v2625, 7
      %v2627 = vsub.s32 %v2624, %v2626
      %v2628 = vrot.slane %v2621, %v2627
      %v2629 = vcombine.low %v2628, %v2619
      %v2630 = vcombine.low %v2628, %v2595
      %v2631 = vcombine.low %v2602, %v2595
      %v2632 = vcombine.low %v2602, %v2612
      %v2633 = vcombine.low %v2619, %v2628
      %vm2642 = vcmask 293888
      %v2643 = vsel %vm2642, %v2221, 0
      %v2645 = vsel %vm2642, %v2238, 0
      %v2647 = vsel %vm2642, %v2255, 0
      %v2649 = vsel %vm2642, %v2272, 0
      %v2651 = vsel %vm2642, %v2289, 0
      %v2653 = vsel %vm2642, %v2306, 0
      %v2655 = vsel %vm2642, %v2323, 0
      %v2657 = vsel %vm2642, %v2340, 0
      %v2659 = vsel %vm2642, %v2357, 0
      %v2661 = vsel %vm2642, %v2374, 0
      %v2663 = vsel %vm2642, %v2391, 0
      %v2665 = vsel %vm2642, %v2408, 0
      %v2667 = vsel %vm2642, %v2425, 0
      %v2669 = vsel %vm2642, %v2442, 0
      %v2671 = vsel %vm2642, %v2459, 0
      %v2673 = vsel %vm2642, %v2476, 0
      %v2675 = vsel %vm2642, %v2493, 0
      %v2677 = vsel %vm2642, %v2510, 0
      %v2679 = vsel %vm2642, %v2527, 0
      %v2681 = vsel %vm2642, %v2544, 0
      %v2683 = vsel %vm2642, %v2561, 0
      %v2685 = vsel %vm2642, %v2578, 0
      %v2687 = vsel %vm2642, %v2586, 0
      %vm2689 = vcmask 1043456
      %v2691 = vsel %vm2689, %v255, 0
      %2693 = vmatprep.subr.mxu0 0.0
      %2694 = vmatpush1.msra.mxu0 0.0
      %2695 = vmatprep.subr.mxu0 0.0
      %2696 = vmatpush1.msra.mxu0 0.0
      %2697 = vmatprep.subr.mxu0 0.0
      %2698 = vmatpush1.msra.mxu0 0.0
      %2699 = vmatprep.subr.mxu0 0.0
      %2700 = vmatpush1.msra.mxu0 0.0
      %2701 = vmatprep.subr.mxu0 0.0
      %2702 = vmatpush1.msra.mxu0 0.0
      %2703 = vmatprep.subr.mxu0 0.0
      %2704 = vmatpush1.msra.mxu0 0.0
      %2705 = vmatprep.subr.mxu0 0.0
      %2706 = vmatpush1.msra.mxu0 0.0
      %2707 = vmatprep.subr.mxu0 0.0
      %2708 = vmatpush1.msra.mxu0 0.0
      %2709 = vmatprep.subr.mxu0 0.0
      %2710 = vmatpush1.msra.mxu0 0.0
      %2711 = vmatprep.subr.mxu0 0.0
      %2712 = vmatpush1.msra.mxu0 0.0
      %2713 = vmatprep.subr.mxu0 0.0
      %2714 = vmatpush1.msra.mxu0 0.0
      %2715 = vmatprep.subr.mxu0 0.0
      %2716 = vmatpush1.msra.mxu0 %v2691
      %2717 = vmatprep.subr.mxu0 0.0
      %2718 = vmatpush1.msra.mxu0 %v254
      %2719 = vmatprep.subr.mxu0 0.0
      %2720 = vmatpush1.msra.mxu0 %v253
      %2721 = vmatprep.subr.mxu0 0.0
      %2722 = vmatpush1.msra.mxu0 %v252
      %2723 = vmatprep.subr.mxu0 0.0
      %2724 = vmatpush1.msra.mxu0 %v251
      %2725 = vmatprep.subr.mxu0 0.0
      %2726 = vmatpush2.msra.mxu0 0.0
      %2727 = vmatprep.subr.mxu0 0.0
      %2728 = vmatpush2.msra.mxu0 0.0
      %2729 = vmatprep.subr.mxu0 0.0
      %2730 = vmatpush2.msra.mxu0 0.0
      %2731 = vmatprep.subr.mxu0 0.0
      %2732 = vmatpush2.msra.mxu0 0.0
      %2733 = vmatprep.subr.mxu0 0.0
      %2734 = vmatpush2.msra.mxu0 0.0
      %2735 = vmatprep.subr.mxu0 0.0
      %2736 = vmatpush2.msra.mxu0 0.0
      %2737 = vmatprep.subr.mxu0 0.0
      %2738 = vmatpush2.msra.mxu0 0.0
      %2739 = vmatprep.subr.mxu0 0.0
      %2740 = vmatpush2.msra.mxu0 0.0
      %2741 = vmatprep.subr.mxu0 0.0
      %2742 = vmatpush2.msra.mxu0 0.0
      %2743 = vmatprep.subr.mxu0 0.0
      %2744 = vmatpush2.msra.mxu0 0.0
      %2745 = vmatprep.subr.mxu0 0.0
      %2746 = vmatpush2.msra.mxu0 0.0
      %2747 = vmatprep.subr.mxu0 0.0
      %2748 = vmatpush2.msra.mxu0 0.0
      %2749 = vmatprep.subr.mxu0 0.0
      %2750 = vmatpush2.msra.mxu0 0.0
      %2751 = vmatprep.subr.mxu0 0.0
      %2752 = vmatpush2.msra.mxu0 0.0
      %2753 = vmatprep.subr.mxu0 0.0
      %2754 = vmatpush2.msra.mxu0 0.0
      %2755 = vmatprep.subr.mxu0 0.0
      %2756 = vmatpush2.msra.mxu0 0.0
      %2757 = vmatprep.mubr.f32.mxu0 0.0
      %2758 = vmatmul.mubr.f32.gmra.mxu0 %v2643
      %v2759 = vpop.f32.mrf.mxu0
      %v2760 = vadd.f32 %v2603, %v2759
      %v2761 = vpop.f32.mrf.mxu0
      %2762 = vmatprep.mubr.f32.mxu0 0.0
      %2763 = vmatmul.mubr.f32.gmra.mxu0 %v2645
      %v2764 = vpop.f32.mrf.mxu0
      %v2765 = vadd.f32 %v2603, %v2764
      %v2766 = vpop.f32.mrf.mxu0
      %2767 = vmatprep.mubr.f32.mxu0 0.0
      %2768 = vmatmul.mubr.f32.gmra.mxu0 %v2647
      %v2769 = vpop.f32.mrf.mxu0
      %v2770 = vadd.f32 %v2620, %v2769
      %v2771 = vpop.f32.mrf.mxu0
      %2772 = vmatprep.mubr.f32.mxu0 0.0
      %2773 = vmatmul.mubr.f32.gmra.mxu0 %v2649
      %v2774 = vpop.f32.mrf.mxu0
      %v2775 = vadd.f32 %v2629, %v2774
      %v2776 = vpop.f32.mrf.mxu0
      %2777 = vmatprep.mubr.f32.mxu0 0.0
      %2778 = vmatmul.mubr.f32.gmra.mxu0 %v2651
      %v2779 = vpop.f32.mrf.mxu0
      %v2780 = vadd.f32 %v2630, %v2779
      %v2781 = vpop.f32.mrf.mxu0
      %2782 = vmatprep.mubr.f32.mxu0 0.0
      %2783 = vmatmul.mubr.f32.gmra.mxu0 %v2653
      %v2784 = vpop.f32.mrf.mxu0
      %v2785 = vadd.f32 %v2631, %v2784
      %v2786 = vpop.f32.mrf.mxu0
      %2787 = vmatprep.mubr.f32.mxu0 0.0
      %2788 = vmatmul.mubr.f32.gmra.mxu0 %v2655
      %v2789 = vpop.f32.mrf.mxu0
      %v2790 = vadd.f32 %v2632, %v2789
      %v2791 = vpop.f32.mrf.mxu0
      %2792 = vmatprep.mubr.f32.mxu0 0.0
      %2793 = vmatmul.mubr.f32.gmra.mxu0 %v2657
      %v2794 = vpop.f32.mrf.mxu0
      %v2795 = vadd.f32 %v2633, %v2794
      %v2796 = vpop.f32.mrf.mxu0
      %2797 = vmatprep.mubr.f32.mxu0 0.0
      %2798 = vmatmul.mubr.f32.gmra.mxu0 %v2659
      %v2799 = vpop.f32.mrf.mxu0
      %v2800 = vadd.f32 %v2633, %v2799
      %v2801 = vpop.f32.mrf.mxu0
      %2802 = vmatprep.mubr.f32.mxu0 0.0
      %2803 = vmatmul.mubr.f32.gmra.mxu0 %v2661
      %v2804 = vpop.f32.mrf.mxu0
      %v2805 = vadd.f32 %v2603, %v2804
      %v2806 = vpop.f32.mrf.mxu0
      %2807 = vmatprep.mubr.f32.mxu0 0.0
      %2808 = vmatmul.mubr.f32.gmra.mxu0 %v2663
      %v2809 = vpop.f32.mrf.mxu0
      %v2810 = vadd.f32 %v2603, %v2809
      %v2811 = vpop.f32.mrf.mxu0
      %2812 = vmatprep.mubr.f32.mxu0 0.0
      %2813 = vmatmul.mubr.f32.gmra.mxu0 %v2665
      %v2814 = vpop.f32.mrf.mxu0
      %v2815 = vadd.f32 %v2620, %v2814
      %v2816 = vpop.f32.mrf.mxu0
      %2817 = vmatprep.mubr.f32.mxu0 0.0
      %2818 = vmatmul.mubr.f32.gmra.mxu0 %v2667
      %v2819 = vpop.f32.mrf.mxu0
      %v2820 = vadd.f32 %v2629, %v2819
      %v2821 = vpop.f32.mrf.mxu0
      %2822 = vmatprep.mubr.f32.mxu0 0.0
      %2823 = vmatmul.mubr.f32.gmra.mxu0 %v2669
      %v2824 = vpop.f32.mrf.mxu0
      %v2825 = vadd.f32 %v2630, %v2824
      %v2826 = vpop.f32.mrf.mxu0
      %2827 = vmatprep.mubr.f32.mxu0 0.0
      %2828 = vmatmul.mubr.f32.gmra.mxu0 %v2671
      %v2829 = vpop.f32.mrf.mxu0
      %v2830 = vadd.f32 %v2631, %v2829
      %v2831 = vpop.f32.mrf.mxu0
      %2832 = vmatprep.mubr.f32.mxu0 0.0
      %2833 = vmatmul.mubr.f32.gmra.mxu0 %v2673
      %v2834 = vpop.f32.mrf.mxu0
      %v2835 = vadd.f32 %v2632, %v2834
      %v2836 = vpop.f32.mrf.mxu0
      %2837 = vmatprep.mubr.f32.mxu0 0.0
      %2838 = vmatmul.mubr.f32.gmra.mxu0 %v2675
      %v2839 = vpop.f32.mrf.mxu0
      %v2840 = vadd.f32 %v2633, %v2839
      %v2841 = vpop.f32.mrf.mxu0
      %2842 = vmatprep.mubr.f32.mxu0 0.0
      %2843 = vmatmul.mubr.f32.gmra.mxu0 %v2677
      %v2844 = vpop.f32.mrf.mxu0
      %v2845 = vadd.f32 %v2633, %v2844
      %v2846 = vpop.f32.mrf.mxu0
      %2847 = vmatprep.mubr.f32.mxu0 0.0
      %2848 = vmatmul.mubr.f32.gmra.mxu0 %v2679
      %v2849 = vpop.f32.mrf.mxu0
      %v2850 = vadd.f32 %v2603, %v2849
      %v2851 = vpop.f32.mrf.mxu0
      %2852 = vmatprep.mubr.f32.mxu0 0.0
      %2853 = vmatmul.mubr.f32.gmra.mxu0 %v2681
      %v2854 = vpop.f32.mrf.mxu0
      %v2855 = vadd.f32 %v2603, %v2854
      %v2856 = vpop.f32.mrf.mxu0
      %2857 = vmatprep.mubr.f32.mxu0 0.0
      %2858 = vmatmul.mubr.f32.gmra.mxu0 %v2683
      %v2859 = vpop.f32.mrf.mxu0
      %v2860 = vadd.f32 %v2620, %v2859
      %v2861 = vpop.f32.mrf.mxu0
      %2862 = vmatprep.mubr.f32.mxu0 0.0
      %2863 = vmatmul.mubr.f32.gmra.mxu0 %v2685
      %v2864 = vpop.f32.mrf.mxu0
      %v2865 = vadd.f32 %v2629, %v2864
      %v2866 = vpop.f32.mrf.mxu0
      %2867 = vmatprep.mubr.f32.mxu0 0.0
      %2868 = vmatmul.mubr.f32.gmra.mxu0 %v2687
      %v2869 = vpop.f32.mrf.mxu0
      %v2870 = vadd.f32 %v2628, %v2869
      %v2871 = vpop.f32.mrf.mxu0
      %2872 = vdwg.mxu0
      %v2896 = vcombine.high %v2760, %v2760
      %v2898 = vunpack.c.l.s4 1983009808
      %v2899 = vunpack.c.0.s8 %v2898
      %v2900 = vlaneseq
      %v2901 = vshrl.u32 %v2900, 7
      %v2902 = vsub.s32 %v2899, %v2901
      %v2903 = vrot.slane %v2760, %v2902
      %v2905 = vunpack.c.l.s4 1983009808
      %v2906 = vunpack.c.0.s8 %v2905
      %v2907 = vlaneseq
      %v2908 = vshrl.u32 %v2907, 7
      %v2909 = vsub.s32 %v2906, %v2908
      %v2910 = vrot.slane %v2896, %v2909
      %v2911 = vcombine.high %v2903, %v2903
      %v2912 = vcombine.high %v2910, %v2910
      %v2913 = vcombine.high %v2765, %v2765
      %v2915 = vunpack.c.l.s4 1983009808
      %v2916 = vunpack.c.0.s8 %v2915
      %v2917 = vlaneseq
      %v2918 = vshrl.u32 %v2917, 7
      %v2919 = vsub.s32 %v2916, %v2918
      %v2920 = vrot.slane %v2765, %v2919
      %v2922 = vunpack.c.l.s4 1983009808
      %v2923 = vunpack.c.0.s8 %v2922
      %v2924 = vlaneseq
      %v2925 = vshrl.u32 %v2924, 7
      %v2926 = vsub.s32 %v2923, %v2925
      %v2927 = vrot.slane %v2913, %v2926
      %v2928 = vcombine.high %v2920, %v2920
      %v2929 = vcombine.high %v2927, %v2927
      %v2930 = vcombine.high %v2770, %v2770
      %v2932 = vunpack.c.l.s4 1983009808
      %v2933 = vunpack.c.0.s8 %v2932
      %v2934 = vlaneseq
      %v2935 = vshrl.u32 %v2934, 7
      %v2936 = vsub.s32 %v2933, %v2935
      %v2937 = vrot.slane %v2770, %v2936
      %v2939 = vunpack.c.l.s4 1983009808
      %v2940 = vunpack.c.0.s8 %v2939
      %v2941 = vlaneseq
      %v2942 = vshrl.u32 %v2941, 7
      %v2943 = vsub.s32 %v2940, %v2942
      %v2944 = vrot.slane %v2930, %v2943
      %v2945 = vcombine.high %v2937, %v2937
      %v2946 = vcombine.high %v2944, %v2944
      %v2947 = vcombine.high %v2775, %v2775
      %v2949 = vunpack.c.l.s4 1983009808
      %v2950 = vunpack.c.0.s8 %v2949
      %v2951 = vlaneseq
      %v2952 = vshrl.u32 %v2951, 7
      %v2953 = vsub.s32 %v2950, %v2952
      %v2954 = vrot.slane %v2775, %v2953
      %v2956 = vunpack.c.l.s4 1983009808
      %v2957 = vunpack.c.0.s8 %v2956
      %v2958 = vlaneseq
      %v2959 = vshrl.u32 %v2958, 7
      %v2960 = vsub.s32 %v2957, %v2959
      %v2961 = vrot.slane %v2947, %v2960
      %v2962 = vcombine.high %v2954, %v2954
      %v2963 = vcombine.high %v2961, %v2961
      %v2964 = vcombine.high %v2780, %v2780
      %v2966 = vunpack.c.l.s4 1983009808
      %v2967 = vunpack.c.0.s8 %v2966
      %v2968 = vlaneseq
      %v2969 = vshrl.u32 %v2968, 7
      %v2970 = vsub.s32 %v2967, %v2969
      %v2971 = vrot.slane %v2780, %v2970
      %v2973 = vunpack.c.l.s4 1983009808
      %v2974 = vunpack.c.0.s8 %v2973
      %v2975 = vlaneseq
      %v2976 = vshrl.u32 %v2975, 7
      %v2977 = vsub.s32 %v2974, %v2976
      %v2978 = vrot.slane %v2964, %v2977
      %v2979 = vcombine.high %v2971, %v2971
      %v2980 = vcombine.high %v2978, %v2978
      %v2981 = vcombine.high %v2785, %v2785
      %v2983 = vunpack.c.l.s4 1983009808
      %v2984 = vunpack.c.0.s8 %v2983
      %v2985 = vlaneseq
      %v2986 = vshrl.u32 %v2985, 7
      %v2987 = vsub.s32 %v2984, %v2986
      %v2988 = vrot.slane %v2785, %v2987
      %v2990 = vunpack.c.l.s4 1983009808
      %v2991 = vunpack.c.0.s8 %v2990
      %v2992 = vlaneseq
      %v2993 = vshrl.u32 %v2992, 7
      %v2994 = vsub.s32 %v2991, %v2993
      %v2995 = vrot.slane %v2981, %v2994
      %v2996 = vcombine.high %v2988, %v2988
      %v2997 = vcombine.high %v2995, %v2995
      %v2998 = vcombine.high %v2790, %v2790
      %v3000 = vunpack.c.l.s4 1983009808
      %v3001 = vunpack.c.0.s8 %v3000
      %v3002 = vlaneseq
      %v3003 = vshrl.u32 %v3002, 7
      %v3004 = vsub.s32 %v3001, %v3003
      %v3005 = vrot.slane %v2790, %v3004
      %v3007 = vunpack.c.l.s4 1983009808
      %v3008 = vunpack.c.0.s8 %v3007
      %v3009 = vlaneseq
      %v3010 = vshrl.u32 %v3009, 7
      %v3011 = vsub.s32 %v3008, %v3010
      %v3012 = vrot.slane %v2998, %v3011
      %v3013 = vcombine.high %v3005, %v3005
      %v3014 = vcombine.high %v3012, %v3012
      %v3015 = vcombine.high %v2795, %v2795
      %v3017 = vunpack.c.l.s4 1983009808
      %v3018 = vunpack.c.0.s8 %v3017
      %v3019 = vlaneseq
      %v3020 = vshrl.u32 %v3019, 7
      %v3021 = vsub.s32 %v3018, %v3020
      %v3022 = vrot.slane %v2795, %v3021
      %v3024 = vunpack.c.l.s4 1983009808
      %v3025 = vunpack.c.0.s8 %v3024
      %v3026 = vlaneseq
      %v3027 = vshrl.u32 %v3026, 7
      %v3028 = vsub.s32 %v3025, %v3027
      %v3029 = vrot.slane %v3015, %v3028
      %v3030 = vcombine.high %v3022, %v3022
      %v3031 = vcombine.high %v3029, %v3029
      %v3032 = vcombine.high %v2800, %v2800
      %v3034 = vunpack.c.l.s4 1983009808
      %v3035 = vunpack.c.0.s8 %v3034
      %v3036 = vlaneseq
      %v3037 = vshrl.u32 %v3036, 7
      %v3038 = vsub.s32 %v3035, %v3037
      %v3039 = vrot.slane %v2800, %v3038
      %v3041 = vunpack.c.l.s4 1983009808
      %v3042 = vunpack.c.0.s8 %v3041
      %v3043 = vlaneseq
      %v3044 = vshrl.u32 %v3043, 7
      %v3045 = vsub.s32 %v3042, %v3044
      %v3046 = vrot.slane %v3032, %v3045
      %v3047 = vcombine.high %v3039, %v3039
      %v3048 = vcombine.high %v3046, %v3046
      %v3049 = vcombine.high %v2805, %v2805
      %v3051 = vunpack.c.l.s4 1983009808
      %v3052 = vunpack.c.0.s8 %v3051
      %v3053 = vlaneseq
      %v3054 = vshrl.u32 %v3053, 7
      %v3055 = vsub.s32 %v3052, %v3054
      %v3056 = vrot.slane %v2805, %v3055
      %v3058 = vunpack.c.l.s4 1983009808
      %v3059 = vunpack.c.0.s8 %v3058
      %v3060 = vlaneseq
      %v3061 = vshrl.u32 %v3060, 7
      %v3062 = vsub.s32 %v3059, %v3061
      %v3063 = vrot.slane %v3049, %v3062
      %v3064 = vcombine.high %v3056, %v3056
      %v3065 = vcombine.high %v3063, %v3063
      %v3066 = vcombine.high %v2810, %v2810
      %v3068 = vunpack.c.l.s4 1983009808
      %v3069 = vunpack.c.0.s8 %v3068
      %v3070 = vlaneseq
      %v3071 = vshrl.u32 %v3070, 7
      %v3072 = vsub.s32 %v3069, %v3071
      %v3073 = vrot.slane %v2810, %v3072
      %v3075 = vunpack.c.l.s4 1983009808
      %v3076 = vunpack.c.0.s8 %v3075
      %v3077 = vlaneseq
      %v3078 = vshrl.u32 %v3077, 7
      %v3079 = vsub.s32 %v3076, %v3078
      %v3080 = vrot.slane %v3066, %v3079
      %v3081 = vcombine.high %v3073, %v3073
      %v3082 = vcombine.high %v3080, %v3080
      %v3083 = vcombine.high %v2815, %v2815
      %v3085 = vunpack.c.l.s4 1983009808
      %v3086 = vunpack.c.0.s8 %v3085
      %v3087 = vlaneseq
      %v3088 = vshrl.u32 %v3087, 7
      %v3089 = vsub.s32 %v3086, %v3088
      %v3090 = vrot.slane %v2815, %v3089
      %v3092 = vunpack.c.l.s4 1983009808
      %v3093 = vunpack.c.0.s8 %v3092
      %v3094 = vlaneseq
      %v3095 = vshrl.u32 %v3094, 7
      %v3096 = vsub.s32 %v3093, %v3095
      %v3097 = vrot.slane %v3083, %v3096
      %v3098 = vcombine.high %v3090, %v3090
      %v3099 = vcombine.high %v3097, %v3097
      %v3100 = vcombine.high %v2820, %v2820
      %v3102 = vunpack.c.l.s4 1983009808
      %v3103 = vunpack.c.0.s8 %v3102
      %v3104 = vlaneseq
      %v3105 = vshrl.u32 %v3104, 7
      %v3106 = vsub.s32 %v3103, %v3105
      %v3107 = vrot.slane %v2820, %v3106
      %v3109 = vunpack.c.l.s4 1983009808
      %v3110 = vunpack.c.0.s8 %v3109
      %v3111 = vlaneseq
      %v3112 = vshrl.u32 %v3111, 7
      %v3113 = vsub.s32 %v3110, %v3112
      %v3114 = vrot.slane %v3100, %v3113
      %v3115 = vcombine.high %v3107, %v3107
      %v3116 = vcombine.high %v3114, %v3114
      %v3117 = vcombine.high %v2825, %v2825
      %v3119 = vunpack.c.l.s4 1983009808
      %v3120 = vunpack.c.0.s8 %v3119
      %v3121 = vlaneseq
      %v3122 = vshrl.u32 %v3121, 7
      %v3123 = vsub.s32 %v3120, %v3122
      %v3124 = vrot.slane %v2825, %v3123
      %v3126 = vunpack.c.l.s4 1983009808
      %v3127 = vunpack.c.0.s8 %v3126
      %v3128 = vlaneseq
      %v3129 = vshrl.u32 %v3128, 7
      %v3130 = vsub.s32 %v3127, %v3129
      %v3131 = vrot.slane %v3117, %v3130
      %v3132 = vcombine.high %v3124, %v3124
      %v3133 = vcombine.high %v3131, %v3131
      %v3134 = vcombine.high %v2830, %v2830
      %v3136 = vunpack.c.l.s4 1983009808
      %v3137 = vunpack.c.0.s8 %v3136
      %v3138 = vlaneseq
      %v3139 = vshrl.u32 %v3138, 7
      %v3140 = vsub.s32 %v3137, %v3139
      %v3141 = vrot.slane %v2830, %v3140
      %v3143 = vunpack.c.l.s4 1983009808
      %v3144 = vunpack.c.0.s8 %v3143
      %v3145 = vlaneseq
      %v3146 = vshrl.u32 %v3145, 7
      %v3147 = vsub.s32 %v3144, %v3146
      %v3148 = vrot.slane %v3134, %v3147
      %v3149 = vcombine.high %v3141, %v3141
      %v3150 = vcombine.high %v3148, %v3148
      %v3151 = vcombine.high %v2835, %v2835
      %v3153 = vunpack.c.l.s4 1983009808
      %v3154 = vunpack.c.0.s8 %v3153
      %v3155 = vlaneseq
      %v3156 = vshrl.u32 %v3155, 7
      %v3157 = vsub.s32 %v3154, %v3156
      %v3158 = vrot.slane %v2835, %v3157
      %v3160 = vunpack.c.l.s4 1983009808
      %v3161 = vunpack.c.0.s8 %v3160
      %v3162 = vlaneseq
      %v3163 = vshrl.u32 %v3162, 7
      %v3164 = vsub.s32 %v3161, %v3163
      %v3165 = vrot.slane %v3151, %v3164
      %v3166 = vcombine.high %v3158, %v3158
      %v3167 = vcombine.high %v3165, %v3165
      %v3168 = vcombine.high %v2840, %v2840
      %v3170 = vunpack.c.l.s4 1983009808
      %v3171 = vunpack.c.0.s8 %v3170
      %v3172 = vlaneseq
      %v3173 = vshrl.u32 %v3172, 7
      %v3174 = vsub.s32 %v3171, %v3173
      %v3175 = vrot.slane %v2840, %v3174
      %v3177 = vunpack.c.l.s4 1983009808
      %v3178 = vunpack.c.0.s8 %v3177
      %v3179 = vlaneseq
      %v3180 = vshrl.u32 %v3179, 7
      %v3181 = vsub.s32 %v3178, %v3180
      %v3182 = vrot.slane %v3168, %v3181
      %v3183 = vcombine.high %v3175, %v3175
      %v3184 = vcombine.high %v3182, %v3182
      %v3185 = vcombine.high %v2845, %v2845
      %v3187 = vunpack.c.l.s4 1983009808
      %v3188 = vunpack.c.0.s8 %v3187
      %v3189 = vlaneseq
      %v3190 = vshrl.u32 %v3189, 7
      %v3191 = vsub.s32 %v3188, %v3190
      %v3192 = vrot.slane %v2845, %v3191
      %v3194 = vunpack.c.l.s4 1983009808
      %v3195 = vunpack.c.0.s8 %v3194
      %v3196 = vlaneseq
      %v3197 = vshrl.u32 %v3196, 7
      %v3198 = vsub.s32 %v3195, %v3197
      %v3199 = vrot.slane %v3185, %v3198
      %v3200 = vcombine.high %v3192, %v3192
      %v3201 = vcombine.high %v3199, %v3199
      %v3202 = vcombine.high %v2850, %v2850
      %v3204 = vunpack.c.l.s4 1983009808
      %v3205 = vunpack.c.0.s8 %v3204
      %v3206 = vlaneseq
      %v3207 = vshrl.u32 %v3206, 7
      %v3208 = vsub.s32 %v3205, %v3207
      %v3209 = vrot.slane %v2850, %v3208
      %v3211 = vunpack.c.l.s4 1983009808
      %v3212 = vunpack.c.0.s8 %v3211
      %v3213 = vlaneseq
      %v3214 = vshrl.u32 %v3213, 7
      %v3215 = vsub.s32 %v3212, %v3214
      %v3216 = vrot.slane %v3202, %v3215
      %v3217 = vcombine.high %v3209, %v3209
      %v3218 = vcombine.high %v3216, %v3216
      %v3219 = vcombine.high %v2855, %v2855
      %v3221 = vunpack.c.l.s4 1983009808
      %v3222 = vunpack.c.0.s8 %v3221
      %v3223 = vlaneseq
      %v3224 = vshrl.u32 %v3223, 7
      %v3225 = vsub.s32 %v3222, %v3224
      %v3226 = vrot.slane %v2855, %v3225
      %v3228 = vunpack.c.l.s4 1983009808
      %v3229 = vunpack.c.0.s8 %v3228
      %v3230 = vlaneseq
      %v3231 = vshrl.u32 %v3230, 7
      %v3232 = vsub.s32 %v3229, %v3231
      %v3233 = vrot.slane %v3219, %v3232
      %v3234 = vcombine.high %v3226, %v3226
      %v3235 = vcombine.high %v3233, %v3233
      %v3236 = vcombine.high %v2860, %v2860
      %v3238 = vunpack.c.l.s4 1983009808
      %v3239 = vunpack.c.0.s8 %v3238
      %v3240 = vlaneseq
      %v3241 = vshrl.u32 %v3240, 7
      %v3242 = vsub.s32 %v3239, %v3241
      %v3243 = vrot.slane %v2860, %v3242
      %v3245 = vunpack.c.l.s4 1983009808
      %v3246 = vunpack.c.0.s8 %v3245
      %v3247 = vlaneseq
      %v3248 = vshrl.u32 %v3247, 7
      %v3249 = vsub.s32 %v3246, %v3248
      %v3250 = vrot.slane %v3236, %v3249
      %v3251 = vcombine.high %v3243, %v3243
      %v3252 = vcombine.high %v3250, %v3250
      %v3253 = vcombine.high %v2865, %v2865
      %v3255 = vunpack.c.l.s4 1983009808
      %v3256 = vunpack.c.0.s8 %v3255
      %v3257 = vlaneseq
      %v3258 = vshrl.u32 %v3257, 7
      %v3259 = vsub.s32 %v3256, %v3258
      %v3260 = vrot.slane %v2865, %v3259
      %v3262 = vunpack.c.l.s4 1983009808
      %v3263 = vunpack.c.0.s8 %v3262
      %v3264 = vlaneseq
      %v3265 = vshrl.u32 %v3264, 7
      %v3266 = vsub.s32 %v3263, %v3265
      %v3267 = vrot.slane %v3253, %v3266
      %v3268 = vcombine.high %v3260, %v3260
      %v3269 = vcombine.high %v3267, %v3267
      %v3271 = vunpack.c.l.s4 1983009808
      %v3272 = vunpack.c.0.s8 %v3271
      %v3273 = vlaneseq
      %v3274 = vshrl.u32 %v3273, 7
      %v3275 = vsub.s32 %v3272, %v3274
      %v3276 = vrot.slane %v2870, %v3275
      %v3277 = vcombine.high %v3276, %v3276
      %v3368 = vmax.f32 %v2903, 0.0
      %v3369 = vmax.f32 %v2911, 0.0
      %v3370 = vmax.f32 %v2910, 0.0
      %v3371 = vmax.f32 %v2912, 0.0
      %v3372 = vmax.f32 %v2920, 0.0
      %v3373 = vmax.f32 %v2928, 0.0
      %v3374 = vmax.f32 %v2927, 0.0
      %v3375 = vmax.f32 %v2929, 0.0
      %v3376 = vmax.f32 %v2937, 0.0
      %v3377 = vmax.f32 %v2945, 0.0
      %v3378 = vmax.f32 %v2944, 0.0
      %v3379 = vmax.f32 %v2946, 0.0
      %v3380 = vmax.f32 %v2954, 0.0
      %v3381 = vmax.f32 %v2962, 0.0
      %v3382 = vmax.f32 %v2961, 0.0
      %v3383 = vmax.f32 %v2963, 0.0
      %v3384 = vmax.f32 %v2971, 0.0
      %v3385 = vmax.f32 %v2979, 0.0
      %v3386 = vmax.f32 %v2978, 0.0
      %v3387 = vmax.f32 %v2980, 0.0
      %v3388 = vmax.f32 %v2988, 0.0
      %v3389 = vmax.f32 %v2996, 0.0
      %v3390 = vmax.f32 %v2995, 0.0
      %v3391 = vmax.f32 %v2997, 0.0
      %v3392 = vmax.f32 %v3005, 0.0
      %v3393 = vmax.f32 %v3013, 0.0
      %v3394 = vmax.f32 %v3012, 0.0
      %v3395 = vmax.f32 %v3014, 0.0
      %v3396 = vmax.f32 %v3022, 0.0
      %v3397 = vmax.f32 %v3030, 0.0
      %v3398 = vmax.f32 %v3029, 0.0
      %v3399 = vmax.f32 %v3031, 0.0
      %v3400 = vmax.f32 %v3039, 0.0
      %v3401 = vmax.f32 %v3047, 0.0
      %v3402 = vmax.f32 %v3046, 0.0
      %v3403 = vmax.f32 %v3048, 0.0
      %v3404 = vmax.f32 %v3056, 0.0
      %v3405 = vmax.f32 %v3064, 0.0
      %v3406 = vmax.f32 %v3063, 0.0
      %v3407 = vmax.f32 %v3065, 0.0
      %v3408 = vmax.f32 %v3073, 0.0
      %v3409 = vmax.f32 %v3081, 0.0
      %v3410 = vmax.f32 %v3080, 0.0
      %v3411 = vmax.f32 %v3082, 0.0
      %v3412 = vmax.f32 %v3090, 0.0
      %v3413 = vmax.f32 %v3098, 0.0
      %v3414 = vmax.f32 %v3097, 0.0
      %v3415 = vmax.f32 %v3099, 0.0
      %v3416 = vmax.f32 %v3107, 0.0
      %v3417 = vmax.f32 %v3115, 0.0
      %v3418 = vmax.f32 %v3114, 0.0
      %v3419 = vmax.f32 %v3116, 0.0
      %v3420 = vmax.f32 %v3124, 0.0
      %v3421 = vmax.f32 %v3132, 0.0
      %v3422 = vmax.f32 %v3131, 0.0
      %v3423 = vmax.f32 %v3133, 0.0
      %v3424 = vmax.f32 %v3141, 0.0
      %v3425 = vmax.f32 %v3149, 0.0
      %v3426 = vmax.f32 %v3148, 0.0
      %v3427 = vmax.f32 %v3150, 0.0
      %v3428 = vmax.f32 %v3158, 0.0
      %v3429 = vmax.f32 %v3166, 0.0
      %v3430 = vmax.f32 %v3165, 0.0
      %v3431 = vmax.f32 %v3167, 0.0
      %v3432 = vmax.f32 %v3175, 0.0
      %v3433 = vmax.f32 %v3183, 0.0
      %v3434 = vmax.f32 %v3182, 0.0
      %v3435 = vmax.f32 %v3184, 0.0
      %v3436 = vmax.f32 %v3192, 0.0
      %v3437 = vmax.f32 %v3200, 0.0
      %v3438 = vmax.f32 %v3199, 0.0
      %v3439 = vmax.f32 %v3201, 0.0
      %v3440 = vmax.f32 %v3209, 0.0
      %v3441 = vmax.f32 %v3217, 0.0
      %v3442 = vmax.f32 %v3216, 0.0
      %v3443 = vmax.f32 %v3218, 0.0
      %v3444 = vmax.f32 %v3226, 0.0
      %v3445 = vmax.f32 %v3234, 0.0
      %v3446 = vmax.f32 %v3233, 0.0
      %v3447 = vmax.f32 %v3235, 0.0
      %v3448 = vmax.f32 %v3243, 0.0
      %v3449 = vmax.f32 %v3251, 0.0
      %v3450 = vmax.f32 %v3250, 0.0
      %v3451 = vmax.f32 %v3252, 0.0
      %v3452 = vmax.f32 %v3260, 0.0
      %v3453 = vmax.f32 %v3268, 0.0
      %v3454 = vmax.f32 %v3267, 0.0
      %v3455 = vmax.f32 %v3269, 0.0
      %v3456 = vmax.f32 %v3276, 0.0
      %v3457 = vmax.f32 %v3277, 0.0
      %s3458 = ssub.s32 %s250, 1
      %v3459 = vstv %s3458
      %v3460 = vadd.s32 %v3459, 1
      %v3461 = vadd.s32 %v3459, 2
      %v3462 = vadd.s32 %v3459, 3
      %v3463 = vadd.s32 %v3459, 4
      %v3464 = vadd.s32 %v3459, 5
      %v3465 = vadd.s32 %v3459, 6
      %v3466 = vadd.s32 %v3459, 7
      %v3467 = vadd.s32 %v3459, 8
      %v3468 = vadd.s32 %v3459, 9
      %v3469 = vlaneseq
      %v3470 = vshrl.u32 %v3469, 7
      %v3471 = vadd.s32 %v3470, 8
      %v3472 = vadd.s32 %v3470, 16
      %v3473 = vsub.s32 %v3470, 1
      %v3474 = vsub.s32 %v3471, 1
      %v3475 = vsub.s32 %v3472, 1
      %vm3476 = vcmp.ge.s32.totalorder %v3459, 0
      %vm3477 = vcmp.ge.s32.totalorder %v3460, 0
      %vm3478 = vcmp.ge.s32.totalorder %v3461, 0
      %vm3479 = vcmp.ge.s32.totalorder %v3462, 0
      %vm3480 = vcmp.ge.s32.totalorder %v3463, 0
      %vm3481 = vcmp.ge.s32.totalorder %v3464, 0
      %vm3482 = vcmp.ge.s32.totalorder %v3465, 0
      %vm3483 = vcmp.ge.s32.totalorder %v3466, 0
      %vm3484 = vcmp.ge.s32.totalorder %v3467, 0
      %vm3485 = vcmp.ge.s32.totalorder %v3468, 0
      %vm3486 = vcmp.lt.s32.totalorder %v3459, 16
      %vm3487 = vcmp.lt.s32.totalorder %v3460, 16
      %vm3488 = vcmp.lt.s32.totalorder %v3461, 16
      %vm3489 = vcmp.lt.s32.totalorder %v3462, 16
      %vm3490 = vcmp.lt.s32.totalorder %v3463, 16
      %vm3491 = vcmp.lt.s32.totalorder %v3464, 16
      %vm3492 = vcmp.lt.s32.totalorder %v3465, 16
      %vm3493 = vcmp.lt.s32.totalorder %v3466, 16
      %vm3494 = vcmp.lt.s32.totalorder %v3467, 16
      %vm3495 = vcmp.lt.s32.totalorder %v3468, 16
      %vm3496 = vmand %vm3476, %vm3486
      %vm3497 = vmand %vm3477, %vm3487
      %vm3498 = vmand %vm3478, %vm3488
      %vm3499 = vmand %vm3479, %vm3489
      %vm3500 = vmand %vm3480, %vm3490
      %vm3501 = vmand %vm3481, %vm3491
      %vm3502 = vmand %vm3482, %vm3492
      %vm3503 = vmand %vm3483, %vm3493
      %vm3504 = vmand %vm3484, %vm3494
      %vm3505 = vmand %vm3485, %vm3495
      %vm3506 = vcmp.ge.s32.totalorder %v3473, 0
      %vm3507 = vcmp.ge.s32.totalorder %v3474, 0
      %vm3508 = vcmp.ge.s32.totalorder %v3475, 0
      %vm3509 = vmand %vm3496, %vm3506
      %vm3510 = vmand %vm3496, %vm3507
      %vm3511 = vmand %vm3496, %vm3508
      %vm3512 = vmand %vm3497, %vm3506
      %vm3513 = vmand %vm3497, %vm3507
      %vm3514 = vmand %vm3497, %vm3508
      %vm3515 = vmand %vm3498, %vm3506
      %vm3516 = vmand %vm3498, %vm3507
      %vm3517 = vmand %vm3498, %vm3508
      %vm3518 = vmand %vm3499, %vm3506
      %vm3519 = vmand %vm3499, %vm3507
      %vm3520 = vmand %vm3499, %vm3508
      %vm3521 = vmand %vm3500, %vm3506
      %vm3522 = vmand %vm3500, %vm3507
      %vm3523 = vmand %vm3500, %vm3508
      %vm3524 = vmand %vm3501, %vm3506
      %vm3525 = vmand %vm3501, %vm3507
      %vm3526 = vmand %vm3501, %vm3508
      %vm3527 = vmand %vm3502, %vm3506
      %vm3528 = vmand %vm3502, %vm3507
      %vm3529 = vmand %vm3502, %vm3508
      %vm3530 = vmand %vm3503, %vm3506
      %vm3531 = vmand %vm3503, %vm3507
      %vm3532 = vmand %vm3503, %vm3508
      %vm3533 = vmand %vm3504, %vm3506
      %vm3534 = vmand %vm3504, %vm3507
      %vm3535 = vmand %vm3504, %vm3508
      %vm3536 = vmand %vm3505, %vm3506
      %vm3537 = vmand %vm3505, %vm3507
      %vm3538 = vmand %vm3505, %vm3508
      %vm3539 = vcmp.lt.s32.totalorder %v3473, 16
      %vm3540 = vcmp.lt.s32.totalorder %v3474, 16
      %vm3541 = vcmp.lt.s32.totalorder %v3475, 16
      %vm3542 = vmand %vm3509, %vm3539
      %vm3543 = vmand %vm3510, %vm3540
      %vm3544 = vmand %vm3511, %vm3541
      %vm3545 = vmand %vm3512, %vm3539
      %vm3546 = vmand %vm3513, %vm3540
      %vm3547 = vmand %vm3514, %vm3541
      %vm3548 = vmand %vm3515, %vm3539
      %vm3549 = vmand %vm3516, %vm3540
      %vm3550 = vmand %vm3517, %vm3541
      %vm3551 = vmand %vm3518, %vm3539
      %vm3552 = vmand %vm3519, %vm3540
      %vm3553 = vmand %vm3520, %vm3541
      %vm3554 = vmand %vm3521, %vm3539
      %vm3555 = vmand %vm3522, %vm3540
      %vm3556 = vmand %vm3523, %vm3541
      %vm3557 = vmand %vm3524, %vm3539
      %vm3558 = vmand %vm3525, %vm3540
      %vm3559 = vmand %vm3526, %vm3541
      %vm3560 = vmand %vm3527, %vm3539
      %vm3561 = vmand %vm3528, %vm3540
      %vm3562 = vmand %vm3529, %vm3541
      %vm3563 = vmand %vm3530, %vm3539
      %vm3564 = vmand %vm3531, %vm3540
      %vm3565 = vmand %vm3532, %vm3541
      %vm3566 = vmand %vm3533, %vm3539
      %vm3567 = vmand %vm3534, %vm3540
      %vm3568 = vmand %vm3535, %vm3541
      %vm3569 = vmand %vm3536, %vm3539
      %vm3570 = vmand %vm3537, %vm3540
      %vm3571 = vmand %vm3538, %vm3541
      %v3572 = vsel %vm3542, 1, 0
      %v3573 = vsel %vm3543, 1, 0
      %v3574 = vsel %vm3544, 1, 0
      %v3575 = vsel %vm3545, 1, 0
      %v3576 = vsel %vm3546, 1, 0
      %v3577 = vsel %vm3547, 1, 0
      %v3578 = vsel %vm3548, 1, 0
      %v3579 = vsel %vm3549, 1, 0
      %v3580 = vsel %vm3550, 1, 0
      %v3581 = vsel %vm3551, 1, 0
      %v3582 = vsel %vm3552, 1, 0
      %v3583 = vsel %vm3553, 1, 0
      %v3584 = vsel %vm3554, 1, 0
      %v3585 = vsel %vm3555, 1, 0
      %v3586 = vsel %vm3556, 1, 0
      %v3587 = vsel %vm3557, 1, 0
      %v3588 = vsel %vm3558, 1, 0
      %v3589 = vsel %vm3559, 1, 0
      %v3590 = vsel %vm3560, 1, 0
      %v3591 = vsel %vm3561, 1, 0
      %v3592 = vsel %vm3562, 1, 0
      %v3593 = vsel %vm3563, 1, 0
      %v3594 = vsel %vm3564, 1, 0
      %v3595 = vsel %vm3565, 1, 0
      %v3596 = vsel %vm3566, 1, 0
      %v3597 = vsel %vm3567, 1, 0
      %v3598 = vsel %vm3568, 1, 0
      %v3599 = vsel %vm3569, 1, 0
      %v3600 = vsel %vm3570, 1, 0
      %v3601 = vsel %vm3571, 1, 0
      %vm3602 = vcmp.eq.s32.totalorder %v3572, 1
      %vm3603 = vcmp.eq.s32.totalorder %v3573, 1
      %vm3604 = vcmp.eq.s32.totalorder %v3574, 1
      %vm3605 = vcmp.eq.s32.totalorder %v3575, 1
      %vm3606 = vcmp.eq.s32.totalorder %v3576, 1
      %vm3607 = vcmp.eq.s32.totalorder %v3577, 1
      %vm3608 = vcmp.eq.s32.totalorder %v3578, 1
      %vm3609 = vcmp.eq.s32.totalorder %v3579, 1
      %vm3610 = vcmp.eq.s32.totalorder %v3580, 1
      %vm3611 = vcmp.eq.s32.totalorder %v3581, 1
      %vm3612 = vcmp.eq.s32.totalorder %v3582, 1
      %vm3613 = vcmp.eq.s32.totalorder %v3583, 1
      %vm3614 = vcmp.eq.s32.totalorder %v3584, 1
      %vm3615 = vcmp.eq.s32.totalorder %v3585, 1
      %vm3616 = vcmp.eq.s32.totalorder %v3586, 1
      %vm3617 = vcmp.eq.s32.totalorder %v3587, 1
      %vm3618 = vcmp.eq.s32.totalorder %v3588, 1
      %vm3619 = vcmp.eq.s32.totalorder %v3589, 1
      %vm3620 = vcmp.eq.s32.totalorder %v3590, 1
      %vm3621 = vcmp.eq.s32.totalorder %v3591, 1
      %vm3622 = vcmp.eq.s32.totalorder %v3592, 1
      %vm3623 = vcmp.eq.s32.totalorder %v3593, 1
      %vm3624 = vcmp.eq.s32.totalorder %v3594, 1
      %vm3625 = vcmp.eq.s32.totalorder %v3595, 1
      %vm3626 = vcmp.eq.s32.totalorder %v3596, 1
      %vm3627 = vcmp.eq.s32.totalorder %v3597, 1
      %vm3628 = vcmp.eq.s32.totalorder %v3598, 1
      %vm3629 = vcmp.eq.s32.totalorder %v3599, 1
      %vm3630 = vcmp.eq.s32.totalorder %v3600, 1
      %vm3631 = vcmp.eq.s32.totalorder %v3601, 1
      %v3722 = vcombine.low %v3368, %v3369
      %v3723 = vcombine.low %v3370, %v3371
      %v3725 = vunpack.c.l.s4 1983009808
      %v3726 = vunpack.c.0.s8 %v3725
      %v3727 = vlaneseq
      %v3728 = vshrl.u32 %v3727, 7
      %v3729 = vsub.s32 %v3726, %v3728
      %v3730 = vrot.slane %v3722, %v3729
      %v3732 = vunpack.c.l.s4 1983009808
      %v3733 = vunpack.c.0.s8 %v3732
      %v3734 = vlaneseq
      %v3735 = vshrl.u32 %v3734, 7
      %v3736 = vsub.s32 %v3733, %v3735
      %v3737 = vrot.slane %v3723, %v3736
      %v3738 = vcombine.low %v3730, %v3737
      %v3739 = vcombine.low %v3372, %v3373
      %v3740 = vcombine.low %v3374, %v3375
      %v3742 = vunpack.c.l.s4 1983009808
      %v3743 = vunpack.c.0.s8 %v3742
      %v3744 = vlaneseq
      %v3745 = vshrl.u32 %v3744, 7
      %v3746 = vsub.s32 %v3743, %v3745
      %v3747 = vrot.slane %v3739, %v3746
      %v3749 = vunpack.c.l.s4 1983009808
      %v3750 = vunpack.c.0.s8 %v3749
      %v3751 = vlaneseq
      %v3752 = vshrl.u32 %v3751, 7
      %v3753 = vsub.s32 %v3750, %v3752
      %v3754 = vrot.slane %v3740, %v3753
      %v3755 = vcombine.low %v3747, %v3754
      %v3757 = vunpack.c.l.s4 1983009808
      %v3758 = vunpack.c.0.s8 %v3757
      %v3759 = vlaneseq
      %v3760 = vshrl.u32 %v3759, 7
      %v3761 = vsub.s32 %v3758, %v3760
      %v3762 = vrot.slane %v3376, %v3761
      %v3763 = vcombine.low %v3377, %v3378
      %v3764 = vcombine.low %v3379, %v3380
      %v3766 = vunpack.c.l.s4 1983009808
      %v3767 = vunpack.c.0.s8 %v3766
      %v3768 = vlaneseq
      %v3769 = vshrl.u32 %v3768, 7
      %v3770 = vsub.s32 %v3767, %v3769
      %v3771 = vrot.slane %v3763, %v3770
      %v3773 = vunpack.c.l.s4 1983009808
      %v3774 = vunpack.c.0.s8 %v3773
      %v3775 = vlaneseq
      %v3776 = vshrl.u32 %v3775, 7
      %v3777 = vsub.s32 %v3774, %v3776
      %v3778 = vrot.slane %v3764, %v3777
      %v3779 = vcombine.low %v3771, %v3778
      %v3780 = vcombine.low %v3381, %v3382
      %v3781 = vcombine.low %v3383, %v3384
      %v3783 = vunpack.c.l.s4 1983009808
      %v3784 = vunpack.c.0.s8 %v3783
      %v3785 = vlaneseq
      %v3786 = vshrl.u32 %v3785, 7
      %v3787 = vsub.s32 %v3784, %v3786
      %v3788 = vrot.slane %v3780, %v3787
      %v3790 = vunpack.c.l.s4 1983009808
      %v3791 = vunpack.c.0.s8 %v3790
      %v3792 = vlaneseq
      %v3793 = vshrl.u32 %v3792, 7
      %v3794 = vsub.s32 %v3791, %v3793
      %v3795 = vrot.slane %v3781, %v3794
      %v3796 = vcombine.low %v3788, %v3795
      %v3798 = vunpack.c.l.s4 1983009808
      %v3799 = vunpack.c.0.s8 %v3798
      %v3800 = vlaneseq
      %v3801 = vshrl.u32 %v3800, 7
      %v3802 = vsub.s32 %v3799, %v3801
      %v3803 = vrot.slane %v3385, %v3802
      %v3804 = vcombine.low %v3386, %v3387
      %v3805 = vcombine.low %v3388, %v3389
      %v3807 = vunpack.c.l.s4 1983009808
      %v3808 = vunpack.c.0.s8 %v3807
      %v3809 = vlaneseq
      %v3810 = vshrl.u32 %v3809, 7
      %v3811 = vsub.s32 %v3808, %v3810
      %v3812 = vrot.slane %v3804, %v3811
      %v3814 = vunpack.c.l.s4 1983009808
      %v3815 = vunpack.c.0.s8 %v3814
      %v3816 = vlaneseq
      %v3817 = vshrl.u32 %v3816, 7
      %v3818 = vsub.s32 %v3815, %v3817
      %v3819 = vrot.slane %v3805, %v3818
      %v3820 = vcombine.low %v3812, %v3819
      %v3821 = vcombine.low %v3390, %v3391
      %v3822 = vcombine.low %v3392, %v3393
      %v3824 = vunpack.c.l.s4 1983009808
      %v3825 = vunpack.c.0.s8 %v3824
      %v3826 = vlaneseq
      %v3827 = vshrl.u32 %v3826, 7
      %v3828 = vsub.s32 %v3825, %v3827
      %v3829 = vrot.slane %v3821, %v3828
      %v3831 = vunpack.c.l.s4 1983009808
      %v3832 = vunpack.c.0.s8 %v3831
      %v3833 = vlaneseq
      %v3834 = vshrl.u32 %v3833, 7
      %v3835 = vsub.s32 %v3832, %v3834
      %v3836 = vrot.slane %v3822, %v3835
      %v3837 = vcombine.low %v3829, %v3836
      %v3839 = vunpack.c.l.s4 1983009808
      %v3840 = vunpack.c.0.s8 %v3839
      %v3841 = vlaneseq
      %v3842 = vshrl.u32 %v3841, 7
      %v3843 = vsub.s32 %v3840, %v3842
      %v3844 = vrot.slane %v3394, %v3843
      %v3845 = vcombine.low %v3395, %v3396
      %v3846 = vcombine.low %v3397, %v3398
      %v3848 = vunpack.c.l.s4 1983009808
      %v3849 = vunpack.c.0.s8 %v3848
      %v3850 = vlaneseq
      %v3851 = vshrl.u32 %v3850, 7
      %v3852 = vsub.s32 %v3849, %v3851
      %v3853 = vrot.slane %v3845, %v3852
      %v3855 = vunpack.c.l.s4 1983009808
      %v3856 = vunpack.c.0.s8 %v3855
      %v3857 = vlaneseq
      %v3858 = vshrl.u32 %v3857, 7
      %v3859 = vsub.s32 %v3856, %v3858
      %v3860 = vrot.slane %v3846, %v3859
      %v3861 = vcombine.low %v3853, %v3860
      %v3862 = vcombine.low %v3399, %v3400
      %v3863 = vcombine.low %v3401, %v3402
      %v3865 = vunpack.c.l.s4 1983009808
      %v3866 = vunpack.c.0.s8 %v3865
      %v3867 = vlaneseq
      %v3868 = vshrl.u32 %v3867, 7
      %v3869 = vsub.s32 %v3866, %v3868
      %v3870 = vrot.slane %v3862, %v3869
      %v3872 = vunpack.c.l.s4 1983009808
      %v3873 = vunpack.c.0.s8 %v3872
      %v3874 = vlaneseq
      %v3875 = vshrl.u32 %v3874, 7
      %v3876 = vsub.s32 %v3873, %v3875
      %v3877 = vrot.slane %v3863, %v3876
      %v3878 = vcombine.low %v3870, %v3877
      %v3880 = vunpack.c.l.s4 1983009808
      %v3881 = vunpack.c.0.s8 %v3880
      %v3882 = vlaneseq
      %v3883 = vshrl.u32 %v3882, 7
      %v3884 = vsub.s32 %v3881, %v3883
      %v3885 = vrot.slane %v3403, %v3884
      %v3886 = vcombine.low %v3404, %v3405
      %v3887 = vcombine.low %v3406, %v3407
      %v3889 = vunpack.c.l.s4 1983009808
      %v3890 = vunpack.c.0.s8 %v3889
      %v3891 = vlaneseq
      %v3892 = vshrl.u32 %v3891, 7
      %v3893 = vsub.s32 %v3890, %v3892
      %v3894 = vrot.slane %v3886, %v3893
      %v3896 = vunpack.c.l.s4 1983009808
      %v3897 = vunpack.c.0.s8 %v3896
      %v3898 = vlaneseq
      %v3899 = vshrl.u32 %v3898, 7
      %v3900 = vsub.s32 %v3897, %v3899
      %v3901 = vrot.slane %v3887, %v3900
      %v3902 = vcombine.low %v3894, %v3901
      %v3903 = vcombine.low %v3408, %v3409
      %v3904 = vcombine.low %v3410, %v3411
      %v3906 = vunpack.c.l.s4 1983009808
      %v3907 = vunpack.c.0.s8 %v3906
      %v3908 = vlaneseq
      %v3909 = vshrl.u32 %v3908, 7
      %v3910 = vsub.s32 %v3907, %v3909
      %v3911 = vrot.slane %v3903, %v3910
      %v3913 = vunpack.c.l.s4 1983009808
      %v3914 = vunpack.c.0.s8 %v3913
      %v3915 = vlaneseq
      %v3916 = vshrl.u32 %v3915, 7
      %v3917 = vsub.s32 %v3914, %v3916
      %v3918 = vrot.slane %v3904, %v3917
      %v3919 = vcombine.low %v3911, %v3918
      %v3921 = vunpack.c.l.s4 1983009808
      %v3922 = vunpack.c.0.s8 %v3921
      %v3923 = vlaneseq
      %v3924 = vshrl.u32 %v3923, 7
      %v3925 = vsub.s32 %v3922, %v3924
      %v3926 = vrot.slane %v3412, %v3925
      %v3927 = vcombine.low %v3413, %v3414
      %v3928 = vcombine.low %v3415, %v3416
      %v3930 = vunpack.c.l.s4 1983009808
      %v3931 = vunpack.c.0.s8 %v3930
      %v3932 = vlaneseq
      %v3933 = vshrl.u32 %v3932, 7
      %v3934 = vsub.s32 %v3931, %v3933
      %v3935 = vrot.slane %v3927, %v3934
      %v3937 = vunpack.c.l.s4 1983009808
      %v3938 = vunpack.c.0.s8 %v3937
      %v3939 = vlaneseq
      %v3940 = vshrl.u32 %v3939, 7
      %v3941 = vsub.s32 %v3938, %v3940
      %v3942 = vrot.slane %v3928, %v3941
      %v3943 = vcombine.low %v3935, %v3942
      %v3944 = vcombine.low %v3417, %v3418
      %v3945 = vcombine.low %v3419, %v3420
      %v3947 = vunpack.c.l.s4 1983009808
      %v3948 = vunpack.c.0.s8 %v3947
      %v3949 = vlaneseq
      %v3950 = vshrl.u32 %v3949, 7
      %v3951 = vsub.s32 %v3948, %v3950
      %v3952 = vrot.slane %v3944, %v3951
      %v3954 = vunpack.c.l.s4 1983009808
      %v3955 = vunpack.c.0.s8 %v3954
      %v3956 = vlaneseq
      %v3957 = vshrl.u32 %v3956, 7
      %v3958 = vsub.s32 %v3955, %v3957
      %v3959 = vrot.slane %v3945, %v3958
      %v3960 = vcombine.low %v3952, %v3959
      %v3962 = vunpack.c.l.s4 1983009808
      %v3963 = vunpack.c.0.s8 %v3962
      %v3964 = vlaneseq
      %v3965 = vshrl.u32 %v3964, 7
      %v3966 = vsub.s32 %v3963, %v3965
      %v3967 = vrot.slane %v3421, %v3966
      %v3968 = vcombine.low %v3422, %v3423
      %v3969 = vcombine.low %v3424, %v3425
      %v3971 = vunpack.c.l.s4 1983009808
      %v3972 = vunpack.c.0.s8 %v3971
      %v3973 = vlaneseq
      %v3974 = vshrl.u32 %v3973, 7
      %v3975 = vsub.s32 %v3972, %v3974
      %v3976 = vrot.slane %v3968, %v3975
      %v3978 = vunpack.c.l.s4 1983009808
      %v3979 = vunpack.c.0.s8 %v3978
      %v3980 = vlaneseq
      %v3981 = vshrl.u32 %v3980, 7
      %v3982 = vsub.s32 %v3979, %v3981
      %v3983 = vrot.slane %v3969, %v3982
      %v3984 = vcombine.low %v3976, %v3983
      %v3985 = vcombine.low %v3426, %v3427
      %v3986 = vcombine.low %v3428, %v3429
      %v3988 = vunpack.c.l.s4 1983009808
      %v3989 = vunpack.c.0.s8 %v3988
      %v3990 = vlaneseq
      %v3991 = vshrl.u32 %v3990, 7
      %v3992 = vsub.s32 %v3989, %v3991
      %v3993 = vrot.slane %v3985, %v3992
      %v3995 = vunpack.c.l.s4 1983009808
      %v3996 = vunpack.c.0.s8 %v3995
      %v3997 = vlaneseq
      %v3998 = vshrl.u32 %v3997, 7
      %v3999 = vsub.s32 %v3996, %v3998
      %v4000 = vrot.slane %v3986, %v3999
      %v4001 = vcombine.low %v3993, %v4000
      %v4003 = vunpack.c.l.s4 1983009808
      %v4004 = vunpack.c.0.s8 %v4003
      %v4005 = vlaneseq
      %v4006 = vshrl.u32 %v4005, 7
      %v4007 = vsub.s32 %v4004, %v4006
      %v4008 = vrot.slane %v3430, %v4007
      %v4009 = vcombine.low %v3431, %v3432
      %v4010 = vcombine.low %v3433, %v3434
      %v4012 = vunpack.c.l.s4 1983009808
      %v4013 = vunpack.c.0.s8 %v4012
      %v4014 = vlaneseq
      %v4015 = vshrl.u32 %v4014, 7
      %v4016 = vsub.s32 %v4013, %v4015
      %v4017 = vrot.slane %v4009, %v4016
      %v4019 = vunpack.c.l.s4 1983009808
      %v4020 = vunpack.c.0.s8 %v4019
      %v4021 = vlaneseq
      %v4022 = vshrl.u32 %v4021, 7
      %v4023 = vsub.s32 %v4020, %v4022
      %v4024 = vrot.slane %v4010, %v4023
      %v4025 = vcombine.low %v4017, %v4024
      %v4026 = vcombine.low %v3435, %v3436
      %v4027 = vcombine.low %v3437, %v3438
      %v4029 = vunpack.c.l.s4 1983009808
      %v4030 = vunpack.c.0.s8 %v4029
      %v4031 = vlaneseq
      %v4032 = vshrl.u32 %v4031, 7
      %v4033 = vsub.s32 %v4030, %v4032
      %v4034 = vrot.slane %v4026, %v4033
      %v4036 = vunpack.c.l.s4 1983009808
      %v4037 = vunpack.c.0.s8 %v4036
      %v4038 = vlaneseq
      %v4039 = vshrl.u32 %v4038, 7
      %v4040 = vsub.s32 %v4037, %v4039
      %v4041 = vrot.slane %v4027, %v4040
      %v4042 = vcombine.low %v4034, %v4041
      %v4044 = vunpack.c.l.s4 1983009808
      %v4045 = vunpack.c.0.s8 %v4044
      %v4046 = vlaneseq
      %v4047 = vshrl.u32 %v4046, 7
      %v4048 = vsub.s32 %v4045, %v4047
      %v4049 = vrot.slane %v3439, %v4048
      %v4050 = vcombine.low %v3440, %v3441
      %v4051 = vcombine.low %v3442, %v3443
      %v4053 = vunpack.c.l.s4 1983009808
      %v4054 = vunpack.c.0.s8 %v4053
      %v4055 = vlaneseq
      %v4056 = vshrl.u32 %v4055, 7
      %v4057 = vsub.s32 %v4054, %v4056
      %v4058 = vrot.slane %v4050, %v4057
      %v4060 = vunpack.c.l.s4 1983009808
      %v4061 = vunpack.c.0.s8 %v4060
      %v4062 = vlaneseq
      %v4063 = vshrl.u32 %v4062, 7
      %v4064 = vsub.s32 %v4061, %v4063
      %v4065 = vrot.slane %v4051, %v4064
      %v4066 = vcombine.low %v4058, %v4065
      %v4067 = vcombine.low %v3444, %v3445
      %v4068 = vcombine.low %v3446, %v3447
      %v4070 = vunpack.c.l.s4 1983009808
      %v4071 = vunpack.c.0.s8 %v4070
      %v4072 = vlaneseq
      %v4073 = vshrl.u32 %v4072, 7
      %v4074 = vsub.s32 %v4071, %v4073
      %v4075 = vrot.slane %v4067, %v4074
      %v4077 = vunpack.c.l.s4 1983009808
      %v4078 = vunpack.c.0.s8 %v4077
      %v4079 = vlaneseq
      %v4080 = vshrl.u32 %v4079, 7
      %v4081 = vsub.s32 %v4078, %v4080
      %v4082 = vrot.slane %v4068, %v4081
      %v4083 = vcombine.low %v4075, %v4082
      %v4085 = vunpack.c.l.s4 1983009808
      %v4086 = vunpack.c.0.s8 %v4085
      %v4087 = vlaneseq
      %v4088 = vshrl.u32 %v4087, 7
      %v4089 = vsub.s32 %v4086, %v4088
      %v4090 = vrot.slane %v3448, %v4089
      %v4091 = vcombine.low %v3449, %v3450
      %v4092 = vcombine.low %v3451, %v3452
      %v4094 = vunpack.c.l.s4 1983009808
      %v4095 = vunpack.c.0.s8 %v4094
      %v4096 = vlaneseq
      %v4097 = vshrl.u32 %v4096, 7
      %v4098 = vsub.s32 %v4095, %v4097
      %v4099 = vrot.slane %v4091, %v4098
      %v4101 = vunpack.c.l.s4 1983009808
      %v4102 = vunpack.c.0.s8 %v4101
      %v4103 = vlaneseq
      %v4104 = vshrl.u32 %v4103, 7
      %v4105 = vsub.s32 %v4102, %v4104
      %v4106 = vrot.slane %v4092, %v4105
      %v4107 = vcombine.low %v4099, %v4106
      %v4108 = vcombine.low %v3453, %v3454
      %v4109 = vcombine.low %v3455, %v3456
      %v4111 = vunpack.c.l.s4 1983009808
      %v4112 = vunpack.c.0.s8 %v4111
      %v4113 = vlaneseq
      %v4114 = vshrl.u32 %v4113, 7
      %v4115 = vsub.s32 %v4112, %v4114
      %v4116 = vrot.slane %v4108, %v4115
      %v4118 = vunpack.c.l.s4 1983009808
      %v4119 = vunpack.c.0.s8 %v4118
      %v4120 = vlaneseq
      %v4121 = vshrl.u32 %v4120, 7
      %v4122 = vsub.s32 %v4119, %v4121
      %v4123 = vrot.slane %v4109, %v4122
      %v4124 = vcombine.low %v4116, %v4123
      %v4126 = vunpack.c.l.s4 1983009808
      %v4127 = vunpack.c.0.s8 %v4126
      %v4128 = vlaneseq
      %v4129 = vshrl.u32 %v4128, 7
      %v4130 = vsub.s32 %v4127, %v4129
      %v4131 = vrot.slane %v3457, %v4130
      %v4162 = vsel %vm3602, %v3738, 0.0
      %v4163 = vsel %vm3603, %v3755, 0.0
      %v4164 = vsel %vm3604, %v3762, 0.0
      %v4165 = vsel %vm3605, %v3779, 0.0
      %v4166 = vsel %vm3606, %v3796, 0.0
      %v4167 = vsel %vm3607, %v3803, 0.0
      %v4168 = vsel %vm3608, %v3820, 0.0
      %v4169 = vsel %vm3609, %v3837, 0.0
      %v4170 = vsel %vm3610, %v3844, 0.0
      %v4171 = vsel %vm3611, %v3861, 0.0
      %v4172 = vsel %vm3612, %v3878, 0.0
      %v4173 = vsel %vm3613, %v3885, 0.0
      %v4174 = vsel %vm3614, %v3902, 0.0
      %v4175 = vsel %vm3615, %v3919, 0.0
      %v4176 = vsel %vm3616, %v3926, 0.0
      %v4177 = vsel %vm3617, %v3943, 0.0
      %v4178 = vsel %vm3618, %v3960, 0.0
      %v4179 = vsel %vm3619, %v3967, 0.0
      %v4180 = vsel %vm3620, %v3984, 0.0
      %v4181 = vsel %vm3621, %v4001, 0.0
      %v4182 = vsel %vm3622, %v4008, 0.0
      %v4183 = vsel %vm3623, %v4025, 0.0
      %v4184 = vsel %vm3624, %v4042, 0.0
      %v4185 = vsel %vm3625, %v4049, 0.0
      %v4186 = vsel %vm3626, %v4066, 0.0
      %v4187 = vsel %vm3627, %v4083, 0.0
      %v4188 = vsel %vm3628, %v4090, 0.0
      %v4189 = vsel %vm3629, %v4107, 0.0
      %v4190 = vsel %vm3630, %v4124, 0.0
      %v4191 = vsel %vm3631, %v4131, 0.0
      %v4192 = vld [vmem:[%s3] sm:$0xff]
      %v4193 = vld [vmem:[%s3 + $0x8] sm:$0xff]
      %v4194 = vld [vmem:[%s3 + $0x10] sm:$0xff]
      %v4195 = vld [vmem:[%s3 + $0x18] sm:$0xff]
      %v4196 = vld [vmem:[%s3 + $0x20] sm:$0xf]
      %vm4221 = vcmask 1046528
      %v4222 = vrot.slane %v4162, 1
      %v4223 = vrot.slane %v4163, 1
      %v4224 = vsel %vm4221, %v4222, %v4223
      %v4225 = vrot.slane %v4164, 1
      %v4226 = vsel %vm4221, %v4223, %v4225
      %v4227 = vrot.slane %v4165, 1
      %v4228 = vrot.slane %v4166, 1
      %v4229 = vsel %vm4221, %v4227, %v4228
      %v4230 = vrot.slane %v4167, 1
      %v4231 = vsel %vm4221, %v4228, %v4230
      %v4232 = vrot.slane %v4168, 1
      %v4233 = vrot.slane %v4169, 1
      %v4234 = vsel %vm4221, %v4232, %v4233
      %v4235 = vrot.slane %v4170, 1
      %v4236 = vsel %vm4221, %v4233, %v4235
      %v4237 = vrot.slane %v4171, 1
      %v4238 = vrot.slane %v4172, 1
      %v4239 = vsel %vm4221, %v4237, %v4238
      %v4240 = vrot.slane %v4173, 1
      %v4241 = vsel %vm4221, %v4238, %v4240
      %v4242 = vrot.slane %v4174, 1
      %v4243 = vrot.slane %v4175, 1
      %v4244 = vsel %vm4221, %v4242, %v4243
      %v4245 = vrot.slane %v4176, 1
      %v4246 = vsel %vm4221, %v4243, %v4245
      %v4247 = vrot.slane %v4177, 1
      %v4248 = vrot.slane %v4178, 1
      %v4249 = vsel %vm4221, %v4247, %v4248
      %v4250 = vrot.slane %v4179, 1
      %v4251 = vsel %vm4221, %v4248, %v4250
      %v4252 = vrot.slane %v4180, 1
      %v4253 = vrot.slane %v4181, 1
      %v4254 = vsel %vm4221, %v4252, %v4253
      %v4255 = vrot.slane %v4182, 1
      %v4256 = vsel %vm4221, %v4253, %v4255
      %v4257 = vrot.slane %v4183, 1
      %v4258 = vrot.slane %v4184, 1
      %v4259 = vsel %vm4221, %v4257, %v4258
      %v4260 = vrot.slane %v4185, 1
      %v4261 = vsel %vm4221, %v4258, %v4260
      %4262 = vrot.lane.b32.xlu0 %v4224, 4
      %v4263 = vpop.permute.xlu0 %4262
      %4264 = vrot.lane.b32.xlu0 %v4226, 4
      %v4265 = vpop.permute.xlu0 %4264
      %4266 = vrot.lane.b32.xlu0 %v4229, 4
      %v4267 = vpop.permute.xlu0 %4266
      %4268 = vrot.lane.b32.xlu0 %v4231, 4
      %v4269 = vpop.permute.xlu0 %4268
      %4270 = vrot.lane.b32.xlu0 %v4234, 4
      %v4271 = vpop.permute.xlu0 %4270
      %4272 = vrot.lane.b32.xlu0 %v4236, 4
      %v4273 = vpop.permute.xlu0 %4272
      %4274 = vrot.lane.b32.xlu0 %v4239, 4
      %v4275 = vpop.permute.xlu0 %4274
      %4276 = vrot.lane.b32.xlu0 %v4241, 4
      %v4277 = vpop.permute.xlu0 %4276
      %4278 = vrot.lane.b32.xlu0 %v4244, 4
      %v4279 = vpop.permute.xlu0 %4278
      %4280 = vrot.lane.b32.xlu0 %v4246, 4
      %v4281 = vpop.permute.xlu0 %4280
      %4282 = vrot.lane.b32.xlu0 %v4249, 4
      %v4283 = vpop.permute.xlu0 %4282
      %4284 = vrot.lane.b32.xlu0 %v4251, 4
      %v4285 = vpop.permute.xlu0 %4284
      %4286 = vrot.lane.b32.xlu0 %v4254, 4
      %v4287 = vpop.permute.xlu0 %4286
      %4288 = vrot.lane.b32.xlu0 %v4256, 4
      %v4289 = vpop.permute.xlu0 %4288
      %4290 = vrot.lane.b32.xlu0 %v4259, 4
      %v4291 = vpop.permute.xlu0 %4290
      %4292 = vrot.lane.b32.xlu0 %v4261, 4
      %v4293 = vpop.permute.xlu0 %4292
      %vm4310 = vcmask 1045504
      %v4311 = vrot.slane %v4162, 2
      %v4312 = vrot.slane %v4163, 2
      %v4313 = vsel %vm4310, %v4311, %v4312
      %v4314 = vrot.slane %v4164, 2
      %v4315 = vsel %vm4310, %v4312, %v4314
      %v4316 = vrot.slane %v4165, 2
      %v4317 = vrot.slane %v4166, 2
      %v4318 = vsel %vm4310, %v4316, %v4317
      %v4319 = vrot.slane %v4167, 2
      %v4320 = vsel %vm4310, %v4317, %v4319
      %v4321 = vrot.slane %v4168, 2
      %v4322 = vrot.slane %v4169, 2
      %v4323 = vsel %vm4310, %v4321, %v4322
      %v4324 = vrot.slane %v4170, 2
      %v4325 = vsel %vm4310, %v4322, %v4324
      %v4326 = vrot.slane %v4171, 2
      %v4327 = vrot.slane %v4172, 2
      %v4328 = vsel %vm4310, %v4326, %v4327
      %v4329 = vrot.slane %v4173, 2
      %v4330 = vsel %vm4310, %v4327, %v4329
      %v4331 = vrot.slane %v4174, 2
      %v4332 = vrot.slane %v4175, 2
      %v4333 = vsel %vm4310, %v4331, %v4332
      %v4334 = vrot.slane %v4176, 2
      %v4335 = vsel %vm4310, %v4332, %v4334
      %v4336 = vrot.slane %v4177, 2
      %v4337 = vrot.slane %v4178, 2
      %v4338 = vsel %vm4310, %v4336, %v4337
      %v4339 = vrot.slane %v4179, 2
      %v4340 = vsel %vm4310, %v4337, %v4339
      %v4341 = vrot.slane %v4180, 2
      %v4342 = vrot.slane %v4181, 2
      %v4343 = vsel %vm4310, %v4341, %v4342
      %v4344 = vrot.slane %v4182, 2
      %v4345 = vsel %vm4310, %v4342, %v4344
      %v4346 = vrot.slane %v4183, 2
      %v4347 = vrot.slane %v4184, 2
      %v4348 = vsel %vm4310, %v4346, %v4347
      %v4349 = vrot.slane %v4185, 2
      %v4350 = vsel %vm4310, %v4347, %v4349
      %4351 = vrot.lane.b32.xlu0 %v4313, 8
      %v4352 = vpop.permute.xlu0 %4351
      %4353 = vrot.lane.b32.xlu0 %v4315, 8
      %v4354 = vpop.permute.xlu0 %4353
      %4355 = vrot.lane.b32.xlu0 %v4318, 8
      %v4356 = vpop.permute.xlu0 %4355
      %4357 = vrot.lane.b32.xlu0 %v4320, 8
      %v4358 = vpop.permute.xlu0 %4357
      %4359 = vrot.lane.b32.xlu0 %v4323, 8
      %v4360 = vpop.permute.xlu0 %4359
      %4361 = vrot.lane.b32.xlu0 %v4325, 8
      %v4362 = vpop.permute.xlu0 %4361
      %4363 = vrot.lane.b32.xlu0 %v4328, 8
      %v4364 = vpop.permute.xlu0 %4363
      %4365 = vrot.lane.b32.xlu0 %v4330, 8
      %v4366 = vpop.permute.xlu0 %4365
      %4367 = vrot.lane.b32.xlu0 %v4333, 8
      %v4368 = vpop.permute.xlu0 %4367
      %4369 = vrot.lane.b32.xlu0 %v4335, 8
      %v4370 = vpop.permute.xlu0 %4369
      %4371 = vrot.lane.b32.xlu0 %v4338, 8
      %v4372 = vpop.permute.xlu0 %4371
      %4373 = vrot.lane.b32.xlu0 %v4340, 8
      %v4374 = vpop.permute.xlu0 %4373
      %4375 = vrot.lane.b32.xlu0 %v4343, 8
      %v4376 = vpop.permute.xlu0 %4375
      %4377 = vrot.lane.b32.xlu0 %v4345, 8
      %v4378 = vpop.permute.xlu0 %4377
      %4379 = vrot.lane.b32.xlu0 %v4348, 8
      %v4380 = vpop.permute.xlu0 %4379
      %4381 = vrot.lane.b32.xlu0 %v4350, 8
      %v4382 = vpop.permute.xlu0 %4381
      %4401 = vrot.lane.b32.xlu0 %v4165, 12
      %v4402 = vpop.permute.xlu0 %4401
      %4403 = vrot.lane.b32.xlu0 %v4166, 12
      %v4404 = vpop.permute.xlu0 %4403
      %4405 = vrot.lane.b32.xlu0 %v4168, 12
      %v4406 = vpop.permute.xlu0 %4405
      %4407 = vrot.lane.b32.xlu0 %v4169, 12
      %v4408 = vpop.permute.xlu0 %4407
      %4409 = vrot.lane.b32.xlu0 %v4171, 12
      %v4410 = vpop.permute.xlu0 %4409
      %4411 = vrot.lane.b32.xlu0 %v4172, 12
      %v4412 = vpop.permute.xlu0 %4411
      %4413 = vrot.lane.b32.xlu0 %v4174, 12
      %v4414 = vpop.permute.xlu0 %4413
      %4415 = vrot.lane.b32.xlu0 %v4175, 12
      %v4416 = vpop.permute.xlu0 %4415
      %4417 = vrot.lane.b32.xlu0 %v4177, 12
      %v4418 = vpop.permute.xlu0 %4417
      %4419 = vrot.lane.b32.xlu0 %v4178, 12
      %v4420 = vpop.permute.xlu0 %4419
      %4421 = vrot.lane.b32.xlu0 %v4180, 12
      %v4422 = vpop.permute.xlu0 %4421
      %4423 = vrot.lane.b32.xlu0 %v4181, 12
      %v4424 = vpop.permute.xlu0 %4423
      %4425 = vrot.lane.b32.xlu0 %v4183, 12
      %v4426 = vpop.permute.xlu0 %4425
      %4427 = vrot.lane.b32.xlu0 %v4184, 12
      %v4428 = vpop.permute.xlu0 %4427
      %4429 = vrot.lane.b32.xlu0 %v4186, 12
      %v4430 = vpop.permute.xlu0 %4429
      %4431 = vrot.lane.b32.xlu0 %v4187, 12
      %v4432 = vpop.permute.xlu0 %4431
      %v4450 = vrot.slane %v4186, 1
      %v4451 = vrot.slane %v4187, 1
      %v4452 = vsel %vm4221, %v4450, %v4451
      %v4453 = vrot.slane %v4188, 1
      %v4454 = vsel %vm4221, %v4451, %v4453
      %4455 = vrot.lane.b32.xlu0 %v4229, 16
      %v4456 = vpop.permute.xlu0 %4455
      %4457 = vrot.lane.b32.xlu0 %v4231, 16
      %v4458 = vpop.permute.xlu0 %4457
      %4459 = vrot.lane.b32.xlu0 %v4234, 16
      %v4460 = vpop.permute.xlu0 %4459
      %4461 = vrot.lane.b32.xlu0 %v4236, 16
      %v4462 = vpop.permute.xlu0 %4461
      %4463 = vrot.lane.b32.xlu0 %v4239, 16
      %v4464 = vpop.permute.xlu0 %4463
      %4465 = vrot.lane.b32.xlu0 %v4241, 16
      %v4466 = vpop.permute.xlu0 %4465
      %4467 = vrot.lane.b32.xlu0 %v4244, 16
      %v4468 = vpop.permute.xlu0 %4467
      %4469 = vrot.lane.b32.xlu0 %v4246, 16
      %v4470 = vpop.permute.xlu0 %4469
      %4471 = vrot.lane.b32.xlu0 %v4249, 16
      %v4472 = vpop.permute.xlu0 %4471
      %4473 = vrot.lane.b32.xlu0 %v4251, 16
      %v4474 = vpop.permute.xlu0 %4473
      %4475 = vrot.lane.b32.xlu0 %v4254, 16
      %v4476 = vpop.permute.xlu0 %4475
      %4477 = vrot.lane.b32.xlu0 %v4256, 16
      %v4478 = vpop.permute.xlu0 %4477
      %4479 = vrot.lane.b32.xlu0 %v4259, 16
      %v4480 = vpop.permute.xlu0 %4479
      %4481 = vrot.lane.b32.xlu0 %v4261, 16
      %v4482 = vpop.permute.xlu0 %4481
      %4483 = vrot.lane.b32.xlu0 %v4452, 16
      %v4484 = vpop.permute.xlu0 %4483
      %4485 = vrot.lane.b32.xlu0 %v4454, 16
      %v4486 = vpop.permute.xlu0 %4485
      %v4503 = vrot.slane %v4186, 2
      %v4504 = vrot.slane %v4187, 2
      %v4505 = vsel %vm4310, %v4503, %v4504
      %v4506 = vrot.slane %v4188, 2
      %v4507 = vsel %vm4310, %v4504, %v4506
      %4508 = vrot.lane.b32.xlu0 %v4318, 20
      %v4509 = vpop.permute.xlu0 %4508
      %4510 = vrot.lane.b32.xlu0 %v4320, 20
      %v4511 = vpop.permute.xlu0 %4510
      %4512 = vrot.lane.b32.xlu0 %v4323, 20
      %v4513 = vpop.permute.xlu0 %4512
      %4514 = vrot.lane.b32.xlu0 %v4325, 20
      %v4515 = vpop.permute.xlu0 %4514
      %4516 = vrot.lane.b32.xlu0 %v4328, 20
      %v4517 = vpop.permute.xlu0 %4516
      %4518 = vrot.lane.b32.xlu0 %v4330, 20
      %v4519 = vpop.permute.xlu0 %4518
      %4520 = vrot.lane.b32.xlu0 %v4333, 20
      %v4521 = vpop.permute.xlu0 %4520
      %4522 = vrot.lane.b32.xlu0 %v4335, 20
      %v4523 = vpop.permute.xlu0 %4522
      %4524 = vrot.lane.b32.xlu0 %v4338, 20
      %v4525 = vpop.permute.xlu0 %4524
      %4526 = vrot.lane.b32.xlu0 %v4340, 20
      %v4527 = vpop.permute.xlu0 %4526
      %4528 = vrot.lane.b32.xlu0 %v4343, 20
      %v4529 = vpop.permute.xlu0 %4528
      %4530 = vrot.lane.b32.xlu0 %v4345, 20
      %v4531 = vpop.permute.xlu0 %4530
      %4532 = vrot.lane.b32.xlu0 %v4348, 20
      %v4533 = vpop.permute.xlu0 %4532
      %4534 = vrot.lane.b32.xlu0 %v4350, 20
      %v4535 = vpop.permute.xlu0 %4534
      %4536 = vrot.lane.b32.xlu0 %v4505, 20
      %v4537 = vpop.permute.xlu0 %4536
      %4538 = vrot.lane.b32.xlu0 %v4507, 20
      %v4539 = vpop.permute.xlu0 %4538
      %4558 = vrot.lane.b32.xlu0 %v4168, 24
      %v4559 = vpop.permute.xlu0 %4558
      %4560 = vrot.lane.b32.xlu0 %v4169, 24
      %v4561 = vpop.permute.xlu0 %4560
      %4562 = vrot.lane.b32.xlu0 %v4171, 24
      %v4563 = vpop.permute.xlu0 %4562
      %4564 = vrot.lane.b32.xlu0 %v4172, 24
      %v4565 = vpop.permute.xlu0 %4564
      %4566 = vrot.lane.b32.xlu0 %v4174, 24
      %v4567 = vpop.permute.xlu0 %4566
      %4568 = vrot.lane.b32.xlu0 %v4175, 24
      %v4569 = vpop.permute.xlu0 %4568
      %4570 = vrot.lane.b32.xlu0 %v4177, 24
      %v4571 = vpop.permute.xlu0 %4570
      %4572 = vrot.lane.b32.xlu0 %v4178, 24
      %v4573 = vpop.permute.xlu0 %4572
      %4574 = vrot.lane.b32.xlu0 %v4180, 24
      %v4575 = vpop.permute.xlu0 %4574
      %4576 = vrot.lane.b32.xlu0 %v4181, 24
      %v4577 = vpop.permute.xlu0 %4576
      %4578 = vrot.lane.b32.xlu0 %v4183, 24
      %v4579 = vpop.permute.xlu0 %4578
      %4580 = vrot.lane.b32.xlu0 %v4184, 24
      %v4581 = vpop.permute.xlu0 %4580
      %4582 = vrot.lane.b32.xlu0 %v4186, 24
      %v4583 = vpop.permute.xlu0 %4582
      %4584 = vrot.lane.b32.xlu0 %v4187, 24
      %v4585 = vpop.permute.xlu0 %4584
      %4586 = vrot.lane.b32.xlu0 %v4189, 24
      %v4587 = vpop.permute.xlu0 %4586
      %4588 = vrot.lane.b32.xlu0 %v4190, 24
      %v4589 = vpop.permute.xlu0 %4588
      %v4607 = vrot.slane %v4189, 1
      %v4608 = vrot.slane %v4190, 1
      %v4609 = vsel %vm4221, %v4607, %v4608
      %v4610 = vrot.slane %v4191, 1
      %v4611 = vsel %vm4221, %v4608, %v4610
      %4612 = vrot.lane.b32.xlu0 %v4234, 28
      %v4613 = vpop.permute.xlu0 %4612
      %4614 = vrot.lane.b32.xlu0 %v4236, 28
      %v4615 = vpop.permute.xlu0 %4614
      %4616 = vrot.lane.b32.xlu0 %v4239, 28
      %v4617 = vpop.permute.xlu0 %4616
      %4618 = vrot.lane.b32.xlu0 %v4241, 28
      %v4619 = vpop.permute.xlu0 %4618
      %4620 = vrot.lane.b32.xlu0 %v4244, 28
      %v4621 = vpop.permute.xlu0 %4620
      %4622 = vrot.lane.b32.xlu0 %v4246, 28
      %v4623 = vpop.permute.xlu0 %4622
      %4624 = vrot.lane.b32.xlu0 %v4249, 28
      %v4625 = vpop.permute.xlu0 %4624
      %4626 = vrot.lane.b32.xlu0 %v4251, 28
      %v4627 = vpop.permute.xlu0 %4626
      %4628 = vrot.lane.b32.xlu0 %v4254, 28
      %v4629 = vpop.permute.xlu0 %4628
      %4630 = vrot.lane.b32.xlu0 %v4256, 28
      %v4631 = vpop.permute.xlu0 %4630
      %4632 = vrot.lane.b32.xlu0 %v4259, 28
      %v4633 = vpop.permute.xlu0 %4632
      %4634 = vrot.lane.b32.xlu0 %v4261, 28
      %v4635 = vpop.permute.xlu0 %4634
      %4636 = vrot.lane.b32.xlu0 %v4452, 28
      %v4637 = vpop.permute.xlu0 %4636
      %4638 = vrot.lane.b32.xlu0 %v4454, 28
      %v4639 = vpop.permute.xlu0 %4638
      %4640 = vrot.lane.b32.xlu0 %v4609, 28
      %v4641 = vpop.permute.xlu0 %4640
      %4642 = vrot.lane.b32.xlu0 %v4611, 28
      %v4643 = vpop.permute.xlu0 %4642
      %v4660 = vrot.slane %v4189, 2
      %v4661 = vrot.slane %v4190, 2
      %v4662 = vsel %vm4310, %v4660, %v4661
      %v4663 = vrot.slane %v4191, 2
      %v4664 = vsel %vm4310, %v4661, %v4663
      %4665 = vrot.lane.b32.xlu0 %v4323, 32
      %v4666 = vpop.permute.xlu0 %4665
      %4667 = vrot.lane.b32.xlu0 %v4325, 32
      %v4668 = vpop.permute.xlu0 %4667
      %4669 = vrot.lane.b32.xlu0 %v4328, 32
      %v4670 = vpop.permute.xlu0 %4669
      %4671 = vrot.lane.b32.xlu0 %v4330, 32
      %v4672 = vpop.permute.xlu0 %4671
      %4673 = vrot.lane.b32.xlu0 %v4333, 32
      %v4674 = vpop.permute.xlu0 %4673
      %4675 = vrot.lane.b32.xlu0 %v4335, 32
      %v4676 = vpop.permute.xlu0 %4675
      %4677 = vrot.lane.b32.xlu0 %v4338, 32
      %v4678 = vpop.permute.xlu0 %4677
      %4679 = vrot.lane.b32.xlu0 %v4340, 32
      %v4680 = vpop.permute.xlu0 %4679
      %4681 = vrot.lane.b32.xlu0 %v4343, 32
      %v4682 = vpop.permute.xlu0 %4681
      %4683 = vrot.lane.b32.xlu0 %v4345, 32
      %v4684 = vpop.permute.xlu0 %4683
      %4685 = vrot.lane.b32.xlu0 %v4348, 32
      %v4686 = vpop.permute.xlu0 %4685
      %4687 = vrot.lane.b32.xlu0 %v4350, 32
      %v4688 = vpop.permute.xlu0 %4687
      %4689 = vrot.lane.b32.xlu0 %v4505, 32
      %v4690 = vpop.permute.xlu0 %4689
      %4691 = vrot.lane.b32.xlu0 %v4507, 32
      %v4692 = vpop.permute.xlu0 %4691
      %4693 = vrot.lane.b32.xlu0 %v4662, 32
      %v4694 = vpop.permute.xlu0 %4693
      %4695 = vrot.lane.b32.xlu0 %v4664, 32
      %v4696 = vpop.permute.xlu0 %4695
      %v4713 = vsel %vm1494, %v4162, %v4263
      %v4714 = vsel %vm1494, %v4163, %v4265
      %v4715 = vsel %vm1494, %v4165, %v4267
      %v4716 = vsel %vm1494, %v4166, %v4269
      %v4717 = vsel %vm1494, %v4168, %v4271
      %v4718 = vsel %vm1494, %v4169, %v4273
      %v4719 = vsel %vm1494, %v4171, %v4275
      %v4720 = vsel %vm1494, %v4172, %v4277
      %v4721 = vsel %vm1494, %v4174, %v4279
      %v4722 = vsel %vm1494, %v4175, %v4281
      %v4723 = vsel %vm1494, %v4177, %v4283
      %v4724 = vsel %vm1494, %v4178, %v4285
      %v4725 = vsel %vm1494, %v4180, %v4287
      %v4726 = vsel %vm1494, %v4181, %v4289
      %v4727 = vsel %vm1494, %v4183, %v4291
      %v4728 = vsel %vm1494, %v4184, %v4293
      %v4729 = vsel %vm1525, %v4713, %v4352
      %v4730 = vsel %vm1525, %v4714, %v4354
      %v4731 = vsel %vm1525, %v4715, %v4356
      %v4732 = vsel %vm1525, %v4716, %v4358
      %v4733 = vsel %vm1525, %v4717, %v4360
      %v4734 = vsel %vm1525, %v4718, %v4362
      %v4735 = vsel %vm1525, %v4719, %v4364
      %v4736 = vsel %vm1525, %v4720, %v4366
      %v4737 = vsel %vm1525, %v4721, %v4368
      %v4738 = vsel %vm1525, %v4722, %v4370
      %v4739 = vsel %vm1525, %v4723, %v4372
      %v4740 = vsel %vm1525, %v4724, %v4374
      %v4741 = vsel %vm1525, %v4725, %v4376
      %v4742 = vsel %vm1525, %v4726, %v4378
      %v4743 = vsel %vm1525, %v4727, %v4380
      %v4744 = vsel %vm1525, %v4728, %v4382
      %v4745 = vsel %vm1556, %v4729, %v4402
      %v4746 = vsel %vm1556, %v4730, %v4404
      %v4747 = vsel %vm1556, %v4731, %v4406
      %v4748 = vsel %vm1556, %v4732, %v4408
      %v4749 = vsel %vm1556, %v4733, %v4410
      %v4750 = vsel %vm1556, %v4734, %v4412
      %v4751 = vsel %vm1556, %v4735, %v4414
      %v4752 = vsel %vm1556, %v4736, %v4416
      %v4753 = vsel %vm1556, %v4737, %v4418
      %v4754 = vsel %vm1556, %v4738, %v4420
      %v4755 = vsel %vm1556, %v4739, %v4422
      %v4756 = vsel %vm1556, %v4740, %v4424
      %v4757 = vsel %vm1556, %v4741, %v4426
      %v4758 = vsel %vm1556, %v4742, %v4428
      %v4759 = vsel %vm1556, %v4743, %v4430
      %v4760 = vsel %vm1556, %v4744, %v4432
      %v4761 = vsel %vm1587, %v4745, %v4456
      %v4762 = vsel %vm1587, %v4746, %v4458
      %v4763 = vsel %vm1587, %v4747, %v4460
      %v4764 = vsel %vm1587, %v4748, %v4462
      %v4765 = vsel %vm1587, %v4749, %v4464
      %v4766 = vsel %vm1587, %v4750, %v4466
      %v4767 = vsel %vm1587, %v4751, %v4468
      %v4768 = vsel %vm1587, %v4752, %v4470
      %v4769 = vsel %vm1587, %v4753, %v4472
      %v4770 = vsel %vm1587, %v4754, %v4474
      %v4771 = vsel %vm1587, %v4755, %v4476
      %v4772 = vsel %vm1587, %v4756, %v4478
      %v4773 = vsel %vm1587, %v4757, %v4480
      %v4774 = vsel %vm1587, %v4758, %v4482
      %v4775 = vsel %vm1587, %v4759, %v4484
      %v4776 = vsel %vm1587, %v4760, %v4486
      %v4777 = vsel %vm1618, %v4761, %v4509
      %v4778 = vsel %vm1618, %v4762, %v4511
      %v4779 = vsel %vm1618, %v4763, %v4513
      %v4780 = vsel %vm1618, %v4764, %v4515
      %v4781 = vsel %vm1618, %v4765, %v4517
      %v4782 = vsel %vm1618, %v4766, %v4519
      %v4783 = vsel %vm1618, %v4767, %v4521
      %v4784 = vsel %vm1618, %v4768, %v4523
      %v4785 = vsel %vm1618, %v4769, %v4525
      %v4786 = vsel %vm1618, %v4770, %v4527
      %v4787 = vsel %vm1618, %v4771, %v4529
      %v4788 = vsel %vm1618, %v4772, %v4531
      %v4789 = vsel %vm1618, %v4773, %v4533
      %v4790 = vsel %vm1618, %v4774, %v4535
      %v4791 = vsel %vm1618, %v4775, %v4537
      %v4792 = vsel %vm1618, %v4776, %v4539
      %v4793 = vsel %vm1649, %v4777, %v4559
      %v4794 = vsel %vm1649, %v4778, %v4561
      %v4795 = vsel %vm1649, %v4779, %v4563
      %v4796 = vsel %vm1649, %v4780, %v4565
      %v4797 = vsel %vm1649, %v4781, %v4567
      %v4798 = vsel %vm1649, %v4782, %v4569
      %v4799 = vsel %vm1649, %v4783, %v4571
      %v4800 = vsel %vm1649, %v4784, %v4573
      %v4801 = vsel %vm1649, %v4785, %v4575
      %v4802 = vsel %vm1649, %v4786, %v4577
      %v4803 = vsel %vm1649, %v4787, %v4579
      %v4804 = vsel %vm1649, %v4788, %v4581
      %v4805 = vsel %vm1649, %v4789, %v4583
      %v4806 = vsel %vm1649, %v4790, %v4585
      %v4807 = vsel %vm1649, %v4791, %v4587
      %v4808 = vsel %vm1649, %v4792, %v4589
      %v4809 = vsel %vm1680, %v4793, %v4613
      %v4810 = vsel %vm1680, %v4794, %v4615
      %v4811 = vsel %vm1680, %v4795, %v4617
      %v4812 = vsel %vm1680, %v4796, %v4619
      %v4813 = vsel %vm1680, %v4797, %v4621
      %v4814 = vsel %vm1680, %v4798, %v4623
      %v4815 = vsel %vm1680, %v4799, %v4625
      %v4816 = vsel %vm1680, %v4800, %v4627
      %v4817 = vsel %vm1680, %v4801, %v4629
      %v4818 = vsel %vm1680, %v4802, %v4631
      %v4819 = vsel %vm1680, %v4803, %v4633
      %v4820 = vsel %vm1680, %v4804, %v4635
      %v4821 = vsel %vm1680, %v4805, %v4637
      %v4822 = vsel %vm1680, %v4806, %v4639
      %v4823 = vsel %vm1680, %v4807, %v4641
      %v4824 = vsel %vm1680, %v4808, %v4643
      %v4825 = vsel %vm1711, %v4809, %v4666
      %v4826 = vsel %vm1711, %v4810, %v4668
      %v4827 = vsel %vm1711, %v4811, %v4670
      %v4828 = vsel %vm1711, %v4812, %v4672
      %v4829 = vsel %vm1711, %v4813, %v4674
      %v4830 = vsel %vm1711, %v4814, %v4676
      %v4831 = vsel %vm1711, %v4815, %v4678
      %v4832 = vsel %vm1711, %v4816, %v4680
      %v4833 = vsel %vm1711, %v4817, %v4682
      %v4834 = vsel %vm1711, %v4818, %v4684
      %v4835 = vsel %vm1711, %v4819, %v4686
      %v4836 = vsel %vm1711, %v4820, %v4688
      %v4837 = vsel %vm1711, %v4821, %v4690
      %v4838 = vsel %vm1711, %v4822, %v4692
      %v4839 = vsel %vm1711, %v4823, %v4694
      %v4840 = vsel %vm1711, %v4824, %v4696
      %v4841 = vld [vmem:[%s4] sm:$0x1]
      %v4843 = vlaneseq
      %v4844 = vshrl.u32 %v4843, 7
      %v4845 = vsub.s32 0, %v4844
      %v4846 = vrot.slane %v4841, %v4845
      %v4849 = vsel %vm2642, %v4825, 0
      %v4852 = vsel %vm2642, %v4826, 0
      %v4855 = vsel %vm2642, %v4827, 0
      %v4858 = vsel %vm2642, %v4828, 0
      %v4861 = vsel %vm2642, %v4829, 0
      %v4864 = vsel %vm2642, %v4830, 0
      %v4867 = vsel %vm2642, %v4831, 0
      %v4870 = vsel %vm2642, %v4832, 0
      %v4873 = vsel %vm2642, %v4833, 0
      %v4876 = vsel %vm2642, %v4834, 0
      %v4879 = vsel %vm2642, %v4835, 0
      %v4882 = vsel %vm2642, %v4836, 0
      %v4885 = vsel %vm2642, %v4837, 0
      %v4888 = vsel %vm2642, %v4838, 0
      %v4891 = vsel %vm2642, %v4839, 0
      %v4894 = vsel %vm2642, %v4840, 0
      %v4897 = vsel %vm2689, %v4196, 0
      %4899 = vmatprep.subr.mxu0 0.0
      %4900 = vmatpush1.msra.mxu0 0.0
      %4901 = vmatprep.subr.mxu0 0.0
      %4902 = vmatpush1.msra.mxu0 0.0
      %4903 = vmatprep.subr.mxu0 0.0
      %4904 = vmatpush1.msra.mxu0 0.0
      %4905 = vmatprep.subr.mxu0 0.0
      %4906 = vmatpush1.msra.mxu0 0.0
      %4907 = vmatprep.subr.mxu0 0.0
      %4908 = vmatpush1.msra.mxu0 0.0
      %4909 = vmatprep.subr.mxu0 0.0
      %4910 = vmatpush1.msra.mxu0 0.0
      %4911 = vmatprep.subr.mxu0 0.0
      %4912 = vmatpush1.msra.mxu0 0.0
      %4913 = vmatprep.subr.mxu0 0.0
      %4914 = vmatpush1.msra.mxu0 0.0
      %4915 = vmatprep.subr.mxu0 0.0
      %4916 = vmatpush1.msra.mxu0 0.0
      %4917 = vmatprep.subr.mxu0 0.0
      %4918 = vmatpush1.msra.mxu0 0.0
      %4919 = vmatprep.subr.mxu0 0.0
      %4920 = vmatpush1.msra.mxu0 0.0
      %4921 = vmatprep.subr.mxu0 0.0
      %4922 = vmatpush1.msra.mxu0 %v4897
      %4923 = vmatprep.subr.mxu0 0.0
      %4924 = vmatpush1.msra.mxu0 %v4195
      %4925 = vmatprep.subr.mxu0 0.0
      %4926 = vmatpush1.msra.mxu0 %v4194
      %4927 = vmatprep.subr.mxu0 0.0
      %4928 = vmatpush1.msra.mxu0 %v4193
      %4929 = vmatprep.subr.mxu0 0.0
      %4930 = vmatpush1.msra.mxu0 %v4192
      %4931 = vmatprep.subr.mxu0 0.0
      %4932 = vmatpush2.msra.mxu0 0.0
      %4933 = vmatprep.subr.mxu0 0.0
      %4934 = vmatpush2.msra.mxu0 0.0
      %4935 = vmatprep.subr.mxu0 0.0
      %4936 = vmatpush2.msra.mxu0 0.0
      %4937 = vmatprep.subr.mxu0 0.0
      %4938 = vmatpush2.msra.mxu0 0.0
      %4939 = vmatprep.subr.mxu0 0.0
      %4940 = vmatpush2.msra.mxu0 0.0
      %4941 = vmatprep.subr.mxu0 0.0
      %4942 = vmatpush2.msra.mxu0 0.0
      %4943 = vmatprep.subr.mxu0 0.0
      %4944 = vmatpush2.msra.mxu0 0.0
      %4945 = vmatprep.subr.mxu0 0.0
      %4946 = vmatpush2.msra.mxu0 0.0
      %4947 = vmatprep.subr.mxu0 0.0
      %4948 = vmatpush2.msra.mxu0 0.0
      %4949 = vmatprep.subr.mxu0 0.0
      %4950 = vmatpush2.msra.mxu0 0.0
      %4951 = vmatprep.subr.mxu0 0.0
      %4952 = vmatpush2.msra.mxu0 0.0
      %4953 = vmatprep.subr.mxu0 0.0
      %4954 = vmatpush2.msra.mxu0 0.0
      %4955 = vmatprep.subr.mxu0 0.0
      %4956 = vmatpush2.msra.mxu0 0.0
      %4957 = vmatprep.subr.mxu0 0.0
      %4958 = vmatpush2.msra.mxu0 0.0
      %4959 = vmatprep.subr.mxu0 0.0
      %4960 = vmatpush2.msra.mxu0 0.0
      %4961 = vmatprep.subr.mxu0 0.0
      %4962 = vmatpush2.msra.mxu0 0.0
      %4963 = vmatprep.mubr.f32.mxu0 0.0
      %4964 = vmatmul.mubr.f32.gmra.mxu0 %v4849
      %v4965 = vpop.f32.mrf.mxu0
      %v4966 = vadd.f32 %v4846, %v4965
      %v4967 = vpop.f32.mrf.mxu0
      %4968 = vmatprep.mubr.f32.mxu0 0.0
      %4969 = vmatmul.mubr.f32.gmra.mxu0 %v4852
      %v4970 = vpop.f32.mrf.mxu0
      %v4971 = vadd.f32 %v4846, %v4970
      %v4972 = vpop.f32.mrf.mxu0
      %4973 = vmatprep.mubr.f32.mxu0 0.0
      %4974 = vmatmul.mubr.f32.gmra.mxu0 %v4855
      %v4975 = vpop.f32.mrf.mxu0
      %v4976 = vadd.f32 %v4846, %v4975
      %v4977 = vpop.f32.mrf.mxu0
      %4978 = vmatprep.mubr.f32.mxu0 0.0
      %4979 = vmatmul.mubr.f32.gmra.mxu0 %v4858
      %v4980 = vpop.f32.mrf.mxu0
      %v4981 = vadd.f32 %v4846, %v4980
      %v4982 = vpop.f32.mrf.mxu0
      %4983 = vmatprep.mubr.f32.mxu0 0.0
      %4984 = vmatmul.mubr.f32.gmra.mxu0 %v4861
      %v4985 = vpop.f32.mrf.mxu0
      %v4986 = vadd.f32 %v4846, %v4985
      %v4987 = vpop.f32.mrf.mxu0
      %4988 = vmatprep.mubr.f32.mxu0 0.0
      %4989 = vmatmul.mubr.f32.gmra.mxu0 %v4864
      %v4990 = vpop.f32.mrf.mxu0
      %v4991 = vadd.f32 %v4846, %v4990
      %v4992 = vpop.f32.mrf.mxu0
      %4993 = vmatprep.mubr.f32.mxu0 0.0
      %4994 = vmatmul.mubr.f32.gmra.mxu0 %v4867
      %v4995 = vpop.f32.mrf.mxu0
      %v4996 = vadd.f32 %v4846, %v4995
      %v4997 = vpop.f32.mrf.mxu0
      %4998 = vmatprep.mubr.f32.mxu0 0.0
      %4999 = vmatmul.mubr.f32.gmra.mxu0 %v4870
      %v5000 = vpop.f32.mrf.mxu0
      %v5001 = vadd.f32 %v4846, %v5000
      %v5002 = vpop.f32.mrf.mxu0
      %5003 = vmatprep.mubr.f32.mxu0 0.0
      %5004 = vmatmul.mubr.f32.gmra.mxu0 %v4873
      %v5005 = vpop.f32.mrf.mxu0
      %v5006 = vadd.f32 %v4846, %v5005
      %v5007 = vpop.f32.mrf.mxu0
      %5008 = vmatprep.mubr.f32.mxu0 0.0
      %5009 = vmatmul.mubr.f32.gmra.mxu0 %v4876
      %v5010 = vpop.f32.mrf.mxu0
      %v5011 = vadd.f32 %v4846, %v5010
      %v5012 = vpop.f32.mrf.mxu0
      %5013 = vmatprep.mubr.f32.mxu0 0.0
      %5014 = vmatmul.mubr.f32.gmra.mxu0 %v4879
      %v5015 = vpop.f32.mrf.mxu0
      %v5016 = vadd.f32 %v4846, %v5015
      %v5017 = vpop.f32.mrf.mxu0
      %5018 = vmatprep.mubr.f32.mxu0 0.0
      %5019 = vmatmul.mubr.f32.gmra.mxu0 %v4882
      %v5020 = vpop.f32.mrf.mxu0
      %v5021 = vadd.f32 %v4846, %v5020
      %v5022 = vpop.f32.mrf.mxu0
      %5023 = vmatprep.mubr.f32.mxu0 0.0
      %5024 = vmatmul.mubr.f32.gmra.mxu0 %v4885
      %v5025 = vpop.f32.mrf.mxu0
      %v5026 = vadd.f32 %v4846, %v5025
      %v5027 = vpop.f32.mrf.mxu0
      %5028 = vmatprep.mubr.f32.mxu0 0.0
      %5029 = vmatmul.mubr.f32.gmra.mxu0 %v4888
      %v5030 = vpop.f32.mrf.mxu0
      %v5031 = vadd.f32 %v4846, %v5030
      %v5032 = vpop.f32.mrf.mxu0
      %5033 = vmatprep.mubr.f32.mxu0 0.0
      %5034 = vmatmul.mubr.f32.gmra.mxu0 %v4891
      %v5035 = vpop.f32.mrf.mxu0
      %v5036 = vadd.f32 %v4846, %v5035
      %v5037 = vpop.f32.mrf.mxu0
      %5038 = vmatprep.mubr.f32.mxu0 0.0
      %5039 = vmatmul.mubr.f32.gmra.mxu0 %v4894
      %v5040 = vpop.f32.mrf.mxu0
      %v5041 = vadd.f32 %v4846, %v5040
      %v5042 = vpop.f32.mrf.mxu0
      %5043 = vdwg.mxu0
      %v5044 = vld [vmem:[%s443 + $0x2] sm:$0xff]
      %v5045 = vld [vmem:[%s443 + $0xa] sm:$0xff]
      %v5046 = vld [vmem:[%s443 + $0x1a] sm:$0xff]
      %v5047 = vld [vmem:[%s443 + $0x22] sm:$0xff]
      %v5048 = vld [vmem:[%s443 + $0x32] sm:$0xff]
      %v5049 = vld [vmem:[%s443 + $0x3a] sm:$0xff]
      %v5050 = vld [vmem:[%s443 + $0x4a] sm:$0xff]
      %v5051 = vld [vmem:[%s443 + $0x52] sm:$0xff]
      %v5052 = vld [vmem:[%s443 + $0x62] sm:$0xff]
      %v5053 = vld [vmem:[%s443 + $0x6a] sm:$0xff]
      %v5054 = vld [vmem:[%s443 + $0x7a] sm:$0xff]
      %v5055 = vld [vmem:[%s443 + $0x82] sm:$0xff]
      %v5056 = vld [vmem:[%s443 + $0x92] sm:$0xff]
      %v5057 = vld [vmem:[%s443 + $0x9a] sm:$0xff]
      %v5058 = vld [vmem:[%s443 + $0xaa] sm:$0xff]
      %v5059 = vld [vmem:[%s443 + $0xb2] sm:$0xff]
      %v5060 = vadd.f32 %v4966, %v5044
      %v5061 = vadd.f32 %v4971, %v5045
      %v5062 = vadd.f32 %v4976, %v5046
      %v5063 = vadd.f32 %v4981, %v5047
      %v5064 = vadd.f32 %v4986, %v5048
      %v5065 = vadd.f32 %v4991, %v5049
      %v5066 = vadd.f32 %v4996, %v5050
      %v5067 = vadd.f32 %v5001, %v5051
      %v5068 = vadd.f32 %v5006, %v5052
      %v5069 = vadd.f32 %v5011, %v5053
      %v5070 = vadd.f32 %v5016, %v5054
      %v5071 = vadd.f32 %v5021, %v5055
      %v5072 = vadd.f32 %v5026, %v5056
      %v5073 = vadd.f32 %v5031, %v5057
      %v5074 = vadd.f32 %v5036, %v5058
      %v5075 = vadd.f32 %v5041, %v5059
      %v5076 = vmax.f32 %v5060, 0.0
      %v5077 = vmax.f32 %v5061, 0.0
      %v5078 = vmax.f32 %v5062, 0.0
      %v5079 = vmax.f32 %v5063, 0.0
      %v5080 = vmax.f32 %v5064, 0.0
      %v5081 = vmax.f32 %v5065, 0.0
      %v5082 = vmax.f32 %v5066, 0.0
      %v5083 = vmax.f32 %v5067, 0.0
      %v5084 = vmax.f32 %v5068, 0.0
      %v5085 = vmax.f32 %v5069, 0.0
      %v5086 = vmax.f32 %v5070, 0.0
      %v5087 = vmax.f32 %v5071, 0.0
      %v5088 = vmax.f32 %v5072, 0.0
      %v5089 = vmax.f32 %v5073, 0.0
      %v5090 = vmax.f32 %v5074, 0.0
      %v5091 = vmax.f32 %v5075, 0.0
      %5092 = vst.msk [vmem:[%s248] sm:$0xff] %vm1494, %v5076
      %5093 = vst.msk [vmem:[%s248 + $0x8] sm:$0xff] %vm1494, %v5077
      %5094 = vst.msk [vmem:[%s248 + $0x10] sm:$0xff] %vm1494, %v5078
      %5095 = vst.msk [vmem:[%s248 + $0x18] sm:$0xff] %vm1494, %v5079
      %5096 = vst.msk [vmem:[%s248 + $0x20] sm:$0xff] %vm1494, %v5080
      %5097 = vst.msk [vmem:[%s248 + $0x28] sm:$0xff] %vm1494, %v5081
      %5098 = vst.msk [vmem:[%s248 + $0x30] sm:$0xff] %vm1494, %v5082
      %5099 = vst.msk [vmem:[%s248 + $0x38] sm:$0xff] %vm1494, %v5083
      %5100 = vst.msk [vmem:[%s248 + $0x40] sm:$0xff] %vm1494, %v5084
      %5101 = vst.msk [vmem:[%s248 + $0x48] sm:$0xff] %vm1494, %v5085
      %5102 = vst.msk [vmem:[%s248 + $0x50] sm:$0xff] %vm1494, %v5086
      %5103 = vst.msk [vmem:[%s248 + $0x58] sm:$0xff] %vm1494, %v5087
      %5104 = vst.msk [vmem:[%s248 + $0x60] sm:$0xff] %vm1494, %v5088
      %5105 = vst.msk [vmem:[%s248 + $0x68] sm:$0xff] %vm1494, %v5089
      %5106 = vst.msk [vmem:[%s248 + $0x70] sm:$0xff] %vm1494, %v5090
      %5107 = vst.msk [vmem:[%s248 + $0x78] sm:$0xff] %vm1494, %v5091
      %s5108 = smul.u32 8, %s21
      %p5109 = scmp.lt.s32.totalorder %s20, 1
      %s5110 = scalar_select %p5109, %s20, 1
      %p5111 = scmp.lt.s32.totalorder %s5108, 15
      %s5112 = scalar_select %p5111, %s5108, 15
      %s5113 = smul.addr %s5112, 2
      %s5114 = smul.addr %s5110, 32
      %s5115 = sadd.s32 %s5113, %s5114
      %s5116 = smul.addr %s5115, 8
      %s5117 = scalar_lea.vmem %s5, %s5116
      // Predicated region
      $region41: #{tpu_custom_call.1} parent=39 // pred_check
        %p5118 = pneg %p158
      $region42: #{tpu_custom_call.1} parent=39 // pred_check_branch
        %5120 = sbr.rel (%p5118) target = $region44
      $region43: #{tpu_custom_call.1} parent=39 // pred_region
        %s5121 = smul.u32 8, %s21
      $region44: #{tpu_custom_call.1} parent=39 // pred_fallthru
        _
    $region40: #{tpu_custom_call.1} parent=5 // pred_fallthru
      _
    %p5122 = scmp.le.s32.totalorder 2, %s11
    // Predicated region
    $region45: #{tpu_custom_call.1} parent=5 // pred_check
      %p5123 = pneg %p5122
    $region46: #{tpu_custom_call.1} parent=5 // pred_check_branch
      %5125 = sbr.rel (%p5123) target = $region48
    $region47: #{tpu_custom_call.1} parent=5 // pred_region
      %s5126 = ssub.s32 %s11, 2
      // Predicated region
      $region49: #{tpu_custom_call.1} parent=47 // pred_check
        %p5127 = pneg %p164
      $region50: #{tpu_custom_call.1} parent=47 // pred_check_branch
        %5129 = sbr.rel (%p5127) target = $region52
      $region51: #{tpu_custom_call.1} parent=47 // pred_region
        %s5130 = smul.u32 8, %s23
        %p5131 = scmp.lt.s32.totalorder %s22, 1
        %s5132 = scalar_select %p5131, %s22, 1
        %p5133 = scmp.lt.s32.totalorder %s5130, 15
        %s5134 = scalar_select %p5133, %s5130, 15
        %s5135 = smul.addr %s5134, 2
        %s5136 = smul.addr %s5132, 32
        %s5137 = sadd.s32 %s5135, %s5136
        %s5138 = smul.addr %s5137, 8
        %s5139 = scalar_lea.vmem %s5, %s5138
      $region52: #{tpu_custom_call.1} parent=47 // pred_fallthru
        _
    $region48: #{tpu_custom_call.1} parent=5 // pred_fallthru
      _
  $region6: #{tpu_custom_call.1} parent=0 // loop_footer
    %s15 = sadd.s32 1, %s11
  $region7: #{tpu_custom_call.1} parent=0 // loop_footer_branch
    %10 = sbr.rel target = $region3
  $region8: #{tpu_custom_call.1} parent=0 // loop_exit
    _

</llo_original>
